<compile_context>
chip_gen: v7x
topology: tpu7x:2x2x1
jax: 0.10.0
libtpu: 0.0.40
codegen_flags: <defaults>
</compile_context>

<pallas_src>
import jax
import jax.numpy as jnp
from jax.experimental import pallas as pl
from jax.experimental.pallas import tpu as pltpu

LN_EPS = 1e-5


def projection_head_kernel(x_ref, w1_ref, b1_ref, g_ref, beta_ref, w2_ref, b2_ref, o_ref):
    # x arrives f32 straight from HBM; cast to the MXU compute dtype in VMEM.
    x = x_ref[...].astype(w1_ref.dtype)

    # ---- Linear 1: (tm, D_in)bf16 @ (D_in, H)bf16 -> f32 acc, + b1 ----
    h = jnp.dot(x, w1_ref[...], preferred_element_type=jnp.float32)
    h = h + b1_ref[...]

    # ---- LayerNorm over last dim (biased variance, like PyTorch), f32 math ----
    # single-pass stats; clamp to avoid cancellation-induced negative variance.
    mean = jnp.mean(h, axis=-1, keepdims=True)
    mean_sq = jnp.mean(h * h, axis=-1, keepdims=True)
    var = jnp.maximum(mean_sq - mean * mean, 0.0)
    inv = jax.lax.rsqrt(var + LN_EPS)
    hn = (h - mean) * inv * g_ref[...] + beta_ref[...]

    # ---- ReLU, cast back to the compute dtype for the second MXU pass ----
    hr = jnp.maximum(hn, 0.0).astype(w2_ref.dtype)

    # ---- Linear 2: (tm, H)bf16 @ (H, D_out)bf16 -> f32 acc, + b2 ----
    out = jnp.dot(hr, w2_ref[...], preferred_element_type=jnp.float32)
    out = out + b2_ref[...]
    o_ref[...] = out.astype(o_ref.dtype)


def _round_up(a, m):
    return ((a + m - 1) // m) * m


def _buffered_supported():
    """One-time capability check for BlockSpec(pipeline_mode=pl.Buffered(n))."""
    if not hasattr(pl, "Buffered"):
        return False
    try:
        pl.BlockSpec((8, 128), lambda i: (0, 0), pipeline_mode=pl.Buffered(1))
    except (TypeError, ValueError):
        return False
    return True


_HAS_BUFFERED = _buffered_supported()


def _num_tensorcores():
    """TensorCores addressable by one pallas_call (v7x / megacore parts = 2)."""
    try:
        kind = jax.devices()[0].device_kind.lower()
    except Exception:
        return 1
    if any(tag in kind for tag in ("v4", "v5p", "v7", "tpu7")):
        return 2
    return 1


def _vmem_capacity_bytes():
    try:
        return int(pltpu.get_tpu_info().vmem_capacity_bytes)
    except Exception:
        return 64 << 20  # conservative default (v7x per-core VMEM)


def _const_spec(shape):
    """BlockSpec for a grid-invariant operand (same block at every grid step)."""
    index_map = lambda i: (0,) * len(shape)
    if _HAS_BUFFERED:
        # Constant index_map => one VMEM buffer suffices; halves weight VMEM.
        return pl.BlockSpec(shape, index_map, pipeline_mode=pl.Buffered(1))
    return pl.BlockSpec(shape, index_map)


def _vmem_estimate(tm, d_in, h, d_out, x_bytes, w_bytes, out_bytes, n_weight_bufs):
    return (2 * tm * d_in * x_bytes                           # streamed x tile (f32, 2 bufs)
            + 2 * tm * d_out * out_bytes                      # streamed out tile (2 bufs)
            + n_weight_bufs * (d_in * h + h * d_out) * w_bytes  # W1, W2 (resident)
            + n_weight_bufs * (3 * h + d_out) * 4             # b1, gamma, beta, b2 (f32)
            + 4 * tm * h * 4)                                 # f32 intermediates


def _pick_tm(b, d_in, h, d_out, x_bytes, w_bytes, out_bytes, n_weight_bufs,
             num_tc, vmem_budget):
    tm = 256
    # Shrink until the working set fits the per-core VMEM budget.
    while tm > 64 and _vmem_estimate(tm, d_in, h, d_out, x_bytes, w_bytes,
                                     out_bytes, n_weight_bufs) > vmem_budget:
        tm //= 2
    # Multi-TensorCore parts only: keep >= num_tc grid steps so
    # dimension_semantics="parallel" can shard the batch across cores.
    # (Single-TC v5e/v6e keep the full 256-row tile -> better MXU M-dim.)
    if num_tc > 1:
        while tm > 128 and pl.cdiv(b, tm) < num_tc:
            tm //= 2
    # Tiny batches: a single full-extent block (always layout-legal).
    if b <= tm:
        tm = b
    return tm


def prepare_projection_head_params(w1, b1, gamma, beta, w2, b2,
                                   compute_dtype=jnp.bfloat16):
    """One-time parameter prep (call OUTSIDE the hot path):
         * W1 / W2 cast to the MXU compute dtype
         * D_out zero-padded to a lane-dense multiple of 128 (unmasked stores)
         * biases / LayerNorm params reshaped to 2-D f32 rows
    """
    d_in, h = w1.shape
    d_out = w2.shape[1]
    d_out_pad = max(_round_up(d_out, 128), 128)

    w1_c = w1.astype(compute_dtype)
    w2_c = w2.astype(compute_dtype)
    b2_f = b2.astype(jnp.float32)
    if d_out_pad != d_out:
        w2_c = jnp.pad(w2_c, ((0, 0), (0, d_out_pad - d_out)))
        b2_f = jnp.pad(b2_f, (0, d_out_pad - d_out))

    return dict(
        w1=w1_c,
        b1=b1.reshape(1, h).astype(jnp.float32),
        gamma=gamma.reshape(1, h).astype(jnp.float32),
        beta=beta.reshape(1, h).astype(jnp.float32),
        w2=w2_c,
        b2=b2_f.reshape(1, d_out_pad),
        d_out=d_out,
    )


def projection_head(x, params, *, tm=None, out_dtype=None):
    b, d_in = x.shape
    w1, w2 = params["w1"], params["w2"]
    h = w1.shape[1]
    d_out_pad = w2.shape[1]
    d_out = params["d_out"]
    out_dtype = x.dtype if out_dtype is None else out_dtype  # bf16 output optional

    x_bytes = jnp.dtype(x.dtype).itemsize
    w_bytes = jnp.dtype(w1.dtype).itemsize
    out_bytes = jnp.dtype(out_dtype).itemsize
    n_weight_bufs = 1 if _HAS_BUFFERED else 2

    num_tc = _num_tensorcores()
    vmem_budget = int(_vmem_capacity_bytes() * 0.75)  # headroom for compiler scratch

    if tm is None:
        tm = _pick_tm(b, d_in, h, d_out_pad, x_bytes, w_bytes, out_bytes,
                      n_weight_bufs, num_tc, vmem_budget)

    est = _vmem_estimate(tm, d_in, h, d_out_pad, x_bytes, w_bytes, out_bytes,
                         n_weight_bufs)
    vmem_limit = max(min(vmem_budget, max(int(est * 1.5) + (4 << 20), 32 << 20)),
                     16 << 20)

    call = pl.pallas_call(
        projection_head_kernel,
        out_shape=jax.ShapeDtypeStruct((b, d_out_pad), out_dtype),
        grid_spec=pltpu.PrefetchScalarGridSpec(
            num_scalar_prefetch=0,
            # ragged batch: Pallas pads the final partial block / masks its stores
            grid=(pl.cdiv(b, tm),),
            in_specs=[
                pl.BlockSpec((tm, d_in), lambda i: (i, 0)),   # x tile (streamed, f32)
                _const_spec((d_in, h)),                       # W1 (resident)
                _const_spec((1, h)),                          # b1
                _const_spec((1, h)),                          # LN gamma
                _const_spec((1, h)),                          # LN beta
                _const_spec((h, d_out_pad)),                  # W2 (resident)
                _const_spec((1, d_out_pad)),                  # b2
            ],
            out_specs=pl.BlockSpec((tm, d_out_pad), lambda i: (i, 0)),
        ),
        compiler_params=pltpu.CompilerParams(
            dimension_semantics=("parallel",),
            vmem_limit_bytes=vmem_limit,
        ),
    )
    # TODO(synk): if single-buffered bf16 W1+W2 exceed the per-generation budget
    # (~48 MiB on v7x, ~96 MiB on v5e/v6e), add a D_in grid axis with a VMEM f32
    # accumulator + pl.when init/finalize instead of relying on compiler re-tiling.
    out = call(x, params["w1"], params["b1"], params["gamma"], params["beta"],
               params["w2"], params["b2"])
    return out[:, :d_out] if d_out_pad != d_out else out


def reference(x, w1, b1, gamma, beta, w2, b2):
    h = x @ w1 + b1
    mean = jnp.mean(h, axis=-1, keepdims=True)
    var = jnp.mean((h - mean) ** 2, axis=-1, keepdims=True)
    hn = (h - mean) / jnp.sqrt(var + LN_EPS)
    hn = hn * gamma + beta
    hr = jnp.maximum(hn, 0.0)
    return hr @ w2 + b2


if __name__ == "__main__":
    # Small shapes consistent with the module (Linear -> LayerNorm -> ReLU -> Linear),
    # chosen to exercise batch tiling and the ragged-tail path.
    B, D_IN, H, D_OUT = 256, 256, 512, 256

    key = jax.random.PRNGKey(0)
    kx, kw1, kb1, kw2, kb2 = jax.random.split(key, 5)

    x = jax.random.normal(kx, (B, D_IN), dtype=jnp.float32)

    # PyTorch nn.Linear-style uniform init; weights stored as (in, out) = W.T.
    bound1 = 1.0 / (D_IN ** 0.5)
    w1 = jax.random.uniform(kw1, (D_IN, H), minval=-bound1, maxval=bound1, dtype=jnp.float32)
    b1 = jax.random.uniform(kb1, (H,), minval=-bound1, maxval=bound1, dtype=jnp.float32)

    gamma = jnp.ones((H,), dtype=jnp.float32)   # nn.LayerNorm default weight
    beta = jnp.zeros((H,), dtype=jnp.float32)   # nn.LayerNorm default bias

    bound2 = 1.0 / (H ** 0.5)
    w2 = jax.random.uniform(kw2, (H, D_OUT), minval=-bound2, maxval=bound2, dtype=jnp.float32)
    b2 = jax.random.uniform(kb2, (D_OUT,), minval=-bound2, maxval=bound2, dtype=jnp.float32)

    # One-time param prep (bf16 cast + lane padding) OUTSIDE the hot path.
    params = prepare_projection_head_params(w1, b1, gamma, beta, w2, b2)

    out = jax.block_until_ready(projection_head(x, params))
    ref = reference(x, w1, b1, gamma, beta, w2, b2)
    assert out.shape == (B, D_OUT)
    # bf16 matmul operands with f32 accumulation: tolerance loosened vs f32 ref.
    assert jnp.allclose(out, ref, atol=5e-2, rtol=5e-2), "mismatch vs reference"

    # Ragged batch: exercises the masked partial final block (no jnp.pad of x).
    B2 = 200
    out2 = jax.block_until_ready(projection_head(x[:B2], params))
    assert out2.shape == (B2, D_OUT)
    assert jnp.allclose(out2, ref[:B2], atol=5e-2, rtol=5e-2), "ragged-batch mismatch"

    print("KERNEL_OK")
</pallas_src>

<mosaic_0001>
module attributes {stable_mosaic.version = 11 : i64} {
  func.func @projection_head_kernel(%arg0: i32, %arg1: memref<256x256xf32, #tpu.memory_space<vmem>>, %arg2: memref<256x512xbf16, #tpu.memory_space<vmem>>, %arg3: memref<1x512xf32, #tpu.memory_space<vmem>>, %arg4: memref<1x512xf32, #tpu.memory_space<vmem>>, %arg5: memref<1x512xf32, #tpu.memory_space<vmem>>, %arg6: memref<512x256xbf16, #tpu.memory_space<vmem>>, %arg7: memref<1x256xf32, #tpu.memory_space<vmem>>, %arg8: memref<256x256xf32, #tpu.memory_space<vmem>>) attributes {dimension_semantics = [#tpu.dimension_semantics<parallel>], iteration_bounds = array<i64: 1>, scalar_prefetch = 0 : i64, scratch_operands = 0 : i64, tpu.core_type = #tpu.core_type<tc>, window_params = [{transform_indices = @transform_0, window_bounds = array<i64: 256, 256>}, {pipeline_mode = #tpu.pipeline_mode<synchronous>, transform_indices = @transform_1, window_bounds = array<i64: 256, 512>}, {pipeline_mode = #tpu.pipeline_mode<synchronous>, transform_indices = @transform_2, window_bounds = array<i64: 1, 512>}, {pipeline_mode = #tpu.pipeline_mode<synchronous>, transform_indices = @transform_3, window_bounds = array<i64: 1, 512>}, {pipeline_mode = #tpu.pipeline_mode<synchronous>, transform_indices = @transform_4, window_bounds = array<i64: 1, 512>}, {pipeline_mode = #tpu.pipeline_mode<synchronous>, transform_indices = @transform_5, window_bounds = array<i64: 512, 256>}, {pipeline_mode = #tpu.pipeline_mode<synchronous>, transform_indices = @transform_6, window_bounds = array<i64: 1, 256>}, {transform_indices = @transform_7, window_bounds = array<i64: 256, 256>}]} {
    %c0 = arith.constant 0 : index
    %c0_0 = arith.constant 0 : index
    %0 = vector.load %arg1[%c0, %c0_0] : memref<256x256xf32, #tpu.memory_space<vmem>>, vector<256x256xf32>
    %1 = arith.truncf %0 : vector<256x256xf32> to vector<256x256xbf16>
    %c0_1 = arith.constant 0 : index
    %c0_2 = arith.constant 0 : index
    %2 = vector.load %arg2[%c0_1, %c0_2] : memref<256x512xbf16, #tpu.memory_space<vmem>>, vector<256x512xbf16>
    %cst = arith.constant dense<0.000000e+00> : vector<256x512xf32>
    %3 = tpu.matmul %1, %2, %cst {dimension_numbers = #tpu.dot_dimension_numbers<[1], [0], [0], [1], [0, 0, 1, 1], [], []>} : vector<256x256xbf16>, vector<256x512xbf16>, vector<256x512xf32> -> vector<256x512xf32>
    %c0_3 = arith.constant 0 : index
    %c0_4 = arith.constant 0 : index
    %4 = vector.load %arg3[%c0_3, %c0_4] : memref<1x512xf32, #tpu.memory_space<vmem>>, vector<1x512xf32>
    %5 = vector.broadcast %4 : vector<1x512xf32> to vector<256x512xf32>
    %6 = arith.addf %3, %5 : vector<256x512xf32>
    %cst_5 = arith.constant dense<0.000000e+00> : vector<256xf32>
    %7 = vector.multi_reduction <add>, %6, %cst_5 [1] : vector<256x512xf32> to vector<256xf32>
    %8 = vector.shape_cast %7 : vector<256xf32> to vector<256x1xf32>
    %cst_6 = arith.constant 5.120000e+02 : f32
    %9 = vector.broadcast %cst_6 : f32 to vector<256x1xf32>
    %10 = arith.divf %8, %9 : vector<256x1xf32>
    %11 = arith.mulf %6, %6 : vector<256x512xf32>
    %cst_7 = arith.constant dense<0.000000e+00> : vector<256xf32>
    %12 = vector.multi_reduction <add>, %11, %cst_7 [1] : vector<256x512xf32> to vector<256xf32>
    %13 = vector.shape_cast %12 : vector<256xf32> to vector<256x1xf32>
    %cst_8 = arith.constant 5.120000e+02 : f32
    %14 = vector.broadcast %cst_8 : f32 to vector<256x1xf32>
    %15 = arith.divf %13, %14 : vector<256x1xf32>
    %16 = arith.mulf %10, %10 : vector<256x1xf32>
    %17 = arith.subf %15, %16 : vector<256x1xf32>
    %cst_9 = arith.constant 0.000000e+00 : f32
    %18 = vector.broadcast %cst_9 : f32 to vector<256x1xf32>
    %19 = arith.maximumf %17, %18 : vector<256x1xf32>
    %cst_10 = arith.constant 9.99999974E-6 : f32
    %20 = vector.broadcast %cst_10 : f32 to vector<256x1xf32>
    %21 = arith.addf %19, %20 : vector<256x1xf32>
    %22 = math.rsqrt %21 : vector<256x1xf32>
    %23 = vector.broadcast %10 : vector<256x1xf32> to vector<256x512xf32>
    %24 = arith.subf %6, %23 : vector<256x512xf32>
    %25 = vector.broadcast %22 : vector<256x1xf32> to vector<256x512xf32>
    %26 = arith.mulf %24, %25 : vector<256x512xf32>
    %c0_11 = arith.constant 0 : index
    %c0_12 = arith.constant 0 : index
    %27 = vector.load %arg4[%c0_11, %c0_12] : memref<1x512xf32, #tpu.memory_space<vmem>>, vector<1x512xf32>
    %28 = vector.broadcast %27 : vector<1x512xf32> to vector<256x512xf32>
    %29 = arith.mulf %26, %28 : vector<256x512xf32>
    %c0_13 = arith.constant 0 : index
    %c0_14 = arith.constant 0 : index
    %30 = vector.load %arg5[%c0_13, %c0_14] : memref<1x512xf32, #tpu.memory_space<vmem>>, vector<1x512xf32>
    %31 = vector.broadcast %30 : vector<1x512xf32> to vector<256x512xf32>
    %32 = arith.addf %29, %31 : vector<256x512xf32>
    %cst_15 = arith.constant 0.000000e+00 : f32
    %33 = vector.broadcast %cst_15 : f32 to vector<256x512xf32>
    %34 = arith.maximumf %32, %33 : vector<256x512xf32>
    %35 = arith.truncf %34 : vector<256x512xf32> to vector<256x512xbf16>
    %c0_16 = arith.constant 0 : index
    %c0_17 = arith.constant 0 : index
    %36 = vector.load %arg6[%c0_16, %c0_17] : memref<512x256xbf16, #tpu.memory_space<vmem>>, vector<512x256xbf16>
    %cst_18 = arith.constant dense<0.000000e+00> : vector<256x256xf32>
    %37 = tpu.matmul %35, %36, %cst_18 {dimension_numbers = #tpu.dot_dimension_numbers<[1], [0], [0], [1], [0, 0, 1, 1], [], []>} : vector<256x512xbf16>, vector<512x256xbf16>, vector<256x256xf32> -> vector<256x256xf32>
    %c0_19 = arith.constant 0 : index
    %c0_20 = arith.constant 0 : index
    %38 = vector.load %arg7[%c0_19, %c0_20] : memref<1x256xf32, #tpu.memory_space<vmem>>, vector<1x256xf32>
    %39 = vector.broadcast %38 : vector<1x256xf32> to vector<256x256xf32>
    %40 = arith.addf %37, %39 : vector<256x256xf32>
    %c0_21 = arith.constant 0 : index
    %c0_22 = arith.constant 0 : index
    %41 = vector.load %arg8[%c0_21, %c0_22] : memref<256x256xf32, #tpu.memory_space<vmem>>, vector<256x256xf32>
    tpu.vector_store %arg8[%c0_21, %c0_22], %40 {strides = array<i32>} : memref<256x256xf32, #tpu.memory_space<vmem>>, vector<256x256xf32>,
    return
  }
  func.func @transform_0(%arg0: i32) -> (i32, i32) {
    %c0_i32 = arith.constant 0 : i32
    %c0_i32_0 = arith.constant 0 : i32
    return %arg0, %c0_i32 : i32, i32
  }
  func.func @transform_1(%arg0: i32) -> (i32, i32) {
    %c0_i32 = arith.constant 0 : i32
    %c0_i32_0 = arith.constant 0 : i32
    %c0_i32_1 = arith.constant 0 : i32
    return %c0_i32, %c0_i32_0 : i32, i32
  }
  func.func @transform_2(%arg0: i32) -> (i32, i32) {
    %c0_i32 = arith.constant 0 : i32
    %c0_i32_0 = arith.constant 0 : i32
    %c0_i32_1 = arith.constant 0 : i32
    return %c0_i32, %c0_i32_0 : i32, i32
  }
  func.func @transform_3(%arg0: i32) -> (i32, i32) {
    %c0_i32 = arith.constant 0 : i32
    %c0_i32_0 = arith.constant 0 : i32
    %c0_i32_1 = arith.constant 0 : i32
    return %c0_i32, %c0_i32_0 : i32, i32
  }
  func.func @transform_4(%arg0: i32) -> (i32, i32) {
    %c0_i32 = arith.constant 0 : i32
    %c0_i32_0 = arith.constant 0 : i32
    %c0_i32_1 = arith.constant 0 : i32
    return %c0_i32, %c0_i32_0 : i32, i32
  }
  func.func @transform_5(%arg0: i32) -> (i32, i32) {
    %c0_i32 = arith.constant 0 : i32
    %c0_i32_0 = arith.constant 0 : i32
    %c0_i32_1 = arith.constant 0 : i32
    return %c0_i32, %c0_i32_0 : i32, i32
  }
  func.func @transform_6(%arg0: i32) -> (i32, i32) {
    %c0_i32 = arith.constant 0 : i32
    %c0_i32_0 = arith.constant 0 : i32
    %c0_i32_1 = arith.constant 0 : i32
    return %c0_i32, %c0_i32_0 : i32, i32
  }
  func.func @transform_7(%arg0: i32) -> (i32, i32) {
    %c0_i32 = arith.constant 0 : i32
    %c0_i32_0 = arith.constant 0 : i32
    return %arg0, %c0_i32 : i32, i32
  }
}

</mosaic_0001>

<llo_original>
// kernel: tpu_custom_call.1
$region0: #{tpu_custom_call.1}
  #allocation0 [shape = 'u32[]', space=smem, size = 0x4, offset = 0x4, fixed_abs, tag = 'smem constant byte address 0x4 - core index']
  #allocation1 [shape = 'u32[144,128]{1,0:T(1,128)}', space=vmem, size = 0x12000, scoped, tag = 'internal scratch']
  %s0 = inlined_call_operand.hbm [shape: f32[256,256], index: 0, kind: input, shape index: {}]
  %s1 = inlined_call_operand.hbm [shape: bf16[256,512], index: 1, kind: input, shape index: {}]
  %s2 = inlined_call_operand.vmem [shape: f32[1,512], index: 2, kind: input, shape index: {}]
  %s3 = inlined_call_operand.vmem [shape: f32[1,512], index: 3, kind: input, shape index: {}]
  %s4 = inlined_call_operand.vmem [shape: f32[1,512], index: 4, kind: input, shape index: {}]
  %s5 = inlined_call_operand.hbm [shape: bf16[512,256], index: 5, kind: input, shape index: {}]
  %s6 = inlined_call_operand.vmem [shape: f32[1,256], index: 6, kind: input, shape index: {}]
  %s7 = inlined_call_operand.hbm [shape: f32[256,256], index: 7, kind: output, shape index: {}]
  %s8 = sld [smem:[#allocation0]]
  $region50: #{tpu_custom_call.1} parent=0
    _
  %s10 = ssub.s32 1, %s8
  %s11 = scalar_select 0, %s10, %s8
  $region1: #{tpu_custom_call.1} parent=0
    #allocation2 [shape = 'u8[262144]{0}', space=vmem, size = 0x40000, scoped, tag = 'input window, operand 0, single buffered']
    #allocation3 [shape = 's32[1]{0}', space=sflag, size = 0x4, scoped, tag = 'scoped memory for tpu_custom_call.1']
    #allocation4 [shape = 's32[1]{0}', space=sflag, size = 0x4, scoped, tag = 'scoped memory for tpu_custom_call.1']
    #allocation5 [shape = 'u8[262144]{0}', space=vmem, size = 0x40000, scoped, tag = 'input window, operand 1, single buffered']
    #allocation6 [shape = 's32[1]{0}', space=sflag, size = 0x4, scoped, tag = 'scoped memory for tpu_custom_call.1']
    #allocation7 [shape = 'u8[262144]{0}', space=vmem, size = 0x40000, scoped, tag = 'input window, operand 5, single buffered']
    #allocation8 [shape = 'u8[262144]{0}', space=vmem, size = 0x40000, scoped, tag = 'output window, operand 0, single buffered']
    %12 = vsyncpa [#allocation3], 0
    %13 = vsyncpa [#allocation6], 0
    %14 = vsyncpa [#allocation4], 0
    // Predicated region
    $region2: #{tpu_custom_call.1} parent=1 // pred_check
      _
    $region3: #{tpu_custom_call.1} parent=1 // pred_check_branch
      %16 = sbr.rel (0) target = $region5
    $region4: #{tpu_custom_call.1} parent=1 // pred_region
      %s18 = ssub.s32 8192, 8192
      %19 = vsyncadd [#allocation3], %s18
      %s20 = sshll.u32 [#allocation2], 4
      %s21 = int_to_ptr.vmem [resolvable:$true] %s20
      %26 = dma.hbm_to_vmem [thread:$0]  %s0, 8192, %s21, [#allocation3], 256, 256, 16
    $region5: #{tpu_custom_call.1} parent=1 // pred_fallthru
      _
    // Predicated region
    $region6: #{tpu_custom_call.1} parent=1 // pred_check
      _
    $region7: #{tpu_custom_call.1} parent=1 // pred_check_branch
      %28 = sbr.rel (0) target = $region9
    $region8: #{tpu_custom_call.1} parent=1 // pred_region
      %s30 = ssub.s32 8192, 8192
      %31 = vsyncadd [#allocation6], %s30
      %s32 = sshll.u32 [#allocation5], 4
      %s33 = int_to_ptr.vmem [resolvable:$true] %s32
      %38 = dma.hbm_to_vmem [thread:$0]  %s1, 8192, %s33, [#allocation6], 256, 256, 16
    $region9: #{tpu_custom_call.1} parent=1 // pred_fallthru
      _
    // Predicated region
    $region10: #{tpu_custom_call.1} parent=1 // pred_check
      _
    $region11: #{tpu_custom_call.1} parent=1 // pred_check_branch
      %40 = sbr.rel (0) target = $region13
    $region12: #{tpu_custom_call.1} parent=1 // pred_region
      _
    $region13: #{tpu_custom_call.1} parent=1 // pred_fallthru
      _
    // Predicated region
    $region14: #{tpu_custom_call.1} parent=1 // pred_check
      _
    $region15: #{tpu_custom_call.1} parent=1 // pred_check_branch
      %42 = sbr.rel (0) target = $region17
    $region16: #{tpu_custom_call.1} parent=1 // pred_region
      _
    $region17: #{tpu_custom_call.1} parent=1 // pred_fallthru
      _
    // Predicated region
    $region18: #{tpu_custom_call.1} parent=1 // pred_check
      _
    $region19: #{tpu_custom_call.1} parent=1 // pred_check_branch
      %44 = sbr.rel (0) target = $region21
    $region20: #{tpu_custom_call.1} parent=1 // pred_region
      _
    $region21: #{tpu_custom_call.1} parent=1 // pred_fallthru
      _
    // Predicated region
    $region22: #{tpu_custom_call.1} parent=1 // pred_check
      _
    $region23: #{tpu_custom_call.1} parent=1 // pred_check_branch
      %46 = sbr.rel (0) target = $region25
    $region24: #{tpu_custom_call.1} parent=1 // pred_region
      %s48 = ssub.s32 8192, 8192
      %49 = vsyncadd [#allocation6], %s48
      %s50 = sshll.u32 [#allocation7], 4
      %s51 = int_to_ptr.vmem [resolvable:$true] %s50
      %56 = dma.hbm_to_vmem [thread:$0]  %s5, 8192, %s51, [#allocation6], 128, 128, 8
    $region25: #{tpu_custom_call.1} parent=1 // pred_fallthru
      _
    // Predicated region
    $region26: #{tpu_custom_call.1} parent=1 // pred_check
      _
    $region27: #{tpu_custom_call.1} parent=1 // pred_check_branch
      %58 = sbr.rel (0) target = $region29
    $region28: #{tpu_custom_call.1} parent=1 // pred_region
      _
    $region29: #{tpu_custom_call.1} parent=1 // pred_fallthru
      _
    // Predicated region
    $region30: #{tpu_custom_call.1} parent=1 // pred_check
      _
    $region31: #{tpu_custom_call.1} parent=1 // pred_check_branch
      %60 = sbr.rel (0) target = $region33
    $region32: #{tpu_custom_call.1} parent=1 // pred_region
      %61 = dma.done [#allocation3], 8192
    $region33: #{tpu_custom_call.1} parent=1 // pred_fallthru
      _
    // Predicated region
    $region34: #{tpu_custom_call.1} parent=1 // pred_check
      _
    $region35: #{tpu_custom_call.1} parent=1 // pred_check_branch
      %63 = sbr.rel (0) target = $region37
    $region36: #{tpu_custom_call.1} parent=1 // pred_region
      %64 = dma.done [#allocation6], 8192
    $region37: #{tpu_custom_call.1} parent=1 // pred_fallthru
      _
    // Predicated region
    $region38: #{tpu_custom_call.1} parent=1 // pred_check
      _
    $region39: #{tpu_custom_call.1} parent=1 // pred_check_branch
      %66 = sbr.rel (0) target = $region41
    $region40: #{tpu_custom_call.1} parent=1 // pred_region
      %67 = dma.done [#allocation6], 8192
    $region41: #{tpu_custom_call.1} parent=1 // pred_fallthru
      _
    %v68 = vld [vmem:[#allocation2] sm:$0xff]
    %v69 = vld [vmem:[#allocation2 + $0x8] sm:$0xff]
    %v70 = vld [vmem:[#allocation2 + $0x10] sm:$0xff]
    %v71 = vld [vmem:[#allocation2 + $0x18] sm:$0xff]
    %v72 = vld [vmem:[#allocation2 + $0x20] sm:$0xff]
    %v73 = vld [vmem:[#allocation2 + $0x28] sm:$0xff]
    %v74 = vld [vmem:[#allocation2 + $0x30] sm:$0xff]
    %v75 = vld [vmem:[#allocation2 + $0x38] sm:$0xff]
    %v76 = vld [vmem:[#allocation2 + $0x40] sm:$0xff]
    %v77 = vld [vmem:[#allocation2 + $0x48] sm:$0xff]
    %v78 = vld [vmem:[#allocation2 + $0x50] sm:$0xff]
    %v79 = vld [vmem:[#allocation2 + $0x58] sm:$0xff]
    %v80 = vld [vmem:[#allocation2 + $0x60] sm:$0xff]
    %v81 = vld [vmem:[#allocation2 + $0x68] sm:$0xff]
    %v82 = vld [vmem:[#allocation2 + $0x70] sm:$0xff]
    %v83 = vld [vmem:[#allocation2 + $0x78] sm:$0xff]
    %v84 = vld [vmem:[#allocation2 + $0x80] sm:$0xff]
    %v85 = vld [vmem:[#allocation2 + $0x88] sm:$0xff]
    %v86 = vld [vmem:[#allocation2 + $0x90] sm:$0xff]
    %v87 = vld [vmem:[#allocation2 + $0x98] sm:$0xff]
    %v88 = vld [vmem:[#allocation2 + $0xa0] sm:$0xff]
    %v89 = vld [vmem:[#allocation2 + $0xa8] sm:$0xff]
    %v90 = vld [vmem:[#allocation2 + $0xb0] sm:$0xff]
    %v91 = vld [vmem:[#allocation2 + $0xb8] sm:$0xff]
    %v92 = vld [vmem:[#allocation2 + $0xc0] sm:$0xff]
    %v93 = vld [vmem:[#allocation2 + $0xc8] sm:$0xff]
    %v94 = vld [vmem:[#allocation2 + $0xd0] sm:$0xff]
    %v95 = vld [vmem:[#allocation2 + $0xd8] sm:$0xff]
    %v96 = vld [vmem:[#allocation2 + $0xe0] sm:$0xff]
    %v97 = vld [vmem:[#allocation2 + $0xe8] sm:$0xff]
    %v98 = vld [vmem:[#allocation2 + $0xf0] sm:$0xff]
    %v99 = vld [vmem:[#allocation2 + $0xf8] sm:$0xff]
    %v100 = vld [vmem:[#allocation2 + $0x100] sm:$0xff]
    %v101 = vld [vmem:[#allocation2 + $0x108] sm:$0xff]
    %v102 = vld [vmem:[#allocation2 + $0x110] sm:$0xff]
    %v103 = vld [vmem:[#allocation2 + $0x118] sm:$0xff]
    %v104 = vld [vmem:[#allocation2 + $0x120] sm:$0xff]
    %v105 = vld [vmem:[#allocation2 + $0x128] sm:$0xff]
    %v106 = vld [vmem:[#allocation2 + $0x130] sm:$0xff]
    %v107 = vld [vmem:[#allocation2 + $0x138] sm:$0xff]
    %v108 = vld [vmem:[#allocation2 + $0x140] sm:$0xff]
    %v109 = vld [vmem:[#allocation2 + $0x148] sm:$0xff]
    %v110 = vld [vmem:[#allocation2 + $0x150] sm:$0xff]
    %v111 = vld [vmem:[#allocation2 + $0x158] sm:$0xff]
    %v112 = vld [vmem:[#allocation2 + $0x160] sm:$0xff]
    %v113 = vld [vmem:[#allocation2 + $0x168] sm:$0xff]
    %v114 = vld [vmem:[#allocation2 + $0x170] sm:$0xff]
    %v115 = vld [vmem:[#allocation2 + $0x178] sm:$0xff]
    %v116 = vld [vmem:[#allocation2 + $0x180] sm:$0xff]
    %v117 = vld [vmem:[#allocation2 + $0x188] sm:$0xff]
    %v118 = vld [vmem:[#allocation2 + $0x190] sm:$0xff]
    %v119 = vld [vmem:[#allocation2 + $0x198] sm:$0xff]
    %v120 = vld [vmem:[#allocation2 + $0x1a0] sm:$0xff]
    %v121 = vld [vmem:[#allocation2 + $0x1a8] sm:$0xff]
    %v122 = vld [vmem:[#allocation2 + $0x1b0] sm:$0xff]
    %v123 = vld [vmem:[#allocation2 + $0x1b8] sm:$0xff]
    %v124 = vld [vmem:[#allocation2 + $0x1c0] sm:$0xff]
    %v125 = vld [vmem:[#allocation2 + $0x1c8] sm:$0xff]
    %v126 = vld [vmem:[#allocation2 + $0x1d0] sm:$0xff]
    %v127 = vld [vmem:[#allocation2 + $0x1d8] sm:$0xff]
    %v128 = vld [vmem:[#allocation2 + $0x1e0] sm:$0xff]
    %v129 = vld [vmem:[#allocation2 + $0x1e8] sm:$0xff]
    %v130 = vld [vmem:[#allocation2 + $0x1f0] sm:$0xff]
    %v131 = vld [vmem:[#allocation2 + $0x1f8] sm:$0xff]
    %v132 = vpack.c.bf16 %v70, %v68
    %v133 = vpack.c.bf16 %v71, %v69
    %v134 = vpack.c.bf16 %v74, %v72
    %v135 = vpack.c.bf16 %v75, %v73
    %v136 = vpack.c.bf16 %v78, %v76
    %v137 = vpack.c.bf16 %v79, %v77
    %v138 = vpack.c.bf16 %v82, %v80
    %v139 = vpack.c.bf16 %v83, %v81
    %v140 = vpack.c.bf16 %v86, %v84
    %v141 = vpack.c.bf16 %v87, %v85
    %v142 = vpack.c.bf16 %v90, %v88
    %v143 = vpack.c.bf16 %v91, %v89
    %v144 = vpack.c.bf16 %v94, %v92
    %v145 = vpack.c.bf16 %v95, %v93
    %v146 = vpack.c.bf16 %v98, %v96
    %v147 = vpack.c.bf16 %v99, %v97
    %v148 = vpack.c.bf16 %v102, %v100
    %v149 = vpack.c.bf16 %v103, %v101
    %v150 = vpack.c.bf16 %v106, %v104
    %v151 = vpack.c.bf16 %v107, %v105
    %v152 = vpack.c.bf16 %v110, %v108
    %v153 = vpack.c.bf16 %v111, %v109
    %v154 = vpack.c.bf16 %v114, %v112
    %v155 = vpack.c.bf16 %v115, %v113
    %v156 = vpack.c.bf16 %v118, %v116
    %v157 = vpack.c.bf16 %v119, %v117
    %v158 = vpack.c.bf16 %v122, %v120
    %v159 = vpack.c.bf16 %v123, %v121
    %v160 = vpack.c.bf16 %v126, %v124
    %v161 = vpack.c.bf16 %v127, %v125
    %v162 = vpack.c.bf16 %v130, %v128
    %v163 = vpack.c.bf16 %v131, %v129
    %v164 = vld [vmem:[#allocation5] sm:$0xff]
    %v165 = vld [vmem:[#allocation5 + $0x8] sm:$0xff]
    %v166 = vld [vmem:[#allocation5 + $0x10] sm:$0xff]
    %v167 = vld [vmem:[#allocation5 + $0x18] sm:$0xff]
    %v168 = vld [vmem:[#allocation5 + $0x20] sm:$0xff]
    %v169 = vld [vmem:[#allocation5 + $0x28] sm:$0xff]
    %v170 = vld [vmem:[#allocation5 + $0x30] sm:$0xff]
    %v171 = vld [vmem:[#allocation5 + $0x38] sm:$0xff]
    %v172 = vld [vmem:[#allocation5 + $0x40] sm:$0xff]
    %v173 = vld [vmem:[#allocation5 + $0x48] sm:$0xff]
    %v174 = vld [vmem:[#allocation5 + $0x50] sm:$0xff]
    %v175 = vld [vmem:[#allocation5 + $0x58] sm:$0xff]
    %v176 = vld [vmem:[#allocation5 + $0x60] sm:$0xff]
    %v177 = vld [vmem:[#allocation5 + $0x68] sm:$0xff]
    %v178 = vld [vmem:[#allocation5 + $0x70] sm:$0xff]
    %v179 = vld [vmem:[#allocation5 + $0x78] sm:$0xff]
    %v180 = vld [vmem:[#allocation5 + $0x80] sm:$0xff]
    %v181 = vld [vmem:[#allocation5 + $0x88] sm:$0xff]
    %v182 = vld [vmem:[#allocation5 + $0x90] sm:$0xff]
    %v183 = vld [vmem:[#allocation5 + $0x98] sm:$0xff]
    %v184 = vld [vmem:[#allocation5 + $0xa0] sm:$0xff]
    %v185 = vld [vmem:[#allocation5 + $0xa8] sm:$0xff]
    %v186 = vld [vmem:[#allocation5 + $0xb0] sm:$0xff]
    %v187 = vld [vmem:[#allocation5 + $0xb8] sm:$0xff]
    %v188 = vld [vmem:[#allocation5 + $0xc0] sm:$0xff]
    %v189 = vld [vmem:[#allocation5 + $0xc8] sm:$0xff]
    %v190 = vld [vmem:[#allocation5 + $0xd0] sm:$0xff]
    %v191 = vld [vmem:[#allocation5 + $0xd8] sm:$0xff]
    %v192 = vld [vmem:[#allocation5 + $0xe0] sm:$0xff]
    %v193 = vld [vmem:[#allocation5 + $0xe8] sm:$0xff]
    %v194 = vld [vmem:[#allocation5 + $0xf0] sm:$0xff]
    %v195 = vld [vmem:[#allocation5 + $0xf8] sm:$0xff]
    %v196 = vld [vmem:[#allocation5 + $0x100] sm:$0xff]
    %v197 = vld [vmem:[#allocation5 + $0x108] sm:$0xff]
    %v198 = vld [vmem:[#allocation5 + $0x110] sm:$0xff]
    %v199 = vld [vmem:[#allocation5 + $0x118] sm:$0xff]
    %v200 = vld [vmem:[#allocation5 + $0x120] sm:$0xff]
    %v201 = vld [vmem:[#allocation5 + $0x128] sm:$0xff]
    %v202 = vld [vmem:[#allocation5 + $0x130] sm:$0xff]
    %v203 = vld [vmem:[#allocation5 + $0x138] sm:$0xff]
    %v204 = vld [vmem:[#allocation5 + $0x140] sm:$0xff]
    %v205 = vld [vmem:[#allocation5 + $0x148] sm:$0xff]
    %v206 = vld [vmem:[#allocation5 + $0x150] sm:$0xff]
    %v207 = vld [vmem:[#allocation5 + $0x158] sm:$0xff]
    %v208 = vld [vmem:[#allocation5 + $0x160] sm:$0xff]
    %v209 = vld [vmem:[#allocation5 + $0x168] sm:$0xff]
    %v210 = vld [vmem:[#allocation5 + $0x170] sm:$0xff]
    %v211 = vld [vmem:[#allocation5 + $0x178] sm:$0xff]
    %v212 = vld [vmem:[#allocation5 + $0x180] sm:$0xff]
    %v213 = vld [vmem:[#allocation5 + $0x188] sm:$0xff]
    %v214 = vld [vmem:[#allocation5 + $0x190] sm:$0xff]
    %v215 = vld [vmem:[#allocation5 + $0x198] sm:$0xff]
    %v216 = vld [vmem:[#allocation5 + $0x1a0] sm:$0xff]
    %v217 = vld [vmem:[#allocation5 + $0x1a8] sm:$0xff]
    %v218 = vld [vmem:[#allocation5 + $0x1b0] sm:$0xff]
    %v219 = vld [vmem:[#allocation5 + $0x1b8] sm:$0xff]
    %v220 = vld [vmem:[#allocation5 + $0x1c0] sm:$0xff]
    %v221 = vld [vmem:[#allocation5 + $0x1c8] sm:$0xff]
    %v222 = vld [vmem:[#allocation5 + $0x1d0] sm:$0xff]
    %v223 = vld [vmem:[#allocation5 + $0x1d8] sm:$0xff]
    %v224 = vld [vmem:[#allocation5 + $0x1e0] sm:$0xff]
    %v225 = vld [vmem:[#allocation5 + $0x1e8] sm:$0xff]
    %v226 = vld [vmem:[#allocation5 + $0x1f0] sm:$0xff]
    %v227 = vld [vmem:[#allocation5 + $0x1f8] sm:$0xff]
    %v228 = vld [vmem:[%s2] sm:$0xf]
    %v230 = vlaneseq
    %v231 = vshrl.u32 %v230, 7
    %v232 = vsub.s32 0, %v231
    %v233 = vrot.slane %v228, %v232
    %v234 = vlaneseq
    %v235 = vshrl.u32 %v234, 7
    %v236 = vsub.s32 1, %v235
    %v237 = vrot.slane %v228, %v236
    %v238 = vlaneseq
    %v239 = vshrl.u32 %v238, 7
    %v240 = vsub.s32 2, %v239
    %v241 = vrot.slane %v228, %v240
    %v242 = vlaneseq
    %v243 = vshrl.u32 %v242, 7
    %v244 = vsub.s32 3, %v243
    %v245 = vrot.slane %v228, %v244
    %v314 = vunpack.c.l.b16 %v164
    %v315 = vunpack.c.h.b16 %v164
    %v316 = vunpack.c.l.b16 %v165
    %v317 = vunpack.c.h.b16 %v165
    %v318 = vunpack.c.l.b16 %v166
    %v319 = vunpack.c.h.b16 %v166
    %v320 = vunpack.c.l.b16 %v167
    %v321 = vunpack.c.h.b16 %v167
    %v322 = vunpack.c.l.b16 %v168
    %v323 = vunpack.c.h.b16 %v168
    %v324 = vunpack.c.l.b16 %v169
    %v325 = vunpack.c.h.b16 %v169
    %v326 = vunpack.c.l.b16 %v170
    %v327 = vunpack.c.h.b16 %v170
    %v328 = vunpack.c.l.b16 %v171
    %v329 = vunpack.c.h.b16 %v171
    %v330 = vunpack.c.l.b16 %v172
    %v331 = vunpack.c.h.b16 %v172
    %v332 = vunpack.c.l.b16 %v173
    %v333 = vunpack.c.h.b16 %v173
    %v334 = vunpack.c.l.b16 %v174
    %v335 = vunpack.c.h.b16 %v174
    %v336 = vunpack.c.l.b16 %v175
    %v337 = vunpack.c.h.b16 %v175
    %v338 = vunpack.c.l.b16 %v176
    %v339 = vunpack.c.h.b16 %v176
    %v340 = vunpack.c.l.b16 %v177
    %v341 = vunpack.c.h.b16 %v177
    %v342 = vunpack.c.l.b16 %v178
    %v343 = vunpack.c.h.b16 %v178
    %v344 = vunpack.c.l.b16 %v179
    %v345 = vunpack.c.h.b16 %v179
    %v346 = vunpack.c.l.b16 %v180
    %v347 = vunpack.c.h.b16 %v180
    %v348 = vunpack.c.l.b16 %v181
    %v349 = vunpack.c.h.b16 %v181
    %v350 = vunpack.c.l.b16 %v182
    %v351 = vunpack.c.h.b16 %v182
    %v352 = vunpack.c.l.b16 %v183
    %v353 = vunpack.c.h.b16 %v183
    %v354 = vunpack.c.l.b16 %v184
    %v355 = vunpack.c.h.b16 %v184
    %v356 = vunpack.c.l.b16 %v185
    %v357 = vunpack.c.h.b16 %v185
    %v358 = vunpack.c.l.b16 %v186
    %v359 = vunpack.c.h.b16 %v186
    %v360 = vunpack.c.l.b16 %v187
    %v361 = vunpack.c.h.b16 %v187
    %v362 = vunpack.c.l.b16 %v188
    %v363 = vunpack.c.h.b16 %v188
    %v364 = vunpack.c.l.b16 %v189
    %v365 = vunpack.c.h.b16 %v189
    %v366 = vunpack.c.l.b16 %v190
    %v367 = vunpack.c.h.b16 %v190
    %v368 = vunpack.c.l.b16 %v191
    %v369 = vunpack.c.h.b16 %v191
    %v370 = vunpack.c.l.b16 %v192
    %v371 = vunpack.c.h.b16 %v192
    %v372 = vunpack.c.l.b16 %v193
    %v373 = vunpack.c.h.b16 %v193
    %v374 = vunpack.c.l.b16 %v194
    %v375 = vunpack.c.h.b16 %v194
    %v376 = vunpack.c.l.b16 %v195
    %v377 = vunpack.c.h.b16 %v195
    %v378 = vunpack.c.l.b16 %v196
    %v379 = vunpack.c.h.b16 %v196
    %v380 = vunpack.c.l.b16 %v197
    %v381 = vunpack.c.h.b16 %v197
    %v382 = vunpack.c.l.b16 %v198
    %v383 = vunpack.c.h.b16 %v198
    %v384 = vunpack.c.l.b16 %v199
    %v385 = vunpack.c.h.b16 %v199
    %v386 = vunpack.c.l.b16 %v200
    %v387 = vunpack.c.h.b16 %v200
    %v388 = vunpack.c.l.b16 %v201
    %v389 = vunpack.c.h.b16 %v201
    %v390 = vunpack.c.l.b16 %v202
    %v391 = vunpack.c.h.b16 %v202
    %v392 = vunpack.c.l.b16 %v203
    %v393 = vunpack.c.h.b16 %v203
    %v394 = vunpack.c.l.b16 %v204
    %v395 = vunpack.c.h.b16 %v204
    %v396 = vunpack.c.l.b16 %v205
    %v397 = vunpack.c.h.b16 %v205
    %v398 = vunpack.c.l.b16 %v206
    %v399 = vunpack.c.h.b16 %v206
    %v400 = vunpack.c.l.b16 %v207
    %v401 = vunpack.c.h.b16 %v207
    %v402 = vunpack.c.l.b16 %v208
    %v403 = vunpack.c.h.b16 %v208
    %v404 = vunpack.c.l.b16 %v209
    %v405 = vunpack.c.h.b16 %v209
    %v406 = vunpack.c.l.b16 %v210
    %v407 = vunpack.c.h.b16 %v210
    %v408 = vunpack.c.l.b16 %v211
    %v409 = vunpack.c.h.b16 %v211
    %v410 = vunpack.c.l.b16 %v212
    %v411 = vunpack.c.h.b16 %v212
    %v412 = vunpack.c.l.b16 %v213
    %v413 = vunpack.c.h.b16 %v213
    %v414 = vunpack.c.l.b16 %v214
    %v415 = vunpack.c.h.b16 %v214
    %v416 = vunpack.c.l.b16 %v215
    %v417 = vunpack.c.h.b16 %v215
    %v418 = vunpack.c.l.b16 %v216
    %v419 = vunpack.c.h.b16 %v216
    %v420 = vunpack.c.l.b16 %v217
    %v421 = vunpack.c.h.b16 %v217
    %v422 = vunpack.c.l.b16 %v218
    %v423 = vunpack.c.h.b16 %v218
    %v424 = vunpack.c.l.b16 %v219
    %v425 = vunpack.c.h.b16 %v219
    %v426 = vunpack.c.l.b16 %v220
    %v427 = vunpack.c.h.b16 %v220
    %v428 = vunpack.c.l.b16 %v221
    %v429 = vunpack.c.h.b16 %v221
    %v430 = vunpack.c.l.b16 %v222
    %v431 = vunpack.c.h.b16 %v222
    %v432 = vunpack.c.l.b16 %v223
    %v433 = vunpack.c.h.b16 %v223
    %v434 = vunpack.c.l.b16 %v224
    %v435 = vunpack.c.h.b16 %v224
    %v436 = vunpack.c.l.b16 %v225
    %v437 = vunpack.c.h.b16 %v225
    %v438 = vunpack.c.l.b16 %v226
    %v439 = vunpack.c.h.b16 %v226
    %v440 = vunpack.c.l.b16 %v227
    %v441 = vunpack.c.h.b16 %v227
    %v442 = vpack.c.b16 %v318, %v314
    %v443 = vpack.c.b16 %v319, %v315
    %v444 = vpack.c.b16 %v320, %v316
    %v445 = vpack.c.b16 %v321, %v317
    %v446 = vpack.c.b16 %v326, %v322
    %v447 = vpack.c.b16 %v327, %v323
    %v448 = vpack.c.b16 %v328, %v324
    %v449 = vpack.c.b16 %v329, %v325
    %v450 = vpack.c.b16 %v334, %v330
    %v451 = vpack.c.b16 %v335, %v331
    %v452 = vpack.c.b16 %v336, %v332
    %v453 = vpack.c.b16 %v337, %v333
    %v454 = vpack.c.b16 %v342, %v338
    %v455 = vpack.c.b16 %v343, %v339
    %v456 = vpack.c.b16 %v344, %v340
    %v457 = vpack.c.b16 %v345, %v341
    %v458 = vpack.c.b16 %v350, %v346
    %v459 = vpack.c.b16 %v351, %v347
    %v460 = vpack.c.b16 %v352, %v348
    %v461 = vpack.c.b16 %v353, %v349
    %v462 = vpack.c.b16 %v358, %v354
    %v463 = vpack.c.b16 %v359, %v355
    %v464 = vpack.c.b16 %v360, %v356
    %v465 = vpack.c.b16 %v361, %v357
    %v466 = vpack.c.b16 %v366, %v362
    %v467 = vpack.c.b16 %v367, %v363
    %v468 = vpack.c.b16 %v368, %v364
    %v469 = vpack.c.b16 %v369, %v365
    %v470 = vpack.c.b16 %v374, %v370
    %v471 = vpack.c.b16 %v375, %v371
    %v472 = vpack.c.b16 %v376, %v372
    %v473 = vpack.c.b16 %v377, %v373
    %v474 = vpack.c.b16 %v382, %v378
    %v475 = vpack.c.b16 %v383, %v379
    %v476 = vpack.c.b16 %v384, %v380
    %v477 = vpack.c.b16 %v385, %v381
    %v478 = vpack.c.b16 %v390, %v386
    %v479 = vpack.c.b16 %v391, %v387
    %v480 = vpack.c.b16 %v392, %v388
    %v481 = vpack.c.b16 %v393, %v389
    %v482 = vpack.c.b16 %v398, %v394
    %v483 = vpack.c.b16 %v399, %v395
    %v484 = vpack.c.b16 %v400, %v396
    %v485 = vpack.c.b16 %v401, %v397
    %v486 = vpack.c.b16 %v406, %v402
    %v487 = vpack.c.b16 %v407, %v403
    %v488 = vpack.c.b16 %v408, %v404
    %v489 = vpack.c.b16 %v409, %v405
    %v490 = vpack.c.b16 %v414, %v410
    %v491 = vpack.c.b16 %v415, %v411
    %v492 = vpack.c.b16 %v416, %v412
    %v493 = vpack.c.b16 %v417, %v413
    %v494 = vpack.c.b16 %v422, %v418
    %v495 = vpack.c.b16 %v423, %v419
    %v496 = vpack.c.b16 %v424, %v420
    %v497 = vpack.c.b16 %v425, %v421
    %v498 = vpack.c.b16 %v430, %v426
    %v499 = vpack.c.b16 %v431, %v427
    %v500 = vpack.c.b16 %v432, %v428
    %v501 = vpack.c.b16 %v433, %v429
    %v502 = vpack.c.b16 %v438, %v434
    %v503 = vpack.c.b16 %v439, %v435
    %v504 = vpack.c.b16 %v440, %v436
    %v505 = vpack.c.b16 %v441, %v437
    %570 = vmatprep.subr.bf16.mxu0 %v443
    %571 = vmatpush1.bf16.msra.mxu0 %v442
    %572 = vmatprep.subr.bf16.mxu0 %v447
    %573 = vmatpush1.bf16.msra.mxu0 %v446
    %574 = vmatprep.subr.bf16.mxu0 %v451
    %575 = vmatpush1.bf16.msra.mxu0 %v450
    %576 = vmatprep.subr.bf16.mxu0 %v455
    %577 = vmatpush1.bf16.msra.mxu0 %v454
    %578 = vmatprep.subr.bf16.mxu0 %v459
    %579 = vmatpush1.bf16.msra.mxu0 %v458
    %580 = vmatprep.subr.bf16.mxu0 %v463
    %581 = vmatpush1.bf16.msra.mxu0 %v462
    %582 = vmatprep.subr.bf16.mxu0 %v467
    %583 = vmatpush1.bf16.msra.mxu0 %v466
    %584 = vmatprep.subr.bf16.mxu0 %v471
    %585 = vmatpush1.bf16.msra.mxu0 %v470
    %586 = vmatprep.subr.bf16.mxu0 %v475
    %587 = vmatpush1.bf16.msra.mxu0 %v474
    %588 = vmatprep.subr.bf16.mxu0 %v479
    %589 = vmatpush1.bf16.msra.mxu0 %v478
    %590 = vmatprep.subr.bf16.mxu0 %v483
    %591 = vmatpush1.bf16.msra.mxu0 %v482
    %592 = vmatprep.subr.bf16.mxu0 %v487
    %593 = vmatpush1.bf16.msra.mxu0 %v486
    %594 = vmatprep.subr.bf16.mxu0 %v491
    %595 = vmatpush1.bf16.msra.mxu0 %v490
    %596 = vmatprep.subr.bf16.mxu0 %v495
    %597 = vmatpush1.bf16.msra.mxu0 %v494
    %598 = vmatprep.subr.bf16.mxu0 %v499
    %599 = vmatpush1.bf16.msra.mxu0 %v498
    %600 = vmatprep.subr.bf16.mxu0 %v503
    %601 = vmatpush1.bf16.msra.mxu0 %v502
    %602 = vmatprep.mubr.bf16.mxu0 %v133
    %603 = vmatmul.mubr.bf16.gmra.mrb[0].mxu0 %v132
    %v604 = vpop.f32.mrb[0].mxu0
    %v605 = vadd.f32 %v233, %v604
    %v606 = vpop.f32.mrb[0].mxu0
    %v607 = vadd.f32 %v237, %v606
    %v608 = vpop.f32.mrb[0].mxu0
    %v609 = vadd.f32 %v233, %v608
    %v610 = vpop.f32.mrb[0].mxu0
    %v611 = vadd.f32 %v237, %v610
    %612 = vmatprep.mubr.bf16.mxu0 %v135
    %613 = vmatmul.mubr.bf16.gmra.mrb[0].mxu0 %v134
    %v614 = vpop.f32.mrb[0].mxu0
    %v615 = vadd.f32 %v233, %v614
    %v616 = vpop.f32.mrb[0].mxu0
    %v617 = vadd.f32 %v237, %v616
    %v618 = vpop.f32.mrb[0].mxu0
    %v619 = vadd.f32 %v233, %v618
    %v620 = vpop.f32.mrb[0].mxu0
    %v621 = vadd.f32 %v237, %v620
    %622 = vmatprep.mubr.bf16.mxu0 %v137
    %623 = vmatmul.mubr.bf16.gmra.mrb[0].mxu0 %v136
    %v624 = vpop.f32.mrb[0].mxu0
    %v625 = vadd.f32 %v233, %v624
    %v626 = vpop.f32.mrb[0].mxu0
    %v627 = vadd.f32 %v237, %v626
    %v628 = vpop.f32.mrb[0].mxu0
    %v629 = vadd.f32 %v233, %v628
    %v630 = vpop.f32.mrb[0].mxu0
    %v631 = vadd.f32 %v237, %v630
    %632 = vmatprep.mubr.bf16.mxu0 %v139
    %633 = vmatmul.mubr.bf16.gmra.mrb[0].mxu0 %v138
    %v634 = vpop.f32.mrb[0].mxu0
    %v635 = vadd.f32 %v233, %v634
    %v636 = vpop.f32.mrb[0].mxu0
    %v637 = vadd.f32 %v237, %v636
    %v638 = vpop.f32.mrb[0].mxu0
    %v639 = vadd.f32 %v233, %v638
    %v640 = vpop.f32.mrb[0].mxu0
    %v641 = vadd.f32 %v237, %v640
    %642 = vmatprep.mubr.bf16.mxu0 %v141
    %643 = vmatmul.mubr.bf16.gmra.mrb[0].mxu0 %v140
    %v644 = vpop.f32.mrb[0].mxu0
    %v645 = vadd.f32 %v233, %v644
    %v646 = vpop.f32.mrb[0].mxu0
    %v647 = vadd.f32 %v237, %v646
    %v648 = vpop.f32.mrb[0].mxu0
    %v649 = vadd.f32 %v233, %v648
    %v650 = vpop.f32.mrb[0].mxu0
    %v651 = vadd.f32 %v237, %v650
    %652 = vmatprep.mubr.bf16.mxu0 %v143
    %653 = vmatmul.mubr.bf16.gmra.mrb[0].mxu0 %v142
    %v654 = vpop.f32.mrb[0].mxu0
    %v655 = vadd.f32 %v233, %v654
    %v656 = vpop.f32.mrb[0].mxu0
    %v657 = vadd.f32 %v237, %v656
    %v658 = vpop.f32.mrb[0].mxu0
    %v659 = vadd.f32 %v233, %v658
    %v660 = vpop.f32.mrb[0].mxu0
    %v661 = vadd.f32 %v237, %v660
    %662 = vmatprep.mubr.bf16.mxu0 %v145
    %663 = vmatmul.mubr.bf16.gmra.mrb[0].mxu0 %v144
    %v664 = vpop.f32.mrb[0].mxu0
    %v665 = vadd.f32 %v233, %v664
    %v666 = vpop.f32.mrb[0].mxu0
    %v667 = vadd.f32 %v237, %v666
    %v668 = vpop.f32.mrb[0].mxu0
    %v669 = vadd.f32 %v233, %v668
    %v670 = vpop.f32.mrb[0].mxu0
    %v671 = vadd.f32 %v237, %v670
    %672 = vmatprep.mubr.bf16.mxu0 %v147
    %673 = vmatmul.mubr.bf16.gmra.mrb[0].mxu0 %v146
    %v674 = vpop.f32.mrb[0].mxu0
    %v675 = vadd.f32 %v233, %v674
    %v676 = vpop.f32.mrb[0].mxu0
    %v677 = vadd.f32 %v237, %v676
    %v678 = vpop.f32.mrb[0].mxu0
    %v679 = vadd.f32 %v233, %v678
    %v680 = vpop.f32.mrb[0].mxu0
    %v681 = vadd.f32 %v237, %v680
    %682 = vmatprep.mubr.bf16.mxu0 %v149
    %683 = vmatmul.mubr.bf16.gmra.mrb[0].mxu0 %v148
    %v684 = vpop.f32.mrb[0].mxu0
    %v685 = vadd.f32 %v233, %v684
    %v686 = vpop.f32.mrb[0].mxu0
    %v687 = vadd.f32 %v237, %v686
    %v688 = vpop.f32.mrb[0].mxu0
    %v689 = vadd.f32 %v233, %v688
    %v690 = vpop.f32.mrb[0].mxu0
    %v691 = vadd.f32 %v237, %v690
    %692 = vmatprep.mubr.bf16.mxu0 %v151
    %693 = vmatmul.mubr.bf16.gmra.mrb[0].mxu0 %v150
    %v694 = vpop.f32.mrb[0].mxu0
    %v695 = vadd.f32 %v233, %v694
    %v696 = vpop.f32.mrb[0].mxu0
    %v697 = vadd.f32 %v237, %v696
    %v698 = vpop.f32.mrb[0].mxu0
    %v699 = vadd.f32 %v233, %v698
    %v700 = vpop.f32.mrb[0].mxu0
    %v701 = vadd.f32 %v237, %v700
    %702 = vmatprep.mubr.bf16.mxu0 %v153
    %703 = vmatmul.mubr.bf16.gmra.mrb[0].mxu0 %v152
    %v704 = vpop.f32.mrb[0].mxu0
    %v705 = vadd.f32 %v233, %v704
    %v706 = vpop.f32.mrb[0].mxu0
    %v707 = vadd.f32 %v237, %v706
    %v708 = vpop.f32.mrb[0].mxu0
    %v709 = vadd.f32 %v233, %v708
    %v710 = vpop.f32.mrb[0].mxu0
    %v711 = vadd.f32 %v237, %v710
    %712 = vmatprep.mubr.bf16.mxu0 %v155
    %713 = vmatmul.mubr.bf16.gmra.mrb[0].mxu0 %v154
    %v714 = vpop.f32.mrb[0].mxu0
    %v715 = vadd.f32 %v233, %v714
    %v716 = vpop.f32.mrb[0].mxu0
    %v717 = vadd.f32 %v237, %v716
    %v718 = vpop.f32.mrb[0].mxu0
    %v719 = vadd.f32 %v233, %v718
    %v720 = vpop.f32.mrb[0].mxu0
    %v721 = vadd.f32 %v237, %v720
    %722 = vmatprep.mubr.bf16.mxu0 %v157
    %723 = vmatmul.mubr.bf16.gmra.mrb[0].mxu0 %v156
    %v724 = vpop.f32.mrb[0].mxu0
    %v725 = vadd.f32 %v233, %v724
    %v726 = vpop.f32.mrb[0].mxu0
    %v727 = vadd.f32 %v237, %v726
    %v728 = vpop.f32.mrb[0].mxu0
    %v729 = vadd.f32 %v233, %v728
    %v730 = vpop.f32.mrb[0].mxu0
    %v731 = vadd.f32 %v237, %v730
    %732 = vmatprep.mubr.bf16.mxu0 %v159
    %733 = vmatmul.mubr.bf16.gmra.mrb[0].mxu0 %v158
    %v734 = vpop.f32.mrb[0].mxu0
    %v735 = vadd.f32 %v233, %v734
    %v736 = vpop.f32.mrb[0].mxu0
    %v737 = vadd.f32 %v237, %v736
    %v738 = vpop.f32.mrb[0].mxu0
    %v739 = vadd.f32 %v233, %v738
    %v740 = vpop.f32.mrb[0].mxu0
    %v741 = vadd.f32 %v237, %v740
    %742 = vmatprep.mubr.bf16.mxu0 %v161
    %743 = vmatmul.mubr.bf16.gmra.mrb[0].mxu0 %v160
    %v744 = vpop.f32.mrb[0].mxu0
    %v745 = vadd.f32 %v233, %v744
    %v746 = vpop.f32.mrb[0].mxu0
    %v747 = vadd.f32 %v237, %v746
    %v748 = vpop.f32.mrb[0].mxu0
    %v749 = vadd.f32 %v233, %v748
    %v750 = vpop.f32.mrb[0].mxu0
    %v751 = vadd.f32 %v237, %v750
    %752 = vmatprep.mubr.bf16.mxu0 %v163
    %753 = vmatmul.mubr.bf16.gmra.mrb[0].mxu0 %v162
    %v754 = vpop.f32.mrb[0].mxu0
    %v755 = vadd.f32 %v233, %v754
    %v756 = vpop.f32.mrb[0].mxu0
    %v757 = vadd.f32 %v237, %v756
    %v758 = vpop.f32.mrb[0].mxu0
    %v759 = vadd.f32 %v233, %v758
    %v760 = vpop.f32.mrb[0].mxu0
    %v761 = vadd.f32 %v237, %v760
    %762 = vdwg.mxu0
    %763 = vmatprep.subr.bf16.mxu0 %v445
    %764 = vmatpush1.bf16.msra.mxu0 %v444
    %765 = vmatprep.subr.bf16.mxu0 %v449
    %766 = vmatpush1.bf16.msra.mxu0 %v448
    %767 = vmatprep.subr.bf16.mxu0 %v453
    %768 = vmatpush1.bf16.msra.mxu0 %v452
    %769 = vmatprep.subr.bf16.mxu0 %v457
    %770 = vmatpush1.bf16.msra.mxu0 %v456
    %771 = vmatprep.subr.bf16.mxu0 %v461
    %772 = vmatpush1.bf16.msra.mxu0 %v460
    %773 = vmatprep.subr.bf16.mxu0 %v465
    %774 = vmatpush1.bf16.msra.mxu0 %v464
    %775 = vmatprep.subr.bf16.mxu0 %v469
    %776 = vmatpush1.bf16.msra.mxu0 %v468
    %777 = vmatprep.subr.bf16.mxu0 %v473
    %778 = vmatpush1.bf16.msra.mxu0 %v472
    %779 = vmatprep.subr.bf16.mxu0 %v477
    %780 = vmatpush1.bf16.msra.mxu0 %v476
    %781 = vmatprep.subr.bf16.mxu0 %v481
    %782 = vmatpush1.bf16.msra.mxu0 %v480
    %783 = vmatprep.subr.bf16.mxu0 %v485
    %784 = vmatpush1.bf16.msra.mxu0 %v484
    %785 = vmatprep.subr.bf16.mxu0 %v489
    %786 = vmatpush1.bf16.msra.mxu0 %v488
    %787 = vmatprep.subr.bf16.mxu0 %v493
    %788 = vmatpush1.bf16.msra.mxu0 %v492
    %789 = vmatprep.subr.bf16.mxu0 %v497
    %790 = vmatpush1.bf16.msra.mxu0 %v496
    %791 = vmatprep.subr.bf16.mxu0 %v501
    %792 = vmatpush1.bf16.msra.mxu0 %v500
    %793 = vmatprep.subr.bf16.mxu0 %v505
    %794 = vmatpush1.bf16.msra.mxu0 %v504
    %795 = vmatprep.mubr.bf16.mxu0 %v133
    %796 = vmatmul.mubr.bf16.gmra.mrb[0].mxu0 %v132
    %v797 = vpop.f32.mrb[0].mxu0
    %v798 = vadd.f32 %v241, %v797
    %v799 = vpop.f32.mrb[0].mxu0
    %v800 = vadd.f32 %v245, %v799
    %v801 = vpop.f32.mrb[0].mxu0
    %v802 = vadd.f32 %v241, %v801
    %v803 = vpop.f32.mrb[0].mxu0
    %v804 = vadd.f32 %v245, %v803
    %805 = vmatprep.mubr.bf16.mxu0 %v135
    %806 = vmatmul.mubr.bf16.gmra.mrb[0].mxu0 %v134
    %v807 = vpop.f32.mrb[0].mxu0
    %v808 = vadd.f32 %v241, %v807
    %v809 = vpop.f32.mrb[0].mxu0
    %v810 = vadd.f32 %v245, %v809
    %v811 = vpop.f32.mrb[0].mxu0
    %v812 = vadd.f32 %v241, %v811
    %v813 = vpop.f32.mrb[0].mxu0
    %v814 = vadd.f32 %v245, %v813
    %815 = vmatprep.mubr.bf16.mxu0 %v137
    %816 = vmatmul.mubr.bf16.gmra.mrb[0].mxu0 %v136
    %v817 = vpop.f32.mrb[0].mxu0
    %v818 = vadd.f32 %v241, %v817
    %v819 = vpop.f32.mrb[0].mxu0
    %v820 = vadd.f32 %v245, %v819
    %v821 = vpop.f32.mrb[0].mxu0
    %v822 = vadd.f32 %v241, %v821
    %v823 = vpop.f32.mrb[0].mxu0
    %v824 = vadd.f32 %v245, %v823
    %825 = vmatprep.mubr.bf16.mxu0 %v139
    %826 = vmatmul.mubr.bf16.gmra.mrb[0].mxu0 %v138
    %v827 = vpop.f32.mrb[0].mxu0
    %v828 = vadd.f32 %v241, %v827
    %v829 = vpop.f32.mrb[0].mxu0
    %v830 = vadd.f32 %v245, %v829
    %v831 = vpop.f32.mrb[0].mxu0
    %v832 = vadd.f32 %v241, %v831
    %v833 = vpop.f32.mrb[0].mxu0
    %v834 = vadd.f32 %v245, %v833
    %835 = vmatprep.mubr.bf16.mxu0 %v141
    %836 = vmatmul.mubr.bf16.gmra.mrb[0].mxu0 %v140
    %v837 = vpop.f32.mrb[0].mxu0
    %v838 = vadd.f32 %v241, %v837
    %v839 = vpop.f32.mrb[0].mxu0
    %v840 = vadd.f32 %v245, %v839
    %v841 = vpop.f32.mrb[0].mxu0
    %v842 = vadd.f32 %v241, %v841
    %v843 = vpop.f32.mrb[0].mxu0
    %v844 = vadd.f32 %v245, %v843
    %845 = vmatprep.mubr.bf16.mxu0 %v143
    %846 = vmatmul.mubr.bf16.gmra.mrb[0].mxu0 %v142
    %v847 = vpop.f32.mrb[0].mxu0
    %v848 = vadd.f32 %v241, %v847
    %v849 = vpop.f32.mrb[0].mxu0
    %v850 = vadd.f32 %v245, %v849
    %v851 = vpop.f32.mrb[0].mxu0
    %v852 = vadd.f32 %v241, %v851
    %v853 = vpop.f32.mrb[0].mxu0
    %v854 = vadd.f32 %v245, %v853
    %855 = vmatprep.mubr.bf16.mxu0 %v145
    %856 = vmatmul.mubr.bf16.gmra.mrb[0].mxu0 %v144
    %v857 = vpop.f32.mrb[0].mxu0
    %v858 = vadd.f32 %v241, %v857
    %v859 = vpop.f32.mrb[0].mxu0
    %v860 = vadd.f32 %v245, %v859
    %v861 = vpop.f32.mrb[0].mxu0
    %v862 = vadd.f32 %v241, %v861
    %v863 = vpop.f32.mrb[0].mxu0
    %v864 = vadd.f32 %v245, %v863
    %865 = vmatprep.mubr.bf16.mxu0 %v147
    %866 = vmatmul.mubr.bf16.gmra.mrb[0].mxu0 %v146
    %v867 = vpop.f32.mrb[0].mxu0
    %v868 = vadd.f32 %v241, %v867
    %v869 = vpop.f32.mrb[0].mxu0
    %v870 = vadd.f32 %v245, %v869
    %v871 = vpop.f32.mrb[0].mxu0
    %v872 = vadd.f32 %v241, %v871
    %v873 = vpop.f32.mrb[0].mxu0
    %v874 = vadd.f32 %v245, %v873
    %875 = vmatprep.mubr.bf16.mxu0 %v149
    %876 = vmatmul.mubr.bf16.gmra.mrb[0].mxu0 %v148
    %v877 = vpop.f32.mrb[0].mxu0
    %v878 = vadd.f32 %v241, %v877
    %v879 = vpop.f32.mrb[0].mxu0
    %v880 = vadd.f32 %v245, %v879
    %v881 = vpop.f32.mrb[0].mxu0
    %v882 = vadd.f32 %v241, %v881
    %v883 = vpop.f32.mrb[0].mxu0
    %v884 = vadd.f32 %v245, %v883
    %885 = vmatprep.mubr.bf16.mxu0 %v151
    %886 = vmatmul.mubr.bf16.gmra.mrb[0].mxu0 %v150
    %v887 = vpop.f32.mrb[0].mxu0
    %v888 = vadd.f32 %v241, %v887
    %v889 = vpop.f32.mrb[0].mxu0
    %v890 = vadd.f32 %v245, %v889
    %v891 = vpop.f32.mrb[0].mxu0
    %v892 = vadd.f32 %v241, %v891
    %v893 = vpop.f32.mrb[0].mxu0
    %v894 = vadd.f32 %v245, %v893
    %895 = vmatprep.mubr.bf16.mxu0 %v153
    %896 = vmatmul.mubr.bf16.gmra.mrb[0].mxu0 %v152
    %v897 = vpop.f32.mrb[0].mxu0
    %v898 = vadd.f32 %v241, %v897
    %v899 = vpop.f32.mrb[0].mxu0
    %v900 = vadd.f32 %v245, %v899
    %v901 = vpop.f32.mrb[0].mxu0
    %v902 = vadd.f32 %v241, %v901
    %v903 = vpop.f32.mrb[0].mxu0
    %v904 = vadd.f32 %v245, %v903
    %905 = vmatprep.mubr.bf16.mxu0 %v155
    %906 = vmatmul.mubr.bf16.gmra.mrb[0].mxu0 %v154
    %v907 = vpop.f32.mrb[0].mxu0
    %v908 = vadd.f32 %v241, %v907
    %v909 = vpop.f32.mrb[0].mxu0
    %v910 = vadd.f32 %v245, %v909
    %v911 = vpop.f32.mrb[0].mxu0
    %v912 = vadd.f32 %v241, %v911
    %v913 = vpop.f32.mrb[0].mxu0
    %v914 = vadd.f32 %v245, %v913
    %915 = vmatprep.mubr.bf16.mxu0 %v157
    %916 = vmatmul.mubr.bf16.gmra.mrb[0].mxu0 %v156
    %v917 = vpop.f32.mrb[0].mxu0
    %v918 = vadd.f32 %v241, %v917
    %v919 = vpop.f32.mrb[0].mxu0
    %v920 = vadd.f32 %v245, %v919
    %v921 = vpop.f32.mrb[0].mxu0
    %v922 = vadd.f32 %v241, %v921
    %v923 = vpop.f32.mrb[0].mxu0
    %v924 = vadd.f32 %v245, %v923
    %925 = vmatprep.mubr.bf16.mxu0 %v159
    %926 = vmatmul.mubr.bf16.gmra.mrb[0].mxu0 %v158
    %v927 = vpop.f32.mrb[0].mxu0
    %v928 = vadd.f32 %v241, %v927
    %v929 = vpop.f32.mrb[0].mxu0
    %v930 = vadd.f32 %v245, %v929
    %v931 = vpop.f32.mrb[0].mxu0
    %v932 = vadd.f32 %v241, %v931
    %v933 = vpop.f32.mrb[0].mxu0
    %v934 = vadd.f32 %v245, %v933
    %935 = vmatprep.mubr.bf16.mxu0 %v161
    %936 = vmatmul.mubr.bf16.gmra.mrb[0].mxu0 %v160
    %v937 = vpop.f32.mrb[0].mxu0
    %v938 = vadd.f32 %v241, %v937
    %v939 = vpop.f32.mrb[0].mxu0
    %v940 = vadd.f32 %v245, %v939
    %v941 = vpop.f32.mrb[0].mxu0
    %v942 = vadd.f32 %v241, %v941
    %v943 = vpop.f32.mrb[0].mxu0
    %v944 = vadd.f32 %v245, %v943
    %945 = vmatprep.mubr.bf16.mxu0 %v163
    %946 = vmatmul.mubr.bf16.gmra.mrb[0].mxu0 %v162
    %v947 = vpop.f32.mrb[0].mxu0
    %v948 = vadd.f32 %v241, %v947
    %v949 = vpop.f32.mrb[0].mxu0
    %v950 = vadd.f32 %v245, %v949
    %v951 = vpop.f32.mrb[0].mxu0
    %v952 = vadd.f32 %v241, %v951
    %v953 = vpop.f32.mrb[0].mxu0
    %v954 = vadd.f32 %v245, %v953
    %955 = vdwg.mxu0
    %v956 = vadd.f32 %v605, %v607
    %v957 = vadd.f32 %v956, %v798
    %v958 = vadd.f32 %v957, %v800
    %959 = vadd.xlane.f32.xlu0 %v958
    %v960 = vpop.xlane.xlu0 %959
    %v961 = vadd.f32 %v609, %v611
    %v962 = vadd.f32 %v961, %v802
    %v963 = vadd.f32 %v962, %v804
    %964 = vadd.xlane.f32.xlu0 %v963
    %v965 = vpop.xlane.xlu0 %964
    %v966 = vadd.f32 %v615, %v617
    %v967 = vadd.f32 %v966, %v808
    %v968 = vadd.f32 %v967, %v810
    %969 = vadd.xlane.f32.xlu0 %v968
    %v970 = vpop.xlane.xlu0 %969
    %v971 = vadd.f32 %v619, %v621
    %v972 = vadd.f32 %v971, %v812
    %v973 = vadd.f32 %v972, %v814
    %974 = vadd.xlane.f32.xlu0 %v973
    %v975 = vpop.xlane.xlu0 %974
    %v976 = vadd.f32 %v625, %v627
    %v977 = vadd.f32 %v976, %v818
    %v978 = vadd.f32 %v977, %v820
    %979 = vadd.xlane.f32.xlu0 %v978
    %v980 = vpop.xlane.xlu0 %979
    %v981 = vadd.f32 %v629, %v631
    %v982 = vadd.f32 %v981, %v822
    %v983 = vadd.f32 %v982, %v824
    %984 = vadd.xlane.f32.xlu0 %v983
    %v985 = vpop.xlane.xlu0 %984
    %v986 = vadd.f32 %v635, %v637
    %v987 = vadd.f32 %v986, %v828
    %v988 = vadd.f32 %v987, %v830
    %989 = vadd.xlane.f32.xlu0 %v988
    %v990 = vpop.xlane.xlu0 %989
    %v991 = vadd.f32 %v639, %v641
    %v992 = vadd.f32 %v991, %v832
    %v993 = vadd.f32 %v992, %v834
    %994 = vadd.xlane.f32.xlu0 %v993
    %v995 = vpop.xlane.xlu0 %994
    %v996 = vadd.f32 %v645, %v647
    %v997 = vadd.f32 %v996, %v838
    %v998 = vadd.f32 %v997, %v840
    %999 = vadd.xlane.f32.xlu0 %v998
    %v1000 = vpop.xlane.xlu0 %999
    %v1001 = vadd.f32 %v649, %v651
    %v1002 = vadd.f32 %v1001, %v842
    %v1003 = vadd.f32 %v1002, %v844
    %1004 = vadd.xlane.f32.xlu0 %v1003
    %v1005 = vpop.xlane.xlu0 %1004
    %v1006 = vadd.f32 %v655, %v657
    %v1007 = vadd.f32 %v1006, %v848
    %v1008 = vadd.f32 %v1007, %v850
    %1009 = vadd.xlane.f32.xlu0 %v1008
    %v1010 = vpop.xlane.xlu0 %1009
    %v1011 = vadd.f32 %v659, %v661
    %v1012 = vadd.f32 %v1011, %v852
    %v1013 = vadd.f32 %v1012, %v854
    %1014 = vadd.xlane.f32.xlu0 %v1013
    %v1015 = vpop.xlane.xlu0 %1014
    %v1016 = vadd.f32 %v665, %v667
    %v1017 = vadd.f32 %v1016, %v858
    %v1018 = vadd.f32 %v1017, %v860
    %1019 = vadd.xlane.f32.xlu0 %v1018
    %v1020 = vpop.xlane.xlu0 %1019
    %v1021 = vadd.f32 %v669, %v671
    %v1022 = vadd.f32 %v1021, %v862
    %v1023 = vadd.f32 %v1022, %v864
    %1024 = vadd.xlane.f32.xlu0 %v1023
    %v1025 = vpop.xlane.xlu0 %1024
    %v1026 = vadd.f32 %v675, %v677
    %v1027 = vadd.f32 %v1026, %v868
    %v1028 = vadd.f32 %v1027, %v870
    %1029 = vadd.xlane.f32.xlu0 %v1028
    %v1030 = vpop.xlane.xlu0 %1029
    %v1031 = vadd.f32 %v679, %v681
    %v1032 = vadd.f32 %v1031, %v872
    %v1033 = vadd.f32 %v1032, %v874
    %1034 = vadd.xlane.f32.xlu0 %v1033
    %v1035 = vpop.xlane.xlu0 %1034
    %v1036 = vadd.f32 %v685, %v687
    %v1037 = vadd.f32 %v1036, %v878
    %v1038 = vadd.f32 %v1037, %v880
    %1039 = vadd.xlane.f32.xlu0 %v1038
    %v1040 = vpop.xlane.xlu0 %1039
    %v1041 = vadd.f32 %v689, %v691
    %v1042 = vadd.f32 %v1041, %v882
    %v1043 = vadd.f32 %v1042, %v884
    %1044 = vadd.xlane.f32.xlu0 %v1043
    %v1045 = vpop.xlane.xlu0 %1044
    %v1046 = vadd.f32 %v695, %v697
    %v1047 = vadd.f32 %v1046, %v888
    %v1048 = vadd.f32 %v1047, %v890
    %1049 = vadd.xlane.f32.xlu0 %v1048
    %v1050 = vpop.xlane.xlu0 %1049
    %v1051 = vadd.f32 %v699, %v701
    %v1052 = vadd.f32 %v1051, %v892
    %v1053 = vadd.f32 %v1052, %v894
    %1054 = vadd.xlane.f32.xlu0 %v1053
    %v1055 = vpop.xlane.xlu0 %1054
    %v1056 = vadd.f32 %v705, %v707
    %v1057 = vadd.f32 %v1056, %v898
    %v1058 = vadd.f32 %v1057, %v900
    %1059 = vadd.xlane.f32.xlu0 %v1058
    %v1060 = vpop.xlane.xlu0 %1059
    %v1061 = vadd.f32 %v709, %v711
    %v1062 = vadd.f32 %v1061, %v902
    %v1063 = vadd.f32 %v1062, %v904
    %1064 = vadd.xlane.f32.xlu0 %v1063
    %v1065 = vpop.xlane.xlu0 %1064
    %v1066 = vadd.f32 %v715, %v717
    %v1067 = vadd.f32 %v1066, %v908
    %v1068 = vadd.f32 %v1067, %v910
    %1069 = vadd.xlane.f32.xlu0 %v1068
    %v1070 = vpop.xlane.xlu0 %1069
    %v1071 = vadd.f32 %v719, %v721
    %v1072 = vadd.f32 %v1071, %v912
    %v1073 = vadd.f32 %v1072, %v914
    %1074 = vadd.xlane.f32.xlu0 %v1073
    %v1075 = vpop.xlane.xlu0 %1074
    %v1076 = vadd.f32 %v725, %v727
    %v1077 = vadd.f32 %v1076, %v918
    %v1078 = vadd.f32 %v1077, %v920
    %1079 = vadd.xlane.f32.xlu0 %v1078
    %v1080 = vpop.xlane.xlu0 %1079
    %v1081 = vadd.f32 %v729, %v731
    %v1082 = vadd.f32 %v1081, %v922
    %v1083 = vadd.f32 %v1082, %v924
    %1084 = vadd.xlane.f32.xlu0 %v1083
    %v1085 = vpop.xlane.xlu0 %1084
    %v1086 = vadd.f32 %v735, %v737
    %v1087 = vadd.f32 %v1086, %v928
    %v1088 = vadd.f32 %v1087, %v930
    %1089 = vadd.xlane.f32.xlu0 %v1088
    %v1090 = vpop.xlane.xlu0 %1089
    %v1091 = vadd.f32 %v739, %v741
    %v1092 = vadd.f32 %v1091, %v932
    %v1093 = vadd.f32 %v1092, %v934
    %1094 = vadd.xlane.f32.xlu0 %v1093
    %v1095 = vpop.xlane.xlu0 %1094
    %v1096 = vadd.f32 %v745, %v747
    %v1097 = vadd.f32 %v1096, %v938
    %v1098 = vadd.f32 %v1097, %v940
    %1099 = vadd.xlane.f32.xlu0 %v1098
    %v1100 = vpop.xlane.xlu0 %1099
    %v1101 = vadd.f32 %v749, %v751
    %v1102 = vadd.f32 %v1101, %v942
    %v1103 = vadd.f32 %v1102, %v944
    %1104 = vadd.xlane.f32.xlu0 %v1103
    %v1105 = vpop.xlane.xlu0 %1104
    %v1106 = vadd.f32 %v755, %v757
    %v1107 = vadd.f32 %v1106, %v948
    %v1108 = vadd.f32 %v1107, %v950
    %1109 = vadd.xlane.f32.xlu0 %v1108
    %v1110 = vpop.xlane.xlu0 %1109
    %v1111 = vadd.f32 %v759, %v761
    %v1112 = vadd.f32 %v1111, %v952
    %v1113 = vadd.f32 %v1112, %v954
    %1114 = vadd.xlane.f32.xlu0 %v1113
    %v1115 = vpop.xlane.xlu0 %1114
    %v1116 = vrcp.pop 512.0
    %v1117 = vmul.f32 %v960, %v1116
    %v1118 = vmul.f32 %v965, %v1116
    %v1119 = vmul.f32 %v970, %v1116
    %v1120 = vmul.f32 %v975, %v1116
    %v1121 = vmul.f32 %v980, %v1116
    %v1122 = vmul.f32 %v985, %v1116
    %v1123 = vmul.f32 %v990, %v1116
    %v1124 = vmul.f32 %v995, %v1116
    %v1125 = vmul.f32 %v1000, %v1116
    %v1126 = vmul.f32 %v1005, %v1116
    %v1127 = vmul.f32 %v1010, %v1116
    %v1128 = vmul.f32 %v1015, %v1116
    %v1129 = vmul.f32 %v1020, %v1116
    %v1130 = vmul.f32 %v1025, %v1116
    %v1131 = vmul.f32 %v1030, %v1116
    %v1132 = vmul.f32 %v1035, %v1116
    %v1133 = vmul.f32 %v1040, %v1116
    %v1134 = vmul.f32 %v1045, %v1116
    %v1135 = vmul.f32 %v1050, %v1116
    %v1136 = vmul.f32 %v1055, %v1116
    %v1137 = vmul.f32 %v1060, %v1116
    %v1138 = vmul.f32 %v1065, %v1116
    %v1139 = vmul.f32 %v1070, %v1116
    %v1140 = vmul.f32 %v1075, %v1116
    %v1141 = vmul.f32 %v1080, %v1116
    %v1142 = vmul.f32 %v1085, %v1116
    %v1143 = vmul.f32 %v1090, %v1116
    %v1144 = vmul.f32 %v1095, %v1116
    %v1145 = vmul.f32 %v1100, %v1116
    %v1146 = vmul.f32 %v1105, %v1116
    %v1147 = vmul.f32 %v1110, %v1116
    %v1148 = vmul.f32 %v1115, %v1116
    %v1149 = vmul.f32 %v605, %v605
    %v1150 = vmul.f32 %v607, %v607
    %v1151 = vmul.f32 %v798, %v798
    %v1152 = vmul.f32 %v800, %v800
    %v1153 = vmul.f32 %v609, %v609
    %v1154 = vmul.f32 %v611, %v611
    %v1155 = vmul.f32 %v802, %v802
    %v1156 = vmul.f32 %v804, %v804
    %v1157 = vmul.f32 %v615, %v615
    %v1158 = vmul.f32 %v617, %v617
    %v1159 = vmul.f32 %v808, %v808
    %v1160 = vmul.f32 %v810, %v810
    %v1161 = vmul.f32 %v619, %v619
    %v1162 = vmul.f32 %v621, %v621
    %v1163 = vmul.f32 %v812, %v812
    %v1164 = vmul.f32 %v814, %v814
    %v1165 = vmul.f32 %v625, %v625
    %v1166 = vmul.f32 %v627, %v627
    %v1167 = vmul.f32 %v818, %v818
    %v1168 = vmul.f32 %v820, %v820
    %v1169 = vmul.f32 %v629, %v629
    %v1170 = vmul.f32 %v631, %v631
    %v1171 = vmul.f32 %v822, %v822
    %v1172 = vmul.f32 %v824, %v824
    %v1173 = vmul.f32 %v635, %v635
    %v1174 = vmul.f32 %v637, %v637
    %v1175 = vmul.f32 %v828, %v828
    %v1176 = vmul.f32 %v830, %v830
    %v1177 = vmul.f32 %v639, %v639
    %v1178 = vmul.f32 %v641, %v641
    %v1179 = vmul.f32 %v832, %v832
    %v1180 = vmul.f32 %v834, %v834
    %v1181 = vmul.f32 %v645, %v645
    %v1182 = vmul.f32 %v647, %v647
    %v1183 = vmul.f32 %v838, %v838
    %v1184 = vmul.f32 %v840, %v840
    %v1185 = vmul.f32 %v649, %v649
    %v1186 = vmul.f32 %v651, %v651
    %v1187 = vmul.f32 %v842, %v842
    %v1188 = vmul.f32 %v844, %v844
    %v1189 = vmul.f32 %v655, %v655
    %v1190 = vmul.f32 %v657, %v657
    %v1191 = vmul.f32 %v848, %v848
    %v1192 = vmul.f32 %v850, %v850
    %v1193 = vmul.f32 %v659, %v659
    %v1194 = vmul.f32 %v661, %v661
    %v1195 = vmul.f32 %v852, %v852
    %v1196 = vmul.f32 %v854, %v854
    %v1197 = vmul.f32 %v665, %v665
    %v1198 = vmul.f32 %v667, %v667
    %v1199 = vmul.f32 %v858, %v858
    %v1200 = vmul.f32 %v860, %v860
    %v1201 = vmul.f32 %v669, %v669
    %v1202 = vmul.f32 %v671, %v671
    %v1203 = vmul.f32 %v862, %v862
    %v1204 = vmul.f32 %v864, %v864
    %v1205 = vmul.f32 %v675, %v675
    %v1206 = vmul.f32 %v677, %v677
    %v1207 = vmul.f32 %v868, %v868
    %v1208 = vmul.f32 %v870, %v870
    %v1209 = vmul.f32 %v679, %v679
    %v1210 = vmul.f32 %v681, %v681
    %v1211 = vmul.f32 %v872, %v872
    %v1212 = vmul.f32 %v874, %v874
    %v1213 = vmul.f32 %v685, %v685
    %v1214 = vmul.f32 %v687, %v687
    %v1215 = vmul.f32 %v878, %v878
    %v1216 = vmul.f32 %v880, %v880
    %v1217 = vmul.f32 %v689, %v689
    %v1218 = vmul.f32 %v691, %v691
    %v1219 = vmul.f32 %v882, %v882
    %v1220 = vmul.f32 %v884, %v884
    %v1221 = vmul.f32 %v695, %v695
    %v1222 = vmul.f32 %v697, %v697
    %v1223 = vmul.f32 %v888, %v888
    %v1224 = vmul.f32 %v890, %v890
    %v1225 = vmul.f32 %v699, %v699
    %v1226 = vmul.f32 %v701, %v701
    %v1227 = vmul.f32 %v892, %v892
    %v1228 = vmul.f32 %v894, %v894
    %v1229 = vmul.f32 %v705, %v705
    %v1230 = vmul.f32 %v707, %v707
    %v1231 = vmul.f32 %v898, %v898
    %v1232 = vmul.f32 %v900, %v900
    %v1233 = vmul.f32 %v709, %v709
    %v1234 = vmul.f32 %v711, %v711
    %v1235 = vmul.f32 %v902, %v902
    %v1236 = vmul.f32 %v904, %v904
    %v1237 = vmul.f32 %v715, %v715
    %v1238 = vmul.f32 %v717, %v717
    %v1239 = vmul.f32 %v908, %v908
    %v1240 = vmul.f32 %v910, %v910
    %v1241 = vmul.f32 %v719, %v719
    %v1242 = vmul.f32 %v721, %v721
    %v1243 = vmul.f32 %v912, %v912
    %v1244 = vmul.f32 %v914, %v914
    %v1245 = vmul.f32 %v725, %v725
    %v1246 = vmul.f32 %v727, %v727
    %v1247 = vmul.f32 %v918, %v918
    %v1248 = vmul.f32 %v920, %v920
    %v1249 = vmul.f32 %v729, %v729
    %v1250 = vmul.f32 %v731, %v731
    %v1251 = vmul.f32 %v922, %v922
    %v1252 = vmul.f32 %v924, %v924
    %v1253 = vmul.f32 %v735, %v735
    %v1254 = vmul.f32 %v737, %v737
    %v1255 = vmul.f32 %v928, %v928
    %v1256 = vmul.f32 %v930, %v930
    %v1257 = vmul.f32 %v739, %v739
    %v1258 = vmul.f32 %v741, %v741
    %v1259 = vmul.f32 %v932, %v932
    %v1260 = vmul.f32 %v934, %v934
    %v1261 = vmul.f32 %v745, %v745
    %v1262 = vmul.f32 %v747, %v747
    %v1263 = vmul.f32 %v938, %v938
    %v1264 = vmul.f32 %v940, %v940
    %v1265 = vmul.f32 %v749, %v749
    %v1266 = vmul.f32 %v751, %v751
    %v1267 = vmul.f32 %v942, %v942
    %v1268 = vmul.f32 %v944, %v944
    %v1269 = vmul.f32 %v755, %v755
    %v1270 = vmul.f32 %v757, %v757
    %v1271 = vmul.f32 %v948, %v948
    %v1272 = vmul.f32 %v950, %v950
    %v1273 = vmul.f32 %v759, %v759
    %v1274 = vmul.f32 %v761, %v761
    %v1275 = vmul.f32 %v952, %v952
    %v1276 = vmul.f32 %v954, %v954
    %v1277 = vadd.f32 %v1149, %v1150
    %v1278 = vadd.f32 %v1277, %v1151
    %v1279 = vadd.f32 %v1278, %v1152
    %1280 = vadd.xlane.f32.xlu0 %v1279
    %v1281 = vpop.xlane.xlu0 %1280
    %v1282 = vadd.f32 %v1153, %v1154
    %v1283 = vadd.f32 %v1282, %v1155
    %v1284 = vadd.f32 %v1283, %v1156
    %1285 = vadd.xlane.f32.xlu0 %v1284
    %v1286 = vpop.xlane.xlu0 %1285
    %v1287 = vadd.f32 %v1157, %v1158
    %v1288 = vadd.f32 %v1287, %v1159
    %v1289 = vadd.f32 %v1288, %v1160
    %1290 = vadd.xlane.f32.xlu0 %v1289
    %v1291 = vpop.xlane.xlu0 %1290
    %v1292 = vadd.f32 %v1161, %v1162
    %v1293 = vadd.f32 %v1292, %v1163
    %v1294 = vadd.f32 %v1293, %v1164
    %1295 = vadd.xlane.f32.xlu0 %v1294
    %v1296 = vpop.xlane.xlu0 %1295
    %v1297 = vadd.f32 %v1165, %v1166
    %v1298 = vadd.f32 %v1297, %v1167
    %v1299 = vadd.f32 %v1298, %v1168
    %1300 = vadd.xlane.f32.xlu0 %v1299
    %v1301 = vpop.xlane.xlu0 %1300
    %v1302 = vadd.f32 %v1169, %v1170
    %v1303 = vadd.f32 %v1302, %v1171
    %v1304 = vadd.f32 %v1303, %v1172
    %1305 = vadd.xlane.f32.xlu0 %v1304
    %v1306 = vpop.xlane.xlu0 %1305
    %v1307 = vadd.f32 %v1173, %v1174
    %v1308 = vadd.f32 %v1307, %v1175
    %v1309 = vadd.f32 %v1308, %v1176
    %1310 = vadd.xlane.f32.xlu0 %v1309
    %v1311 = vpop.xlane.xlu0 %1310
    %v1312 = vadd.f32 %v1177, %v1178
    %v1313 = vadd.f32 %v1312, %v1179
    %v1314 = vadd.f32 %v1313, %v1180
    %1315 = vadd.xlane.f32.xlu0 %v1314
    %v1316 = vpop.xlane.xlu0 %1315
    %v1317 = vadd.f32 %v1181, %v1182
    %v1318 = vadd.f32 %v1317, %v1183
    %v1319 = vadd.f32 %v1318, %v1184
    %1320 = vadd.xlane.f32.xlu0 %v1319
    %v1321 = vpop.xlane.xlu0 %1320
    %v1322 = vadd.f32 %v1185, %v1186
    %v1323 = vadd.f32 %v1322, %v1187
    %v1324 = vadd.f32 %v1323, %v1188
    %1325 = vadd.xlane.f32.xlu0 %v1324
    %v1326 = vpop.xlane.xlu0 %1325
    %v1327 = vadd.f32 %v1189, %v1190
    %v1328 = vadd.f32 %v1327, %v1191
    %v1329 = vadd.f32 %v1328, %v1192
    %1330 = vadd.xlane.f32.xlu0 %v1329
    %v1331 = vpop.xlane.xlu0 %1330
    %v1332 = vadd.f32 %v1193, %v1194
    %v1333 = vadd.f32 %v1332, %v1195
    %v1334 = vadd.f32 %v1333, %v1196
    %1335 = vadd.xlane.f32.xlu0 %v1334
    %v1336 = vpop.xlane.xlu0 %1335
    %v1337 = vadd.f32 %v1197, %v1198
    %v1338 = vadd.f32 %v1337, %v1199
    %v1339 = vadd.f32 %v1338, %v1200
    %1340 = vadd.xlane.f32.xlu0 %v1339
    %v1341 = vpop.xlane.xlu0 %1340
    %v1342 = vadd.f32 %v1201, %v1202
    %v1343 = vadd.f32 %v1342, %v1203
    %v1344 = vadd.f32 %v1343, %v1204
    %1345 = vadd.xlane.f32.xlu0 %v1344
    %v1346 = vpop.xlane.xlu0 %1345
    %v1347 = vadd.f32 %v1205, %v1206
    %v1348 = vadd.f32 %v1347, %v1207
    %v1349 = vadd.f32 %v1348, %v1208
    %1350 = vadd.xlane.f32.xlu0 %v1349
    %v1351 = vpop.xlane.xlu0 %1350
    %v1352 = vadd.f32 %v1209, %v1210
    %v1353 = vadd.f32 %v1352, %v1211
    %v1354 = vadd.f32 %v1353, %v1212
    %1355 = vadd.xlane.f32.xlu0 %v1354
    %v1356 = vpop.xlane.xlu0 %1355
    %v1357 = vadd.f32 %v1213, %v1214
    %v1358 = vadd.f32 %v1357, %v1215
    %v1359 = vadd.f32 %v1358, %v1216
    %1360 = vadd.xlane.f32.xlu0 %v1359
    %v1361 = vpop.xlane.xlu0 %1360
    %v1362 = vadd.f32 %v1217, %v1218
    %v1363 = vadd.f32 %v1362, %v1219
    %v1364 = vadd.f32 %v1363, %v1220
    %1365 = vadd.xlane.f32.xlu0 %v1364
    %v1366 = vpop.xlane.xlu0 %1365
    %v1367 = vadd.f32 %v1221, %v1222
    %v1368 = vadd.f32 %v1367, %v1223
    %v1369 = vadd.f32 %v1368, %v1224
    %1370 = vadd.xlane.f32.xlu0 %v1369
    %v1371 = vpop.xlane.xlu0 %1370
    %v1372 = vadd.f32 %v1225, %v1226
    %v1373 = vadd.f32 %v1372, %v1227
    %v1374 = vadd.f32 %v1373, %v1228
    %1375 = vadd.xlane.f32.xlu0 %v1374
    %v1376 = vpop.xlane.xlu0 %1375
    %v1377 = vadd.f32 %v1229, %v1230
    %v1378 = vadd.f32 %v1377, %v1231
    %v1379 = vadd.f32 %v1378, %v1232
    %1380 = vadd.xlane.f32.xlu0 %v1379
    %v1381 = vpop.xlane.xlu0 %1380
    %v1382 = vadd.f32 %v1233, %v1234
    %v1383 = vadd.f32 %v1382, %v1235
    %v1384 = vadd.f32 %v1383, %v1236
    %1385 = vadd.xlane.f32.xlu0 %v1384
    %v1386 = vpop.xlane.xlu0 %1385
    %v1387 = vadd.f32 %v1237, %v1238
    %v1388 = vadd.f32 %v1387, %v1239
    %v1389 = vadd.f32 %v1388, %v1240
    %1390 = vadd.xlane.f32.xlu0 %v1389
    %v1391 = vpop.xlane.xlu0 %1390
    %v1392 = vadd.f32 %v1241, %v1242
    %v1393 = vadd.f32 %v1392, %v1243
    %v1394 = vadd.f32 %v1393, %v1244
    %1395 = vadd.xlane.f32.xlu0 %v1394
    %v1396 = vpop.xlane.xlu0 %1395
    %v1397 = vadd.f32 %v1245, %v1246
    %v1398 = vadd.f32 %v1397, %v1247
    %v1399 = vadd.f32 %v1398, %v1248
    %1400 = vadd.xlane.f32.xlu0 %v1399
    %v1401 = vpop.xlane.xlu0 %1400
    %v1402 = vadd.f32 %v1249, %v1250
    %v1403 = vadd.f32 %v1402, %v1251
    %v1404 = vadd.f32 %v1403, %v1252
    %1405 = vadd.xlane.f32.xlu0 %v1404
    %v1406 = vpop.xlane.xlu0 %1405
    %v1407 = vadd.f32 %v1253, %v1254
    %v1408 = vadd.f32 %v1407, %v1255
    %v1409 = vadd.f32 %v1408, %v1256
    %1410 = vadd.xlane.f32.xlu0 %v1409
    %v1411 = vpop.xlane.xlu0 %1410
    %v1412 = vadd.f32 %v1257, %v1258
    %v1413 = vadd.f32 %v1412, %v1259
    %v1414 = vadd.f32 %v1413, %v1260
    %1415 = vadd.xlane.f32.xlu0 %v1414
    %v1416 = vpop.xlane.xlu0 %1415
    %v1417 = vadd.f32 %v1261, %v1262
    %v1418 = vadd.f32 %v1417, %v1263
    %v1419 = vadd.f32 %v1418, %v1264
    %1420 = vadd.xlane.f32.xlu0 %v1419
    %v1421 = vpop.xlane.xlu0 %1420
    %v1422 = vadd.f32 %v1265, %v1266
    %v1423 = vadd.f32 %v1422, %v1267
    %v1424 = vadd.f32 %v1423, %v1268
    %1425 = vadd.xlane.f32.xlu0 %v1424
    %v1426 = vpop.xlane.xlu0 %1425
    %v1427 = vadd.f32 %v1269, %v1270
    %v1428 = vadd.f32 %v1427, %v1271
    %v1429 = vadd.f32 %v1428, %v1272
    %1430 = vadd.xlane.f32.xlu0 %v1429
    %v1431 = vpop.xlane.xlu0 %1430
    %v1432 = vadd.f32 %v1273, %v1274
    %v1433 = vadd.f32 %v1432, %v1275
    %v1434 = vadd.f32 %v1433, %v1276
    %1435 = vadd.xlane.f32.xlu0 %v1434
    %v1436 = vpop.xlane.xlu0 %1435
    %v1437 = vmul.f32 %v1281, %v1116
    %v1438 = vmul.f32 %v1286, %v1116
    %v1439 = vmul.f32 %v1291, %v1116
    %v1440 = vmul.f32 %v1296, %v1116
    %v1441 = vmul.f32 %v1301, %v1116
    %v1442 = vmul.f32 %v1306, %v1116
    %v1443 = vmul.f32 %v1311, %v1116
    %v1444 = vmul.f32 %v1316, %v1116
    %v1445 = vmul.f32 %v1321, %v1116
    %v1446 = vmul.f32 %v1326, %v1116
    %v1447 = vmul.f32 %v1331, %v1116
    %v1448 = vmul.f32 %v1336, %v1116
    %v1449 = vmul.f32 %v1341, %v1116
    %v1450 = vmul.f32 %v1346, %v1116
    %v1451 = vmul.f32 %v1351, %v1116
    %v1452 = vmul.f32 %v1356, %v1116
    %v1453 = vmul.f32 %v1361, %v1116
    %v1454 = vmul.f32 %v1366, %v1116
    %v1455 = vmul.f32 %v1371, %v1116
    %v1456 = vmul.f32 %v1376, %v1116
    %v1457 = vmul.f32 %v1381, %v1116
    %v1458 = vmul.f32 %v1386, %v1116
    %v1459 = vmul.f32 %v1391, %v1116
    %v1460 = vmul.f32 %v1396, %v1116
    %v1461 = vmul.f32 %v1401, %v1116
    %v1462 = vmul.f32 %v1406, %v1116
    %v1463 = vmul.f32 %v1411, %v1116
    %v1464 = vmul.f32 %v1416, %v1116
    %v1465 = vmul.f32 %v1421, %v1116
    %v1466 = vmul.f32 %v1426, %v1116
    %v1467 = vmul.f32 %v1431, %v1116
    %v1468 = vmul.f32 %v1436, %v1116
    %v1469 = vmul.f32 %v1117, %v1117
    %v1470 = vmul.f32 %v1118, %v1118
    %v1471 = vmul.f32 %v1119, %v1119
    %v1472 = vmul.f32 %v1120, %v1120
    %v1473 = vmul.f32 %v1121, %v1121
    %v1474 = vmul.f32 %v1122, %v1122
    %v1475 = vmul.f32 %v1123, %v1123
    %v1476 = vmul.f32 %v1124, %v1124
    %v1477 = vmul.f32 %v1125, %v1125
    %v1478 = vmul.f32 %v1126, %v1126
    %v1479 = vmul.f32 %v1127, %v1127
    %v1480 = vmul.f32 %v1128, %v1128
    %v1481 = vmul.f32 %v1129, %v1129
    %v1482 = vmul.f32 %v1130, %v1130
    %v1483 = vmul.f32 %v1131, %v1131
    %v1484 = vmul.f32 %v1132, %v1132
    %v1485 = vmul.f32 %v1133, %v1133
    %v1486 = vmul.f32 %v1134, %v1134
    %v1487 = vmul.f32 %v1135, %v1135
    %v1488 = vmul.f32 %v1136, %v1136
    %v1489 = vmul.f32 %v1137, %v1137
    %v1490 = vmul.f32 %v1138, %v1138
    %v1491 = vmul.f32 %v1139, %v1139
    %v1492 = vmul.f32 %v1140, %v1140
    %v1493 = vmul.f32 %v1141, %v1141
    %v1494 = vmul.f32 %v1142, %v1142
    %v1495 = vmul.f32 %v1143, %v1143
    %v1496 = vmul.f32 %v1144, %v1144
    %v1497 = vmul.f32 %v1145, %v1145
    %v1498 = vmul.f32 %v1146, %v1146
    %v1499 = vmul.f32 %v1147, %v1147
    %v1500 = vmul.f32 %v1148, %v1148
    %v1501 = vsub.f32 %v1437, %v1469
    %v1502 = vsub.f32 %v1438, %v1470
    %v1503 = vsub.f32 %v1439, %v1471
    %v1504 = vsub.f32 %v1440, %v1472
    %v1505 = vsub.f32 %v1441, %v1473
    %v1506 = vsub.f32 %v1442, %v1474
    %v1507 = vsub.f32 %v1443, %v1475
    %v1508 = vsub.f32 %v1444, %v1476
    %v1509 = vsub.f32 %v1445, %v1477
    %v1510 = vsub.f32 %v1446, %v1478
    %v1511 = vsub.f32 %v1447, %v1479
    %v1512 = vsub.f32 %v1448, %v1480
    %v1513 = vsub.f32 %v1449, %v1481
    %v1514 = vsub.f32 %v1450, %v1482
    %v1515 = vsub.f32 %v1451, %v1483
    %v1516 = vsub.f32 %v1452, %v1484
    %v1517 = vsub.f32 %v1453, %v1485
    %v1518 = vsub.f32 %v1454, %v1486
    %v1519 = vsub.f32 %v1455, %v1487
    %v1520 = vsub.f32 %v1456, %v1488
    %v1521 = vsub.f32 %v1457, %v1489
    %v1522 = vsub.f32 %v1458, %v1490
    %v1523 = vsub.f32 %v1459, %v1491
    %v1524 = vsub.f32 %v1460, %v1492
    %v1525 = vsub.f32 %v1461, %v1493
    %v1526 = vsub.f32 %v1462, %v1494
    %v1527 = vsub.f32 %v1463, %v1495
    %v1528 = vsub.f32 %v1464, %v1496
    %v1529 = vsub.f32 %v1465, %v1497
    %v1530 = vsub.f32 %v1466, %v1498
    %v1531 = vsub.f32 %v1467, %v1499
    %v1532 = vsub.f32 %v1468, %v1500
    %v1533 = vmax.f32 %v1501, 0.0
    %v1534 = vmax.f32 %v1502, 0.0
    %v1535 = vmax.f32 %v1503, 0.0
    %v1536 = vmax.f32 %v1504, 0.0
    %v1537 = vmax.f32 %v1505, 0.0
    %v1538 = vmax.f32 %v1506, 0.0
    %v1539 = vmax.f32 %v1507, 0.0
    %v1540 = vmax.f32 %v1508, 0.0
    %v1541 = vmax.f32 %v1509, 0.0
    %v1542 = vmax.f32 %v1510, 0.0
    %v1543 = vmax.f32 %v1511, 0.0
    %v1544 = vmax.f32 %v1512, 0.0
    %v1545 = vmax.f32 %v1513, 0.0
    %v1546 = vmax.f32 %v1514, 0.0
    %v1547 = vmax.f32 %v1515, 0.0
    %v1548 = vmax.f32 %v1516, 0.0
    %v1549 = vmax.f32 %v1517, 0.0
    %v1550 = vmax.f32 %v1518, 0.0
    %v1551 = vmax.f32 %v1519, 0.0
    %v1552 = vmax.f32 %v1520, 0.0
    %v1553 = vmax.f32 %v1521, 0.0
    %v1554 = vmax.f32 %v1522, 0.0
    %v1555 = vmax.f32 %v1523, 0.0
    %v1556 = vmax.f32 %v1524, 0.0
    %v1557 = vmax.f32 %v1525, 0.0
    %v1558 = vmax.f32 %v1526, 0.0
    %v1559 = vmax.f32 %v1527, 0.0
    %v1560 = vmax.f32 %v1528, 0.0
    %v1561 = vmax.f32 %v1529, 0.0
    %v1562 = vmax.f32 %v1530, 0.0
    %v1563 = vmax.f32 %v1531, 0.0
    %v1564 = vmax.f32 %v1532, 0.0
    %v1565 = vadd.f32 %v1533, 1e-05
    %v1566 = vadd.f32 %v1534, 1e-05
    %v1567 = vadd.f32 %v1535, 1e-05
    %v1568 = vadd.f32 %v1536, 1e-05
    %v1569 = vadd.f32 %v1537, 1e-05
    %v1570 = vadd.f32 %v1538, 1e-05
    %v1571 = vadd.f32 %v1539, 1e-05
    %v1572 = vadd.f32 %v1540, 1e-05
    %v1573 = vadd.f32 %v1541, 1e-05
    %v1574 = vadd.f32 %v1542, 1e-05
    %v1575 = vadd.f32 %v1543, 1e-05
    %v1576 = vadd.f32 %v1544, 1e-05
    %v1577 = vadd.f32 %v1545, 1e-05
    %v1578 = vadd.f32 %v1546, 1e-05
    %v1579 = vadd.f32 %v1547, 1e-05
    %v1580 = vadd.f32 %v1548, 1e-05
    %v1581 = vadd.f32 %v1549, 1e-05
    %v1582 = vadd.f32 %v1550, 1e-05
    %v1583 = vadd.f32 %v1551, 1e-05
    %v1584 = vadd.f32 %v1552, 1e-05
    %v1585 = vadd.f32 %v1553, 1e-05
    %v1586 = vadd.f32 %v1554, 1e-05
    %v1587 = vadd.f32 %v1555, 1e-05
    %v1588 = vadd.f32 %v1556, 1e-05
    %v1589 = vadd.f32 %v1557, 1e-05
    %v1590 = vadd.f32 %v1558, 1e-05
    %v1591 = vadd.f32 %v1559, 1e-05
    %v1592 = vadd.f32 %v1560, 1e-05
    %v1593 = vadd.f32 %v1561, 1e-05
    %v1594 = vadd.f32 %v1562, 1e-05
    %v1595 = vadd.f32 %v1563, 1e-05
    %v1596 = vadd.f32 %v1564, 1e-05
    %v1597 = vrsqrt.pop %v1565
    %v1598 = vrsqrt.pop %v1566
    %v1599 = vrsqrt.pop %v1567
    %v1600 = vrsqrt.pop %v1568
    %v1601 = vrsqrt.pop %v1569
    %v1602 = vrsqrt.pop %v1570
    %v1603 = vrsqrt.pop %v1571
    %v1604 = vrsqrt.pop %v1572
    %v1605 = vrsqrt.pop %v1573
    %v1606 = vrsqrt.pop %v1574
    %v1607 = vrsqrt.pop %v1575
    %v1608 = vrsqrt.pop %v1576
    %v1609 = vrsqrt.pop %v1577
    %v1610 = vrsqrt.pop %v1578
    %v1611 = vrsqrt.pop %v1579
    %v1612 = vrsqrt.pop %v1580
    %v1613 = vrsqrt.pop %v1581
    %v1614 = vrsqrt.pop %v1582
    %v1615 = vrsqrt.pop %v1583
    %v1616 = vrsqrt.pop %v1584
    %v1617 = vrsqrt.pop %v1585
    %v1618 = vrsqrt.pop %v1586
    %v1619 = vrsqrt.pop %v1587
    %v1620 = vrsqrt.pop %v1588
    %v1621 = vrsqrt.pop %v1589
    %v1622 = vrsqrt.pop %v1590
    %v1623 = vrsqrt.pop %v1591
    %v1624 = vrsqrt.pop %v1592
    %v1625 = vrsqrt.pop %v1593
    %v1626 = vrsqrt.pop %v1594
    %v1627 = vrsqrt.pop %v1595
    %v1628 = vrsqrt.pop %v1596
    %v1629 = vsub.f32 %v605, %v1117
    %v1630 = vsub.f32 %v607, %v1117
    %v1631 = vsub.f32 %v798, %v1117
    %v1632 = vsub.f32 %v800, %v1117
    %v1633 = vsub.f32 %v609, %v1118
    %v1634 = vsub.f32 %v611, %v1118
    %v1635 = vsub.f32 %v802, %v1118
    %v1636 = vsub.f32 %v804, %v1118
    %v1637 = vsub.f32 %v615, %v1119
    %v1638 = vsub.f32 %v617, %v1119
    %v1639 = vsub.f32 %v808, %v1119
    %v1640 = vsub.f32 %v810, %v1119
    %v1641 = vsub.f32 %v619, %v1120
    %v1642 = vsub.f32 %v621, %v1120
    %v1643 = vsub.f32 %v812, %v1120
    %v1644 = vsub.f32 %v814, %v1120
    %v1645 = vsub.f32 %v625, %v1121
    %v1646 = vsub.f32 %v627, %v1121
    %v1647 = vsub.f32 %v818, %v1121
    %v1648 = vsub.f32 %v820, %v1121
    %v1649 = vsub.f32 %v629, %v1122
    %v1650 = vsub.f32 %v631, %v1122
    %v1651 = vsub.f32 %v822, %v1122
    %v1652 = vsub.f32 %v824, %v1122
    %v1653 = vsub.f32 %v635, %v1123
    %v1654 = vsub.f32 %v637, %v1123
    %v1655 = vsub.f32 %v828, %v1123
    %v1656 = vsub.f32 %v830, %v1123
    %v1657 = vsub.f32 %v639, %v1124
    %v1658 = vsub.f32 %v641, %v1124
    %v1659 = vsub.f32 %v832, %v1124
    %v1660 = vsub.f32 %v834, %v1124
    %v1661 = vsub.f32 %v645, %v1125
    %v1662 = vsub.f32 %v647, %v1125
    %v1663 = vsub.f32 %v838, %v1125
    %v1664 = vsub.f32 %v840, %v1125
    %v1665 = vsub.f32 %v649, %v1126
    %v1666 = vsub.f32 %v651, %v1126
    %v1667 = vsub.f32 %v842, %v1126
    %v1668 = vsub.f32 %v844, %v1126
    %v1669 = vsub.f32 %v655, %v1127
    %v1670 = vsub.f32 %v657, %v1127
    %v1671 = vsub.f32 %v848, %v1127
    %v1672 = vsub.f32 %v850, %v1127
    %v1673 = vsub.f32 %v659, %v1128
    %v1674 = vsub.f32 %v661, %v1128
    %v1675 = vsub.f32 %v852, %v1128
    %v1676 = vsub.f32 %v854, %v1128
    %v1677 = vsub.f32 %v665, %v1129
    %v1678 = vsub.f32 %v667, %v1129
    %v1679 = vsub.f32 %v858, %v1129
    %v1680 = vsub.f32 %v860, %v1129
    %v1681 = vsub.f32 %v669, %v1130
    %v1682 = vsub.f32 %v671, %v1130
    %v1683 = vsub.f32 %v862, %v1130
    %v1684 = vsub.f32 %v864, %v1130
    %v1685 = vsub.f32 %v675, %v1131
    %v1686 = vsub.f32 %v677, %v1131
    %v1687 = vsub.f32 %v868, %v1131
    %v1688 = vsub.f32 %v870, %v1131
    %v1689 = vsub.f32 %v679, %v1132
    %v1690 = vsub.f32 %v681, %v1132
    %v1691 = vsub.f32 %v872, %v1132
    %v1692 = vsub.f32 %v874, %v1132
    %v1693 = vsub.f32 %v685, %v1133
    %v1694 = vsub.f32 %v687, %v1133
    %v1695 = vsub.f32 %v878, %v1133
    %v1696 = vsub.f32 %v880, %v1133
    %v1697 = vsub.f32 %v689, %v1134
    %v1698 = vsub.f32 %v691, %v1134
    %v1699 = vsub.f32 %v882, %v1134
    %v1700 = vsub.f32 %v884, %v1134
    %v1701 = vsub.f32 %v695, %v1135
    %v1702 = vsub.f32 %v697, %v1135
    %v1703 = vsub.f32 %v888, %v1135
    %v1704 = vsub.f32 %v890, %v1135
    %v1705 = vsub.f32 %v699, %v1136
    %v1706 = vsub.f32 %v701, %v1136
    %v1707 = vsub.f32 %v892, %v1136
    %v1708 = vsub.f32 %v894, %v1136
    %v1709 = vsub.f32 %v705, %v1137
    %v1710 = vsub.f32 %v707, %v1137
    %v1711 = vsub.f32 %v898, %v1137
    %v1712 = vsub.f32 %v900, %v1137
    %v1713 = vsub.f32 %v709, %v1138
    %v1714 = vsub.f32 %v711, %v1138
    %v1715 = vsub.f32 %v902, %v1138
    %v1716 = vsub.f32 %v904, %v1138
    %v1717 = vsub.f32 %v715, %v1139
    %v1718 = vsub.f32 %v717, %v1139
    %v1719 = vsub.f32 %v908, %v1139
    %v1720 = vsub.f32 %v910, %v1139
    %v1721 = vsub.f32 %v719, %v1140
    %v1722 = vsub.f32 %v721, %v1140
    %v1723 = vsub.f32 %v912, %v1140
    %v1724 = vsub.f32 %v914, %v1140
    %v1725 = vsub.f32 %v725, %v1141
    %v1726 = vsub.f32 %v727, %v1141
    %v1727 = vsub.f32 %v918, %v1141
    %v1728 = vsub.f32 %v920, %v1141
    %v1729 = vsub.f32 %v729, %v1142
    %v1730 = vsub.f32 %v731, %v1142
    %v1731 = vsub.f32 %v922, %v1142
    %v1732 = vsub.f32 %v924, %v1142
    %v1733 = vsub.f32 %v735, %v1143
    %v1734 = vsub.f32 %v737, %v1143
    %v1735 = vsub.f32 %v928, %v1143
    %v1736 = vsub.f32 %v930, %v1143
    %v1737 = vsub.f32 %v739, %v1144
    %v1738 = vsub.f32 %v741, %v1144
    %v1739 = vsub.f32 %v932, %v1144
    %v1740 = vsub.f32 %v934, %v1144
    %v1741 = vsub.f32 %v745, %v1145
    %v1742 = vsub.f32 %v747, %v1145
    %v1743 = vsub.f32 %v938, %v1145
    %v1744 = vsub.f32 %v940, %v1145
    %v1745 = vsub.f32 %v749, %v1146
    %v1746 = vsub.f32 %v751, %v1146
    %v1747 = vsub.f32 %v942, %v1146
    %v1748 = vsub.f32 %v944, %v1146
    %v1749 = vsub.f32 %v755, %v1147
    %v1750 = vsub.f32 %v757, %v1147
    %v1751 = vsub.f32 %v948, %v1147
    %v1752 = vsub.f32 %v950, %v1147
    %v1753 = vsub.f32 %v759, %v1148
    %v1754 = vsub.f32 %v761, %v1148
    %v1755 = vsub.f32 %v952, %v1148
    %v1756 = vsub.f32 %v954, %v1148
    %v1757 = vmul.f32 %v1629, %v1597
    %v1758 = vmul.f32 %v1630, %v1597
    %v1759 = vmul.f32 %v1631, %v1597
    %v1760 = vmul.f32 %v1632, %v1597
    %v1761 = vmul.f32 %v1633, %v1598
    %v1762 = vmul.f32 %v1634, %v1598
    %v1763 = vmul.f32 %v1635, %v1598
    %v1764 = vmul.f32 %v1636, %v1598
    %v1765 = vmul.f32 %v1637, %v1599
    %v1766 = vmul.f32 %v1638, %v1599
    %v1767 = vmul.f32 %v1639, %v1599
    %v1768 = vmul.f32 %v1640, %v1599
    %v1769 = vmul.f32 %v1641, %v1600
    %v1770 = vmul.f32 %v1642, %v1600
    %v1771 = vmul.f32 %v1643, %v1600
    %v1772 = vmul.f32 %v1644, %v1600
    %v1773 = vmul.f32 %v1645, %v1601
    %v1774 = vmul.f32 %v1646, %v1601
    %v1775 = vmul.f32 %v1647, %v1601
    %v1776 = vmul.f32 %v1648, %v1601
    %v1777 = vmul.f32 %v1649, %v1602
    %v1778 = vmul.f32 %v1650, %v1602
    %v1779 = vmul.f32 %v1651, %v1602
    %v1780 = vmul.f32 %v1652, %v1602
    %v1781 = vmul.f32 %v1653, %v1603
    %v1782 = vmul.f32 %v1654, %v1603
    %v1783 = vmul.f32 %v1655, %v1603
    %v1784 = vmul.f32 %v1656, %v1603
    %v1785 = vmul.f32 %v1657, %v1604
    %v1786 = vmul.f32 %v1658, %v1604
    %v1787 = vmul.f32 %v1659, %v1604
    %v1788 = vmul.f32 %v1660, %v1604
    %v1789 = vmul.f32 %v1661, %v1605
    %v1790 = vmul.f32 %v1662, %v1605
    %v1791 = vmul.f32 %v1663, %v1605
    %v1792 = vmul.f32 %v1664, %v1605
    %v1793 = vmul.f32 %v1665, %v1606
    %v1794 = vmul.f32 %v1666, %v1606
    %v1795 = vmul.f32 %v1667, %v1606
    %v1796 = vmul.f32 %v1668, %v1606
    %v1797 = vmul.f32 %v1669, %v1607
    %v1798 = vmul.f32 %v1670, %v1607
    %v1799 = vmul.f32 %v1671, %v1607
    %v1800 = vmul.f32 %v1672, %v1607
    %v1801 = vmul.f32 %v1673, %v1608
    %v1802 = vmul.f32 %v1674, %v1608
    %v1803 = vmul.f32 %v1675, %v1608
    %v1804 = vmul.f32 %v1676, %v1608
    %v1805 = vmul.f32 %v1677, %v1609
    %v1806 = vmul.f32 %v1678, %v1609
    %v1807 = vmul.f32 %v1679, %v1609
    %v1808 = vmul.f32 %v1680, %v1609
    %v1809 = vmul.f32 %v1681, %v1610
    %v1810 = vmul.f32 %v1682, %v1610
    %v1811 = vmul.f32 %v1683, %v1610
    %v1812 = vmul.f32 %v1684, %v1610
    %v1813 = vmul.f32 %v1685, %v1611
    %v1814 = vmul.f32 %v1686, %v1611
    %v1815 = vmul.f32 %v1687, %v1611
    %v1816 = vmul.f32 %v1688, %v1611
    %v1817 = vmul.f32 %v1689, %v1612
    %v1818 = vmul.f32 %v1690, %v1612
    %v1819 = vmul.f32 %v1691, %v1612
    %v1820 = vmul.f32 %v1692, %v1612
    %v1821 = vmul.f32 %v1693, %v1613
    %v1822 = vmul.f32 %v1694, %v1613
    %v1823 = vmul.f32 %v1695, %v1613
    %v1824 = vmul.f32 %v1696, %v1613
    %v1825 = vmul.f32 %v1697, %v1614
    %v1826 = vmul.f32 %v1698, %v1614
    %v1827 = vmul.f32 %v1699, %v1614
    %v1828 = vmul.f32 %v1700, %v1614
    %v1829 = vmul.f32 %v1701, %v1615
    %v1830 = vmul.f32 %v1702, %v1615
    %v1831 = vmul.f32 %v1703, %v1615
    %v1832 = vmul.f32 %v1704, %v1615
    %v1833 = vmul.f32 %v1705, %v1616
    %v1834 = vmul.f32 %v1706, %v1616
    %v1835 = vmul.f32 %v1707, %v1616
    %v1836 = vmul.f32 %v1708, %v1616
    %v1837 = vmul.f32 %v1709, %v1617
    %v1838 = vmul.f32 %v1710, %v1617
    %v1839 = vmul.f32 %v1711, %v1617
    %v1840 = vmul.f32 %v1712, %v1617
    %v1841 = vmul.f32 %v1713, %v1618
    %v1842 = vmul.f32 %v1714, %v1618
    %v1843 = vmul.f32 %v1715, %v1618
    %v1844 = vmul.f32 %v1716, %v1618
    %v1845 = vmul.f32 %v1717, %v1619
    %v1846 = vmul.f32 %v1718, %v1619
    %v1847 = vmul.f32 %v1719, %v1619
    %v1848 = vmul.f32 %v1720, %v1619
    %v1849 = vmul.f32 %v1721, %v1620
    %v1850 = vmul.f32 %v1722, %v1620
    %v1851 = vmul.f32 %v1723, %v1620
    %v1852 = vmul.f32 %v1724, %v1620
    %v1853 = vmul.f32 %v1725, %v1621
    %v1854 = vmul.f32 %v1726, %v1621
    %v1855 = vmul.f32 %v1727, %v1621
    %v1856 = vmul.f32 %v1728, %v1621
    %v1857 = vmul.f32 %v1729, %v1622
    %v1858 = vmul.f32 %v1730, %v1622
    %v1859 = vmul.f32 %v1731, %v1622
    %v1860 = vmul.f32 %v1732, %v1622
    %v1861 = vmul.f32 %v1733, %v1623
    %v1862 = vmul.f32 %v1734, %v1623
    %v1863 = vmul.f32 %v1735, %v1623
    %v1864 = vmul.f32 %v1736, %v1623
    %v1865 = vmul.f32 %v1737, %v1624
    %v1866 = vmul.f32 %v1738, %v1624
    %v1867 = vmul.f32 %v1739, %v1624
    %v1868 = vmul.f32 %v1740, %v1624
    %v1869 = vmul.f32 %v1741, %v1625
    %v1870 = vmul.f32 %v1742, %v1625
    %v1871 = vmul.f32 %v1743, %v1625
    %v1872 = vmul.f32 %v1744, %v1625
    %v1873 = vmul.f32 %v1745, %v1626
    %v1874 = vmul.f32 %v1746, %v1626
    %v1875 = vmul.f32 %v1747, %v1626
    %v1876 = vmul.f32 %v1748, %v1626
    %v1877 = vmul.f32 %v1749, %v1627
    %v1878 = vmul.f32 %v1750, %v1627
    %v1879 = vmul.f32 %v1751, %v1627
    %v1880 = vmul.f32 %v1752, %v1627
    %v1881 = vmul.f32 %v1753, %v1628
    %v1882 = vmul.f32 %v1754, %v1628
    %v1883 = vmul.f32 %v1755, %v1628
    %v1884 = vmul.f32 %v1756, %v1628
    %v1885 = vld [vmem:[%s3] sm:$0xf]
    %v1887 = vlaneseq
    %v1888 = vshrl.u32 %v1887, 7
    %v1889 = vsub.s32 0, %v1888
    %v1890 = vrot.slane %v1885, %v1889
    %v1891 = vlaneseq
    %v1892 = vshrl.u32 %v1891, 7
    %v1893 = vsub.s32 1, %v1892
    %v1894 = vrot.slane %v1885, %v1893
    %v1895 = vlaneseq
    %v1896 = vshrl.u32 %v1895, 7
    %v1897 = vsub.s32 2, %v1896
    %v1898 = vrot.slane %v1885, %v1897
    %v1899 = vlaneseq
    %v1900 = vshrl.u32 %v1899, 7
    %v1901 = vsub.s32 3, %v1900
    %v1902 = vrot.slane %v1885, %v1901
    %v1907 = vmul.f32 %v1757, %v1890
    %v1908 = vmul.f32 %v1758, %v1894
    %v1909 = vmul.f32 %v1759, %v1898
    %v1910 = vmul.f32 %v1760, %v1902
    %v1911 = vmul.f32 %v1761, %v1890
    %v1912 = vmul.f32 %v1762, %v1894
    %v1913 = vmul.f32 %v1763, %v1898
    %v1914 = vmul.f32 %v1764, %v1902
    %v1915 = vmul.f32 %v1765, %v1890
    %v1916 = vmul.f32 %v1766, %v1894
    %v1917 = vmul.f32 %v1767, %v1898
    %v1918 = vmul.f32 %v1768, %v1902
    %v1919 = vmul.f32 %v1769, %v1890
    %v1920 = vmul.f32 %v1770, %v1894
    %v1921 = vmul.f32 %v1771, %v1898
    %v1922 = vmul.f32 %v1772, %v1902
    %v1923 = vmul.f32 %v1773, %v1890
    %v1924 = vmul.f32 %v1774, %v1894
    %v1925 = vmul.f32 %v1775, %v1898
    %v1926 = vmul.f32 %v1776, %v1902
    %v1927 = vmul.f32 %v1777, %v1890
    %v1928 = vmul.f32 %v1778, %v1894
    %v1929 = vmul.f32 %v1779, %v1898
    %v1930 = vmul.f32 %v1780, %v1902
    %v1931 = vmul.f32 %v1781, %v1890
    %v1932 = vmul.f32 %v1782, %v1894
    %v1933 = vmul.f32 %v1783, %v1898
    %v1934 = vmul.f32 %v1784, %v1902
    %v1935 = vmul.f32 %v1785, %v1890
    %v1936 = vmul.f32 %v1786, %v1894
    %v1937 = vmul.f32 %v1787, %v1898
    %v1938 = vmul.f32 %v1788, %v1902
    %v1939 = vmul.f32 %v1789, %v1890
    %v1940 = vmul.f32 %v1790, %v1894
    %v1941 = vmul.f32 %v1791, %v1898
    %v1942 = vmul.f32 %v1792, %v1902
    %v1943 = vmul.f32 %v1793, %v1890
    %v1944 = vmul.f32 %v1794, %v1894
    %v1945 = vmul.f32 %v1795, %v1898
    %v1946 = vmul.f32 %v1796, %v1902
    %v1947 = vmul.f32 %v1797, %v1890
    %v1948 = vmul.f32 %v1798, %v1894
    %v1949 = vmul.f32 %v1799, %v1898
    %v1950 = vmul.f32 %v1800, %v1902
    %v1951 = vmul.f32 %v1801, %v1890
    %v1952 = vmul.f32 %v1802, %v1894
    %v1953 = vmul.f32 %v1803, %v1898
    %v1954 = vmul.f32 %v1804, %v1902
    %v1955 = vmul.f32 %v1805, %v1890
    %v1956 = vmul.f32 %v1806, %v1894
    %v1957 = vmul.f32 %v1807, %v1898
    %v1958 = vmul.f32 %v1808, %v1902
    %v1959 = vmul.f32 %v1809, %v1890
    %v1960 = vmul.f32 %v1810, %v1894
    %v1961 = vmul.f32 %v1811, %v1898
    %v1962 = vmul.f32 %v1812, %v1902
    %v1963 = vmul.f32 %v1813, %v1890
    %v1964 = vmul.f32 %v1814, %v1894
    %v1965 = vmul.f32 %v1815, %v1898
    %v1966 = vmul.f32 %v1816, %v1902
    %v1967 = vmul.f32 %v1817, %v1890
    %v1968 = vmul.f32 %v1818, %v1894
    %v1969 = vmul.f32 %v1819, %v1898
    %v1970 = vmul.f32 %v1820, %v1902
    %v1971 = vmul.f32 %v1821, %v1890
    %v1972 = vmul.f32 %v1822, %v1894
    %v1973 = vmul.f32 %v1823, %v1898
    %v1974 = vmul.f32 %v1824, %v1902
    %v1975 = vmul.f32 %v1825, %v1890
    %v1976 = vmul.f32 %v1826, %v1894
    %v1977 = vmul.f32 %v1827, %v1898
    %v1978 = vmul.f32 %v1828, %v1902
    %v1979 = vmul.f32 %v1829, %v1890
    %v1980 = vmul.f32 %v1830, %v1894
    %v1981 = vmul.f32 %v1831, %v1898
    %v1982 = vmul.f32 %v1832, %v1902
    %v1983 = vmul.f32 %v1833, %v1890
    %v1984 = vmul.f32 %v1834, %v1894
    %v1985 = vmul.f32 %v1835, %v1898
    %v1986 = vmul.f32 %v1836, %v1902
    %v1987 = vmul.f32 %v1837, %v1890
    %v1988 = vmul.f32 %v1838, %v1894
    %v1989 = vmul.f32 %v1839, %v1898
    %v1990 = vmul.f32 %v1840, %v1902
    %v1991 = vmul.f32 %v1841, %v1890
    %v1992 = vmul.f32 %v1842, %v1894
    %v1993 = vmul.f32 %v1843, %v1898
    %v1994 = vmul.f32 %v1844, %v1902
    %v1995 = vmul.f32 %v1845, %v1890
    %v1996 = vmul.f32 %v1846, %v1894
    %v1997 = vmul.f32 %v1847, %v1898
    %v1998 = vmul.f32 %v1848, %v1902
    %v1999 = vmul.f32 %v1849, %v1890
    %v2000 = vmul.f32 %v1850, %v1894
    %v2001 = vmul.f32 %v1851, %v1898
    %v2002 = vmul.f32 %v1852, %v1902
    %v2003 = vmul.f32 %v1853, %v1890
    %v2004 = vmul.f32 %v1854, %v1894
    %v2005 = vmul.f32 %v1855, %v1898
    %v2006 = vmul.f32 %v1856, %v1902
    %v2007 = vmul.f32 %v1857, %v1890
    %v2008 = vmul.f32 %v1858, %v1894
    %v2009 = vmul.f32 %v1859, %v1898
    %v2010 = vmul.f32 %v1860, %v1902
    %v2011 = vmul.f32 %v1861, %v1890
    %v2012 = vmul.f32 %v1862, %v1894
    %v2013 = vmul.f32 %v1863, %v1898
    %v2014 = vmul.f32 %v1864, %v1902
    %v2015 = vmul.f32 %v1865, %v1890
    %v2016 = vmul.f32 %v1866, %v1894
    %v2017 = vmul.f32 %v1867, %v1898
    %v2018 = vmul.f32 %v1868, %v1902
    %v2019 = vmul.f32 %v1869, %v1890
    %v2020 = vmul.f32 %v1870, %v1894
    %v2021 = vmul.f32 %v1871, %v1898
    %v2022 = vmul.f32 %v1872, %v1902
    %v2023 = vmul.f32 %v1873, %v1890
    %v2024 = vmul.f32 %v1874, %v1894
    %v2025 = vmul.f32 %v1875, %v1898
    %v2026 = vmul.f32 %v1876, %v1902
    %v2027 = vmul.f32 %v1877, %v1890
    %v2028 = vmul.f32 %v1878, %v1894
    %v2029 = vmul.f32 %v1879, %v1898
    %v2030 = vmul.f32 %v1880, %v1902
    %v2031 = vmul.f32 %v1881, %v1890
    %v2032 = vmul.f32 %v1882, %v1894
    %v2033 = vmul.f32 %v1883, %v1898
    %v2034 = vmul.f32 %v1884, %v1902
    %v2035 = vld [vmem:[%s4] sm:$0xf]
    %v2037 = vlaneseq
    %v2038 = vshrl.u32 %v2037, 7
    %v2039 = vsub.s32 0, %v2038
    %v2040 = vrot.slane %v2035, %v2039
    %v2041 = vlaneseq
    %v2042 = vshrl.u32 %v2041, 7
    %v2043 = vsub.s32 1, %v2042
    %v2044 = vrot.slane %v2035, %v2043
    %v2045 = vlaneseq
    %v2046 = vshrl.u32 %v2045, 7
    %v2047 = vsub.s32 2, %v2046
    %v2048 = vrot.slane %v2035, %v2047
    %v2049 = vlaneseq
    %v2050 = vshrl.u32 %v2049, 7
    %v2051 = vsub.s32 3, %v2050
    %v2052 = vrot.slane %v2035, %v2051
    %v2057 = vadd.f32 %v1907, %v2040
    %v2058 = vadd.f32 %v1908, %v2044
    %v2059 = vadd.f32 %v1909, %v2048
    %v2060 = vadd.f32 %v1910, %v2052
    %v2061 = vadd.f32 %v1911, %v2040
    %v2062 = vadd.f32 %v1912, %v2044
    %v2063 = vadd.f32 %v1913, %v2048
    %v2064 = vadd.f32 %v1914, %v2052
    %v2065 = vadd.f32 %v1915, %v2040
    %v2066 = vadd.f32 %v1916, %v2044
    %v2067 = vadd.f32 %v1917, %v2048
    %v2068 = vadd.f32 %v1918, %v2052
    %v2069 = vadd.f32 %v1919, %v2040
    %v2070 = vadd.f32 %v1920, %v2044
    %v2071 = vadd.f32 %v1921, %v2048
    %v2072 = vadd.f32 %v1922, %v2052
    %v2073 = vadd.f32 %v1923, %v2040
    %v2074 = vadd.f32 %v1924, %v2044
    %v2075 = vadd.f32 %v1925, %v2048
    %v2076 = vadd.f32 %v1926, %v2052
    %v2077 = vadd.f32 %v1927, %v2040
    %v2078 = vadd.f32 %v1928, %v2044
    %v2079 = vadd.f32 %v1929, %v2048
    %v2080 = vadd.f32 %v1930, %v2052
    %v2081 = vadd.f32 %v1931, %v2040
    %v2082 = vadd.f32 %v1932, %v2044
    %v2083 = vadd.f32 %v1933, %v2048
    %v2084 = vadd.f32 %v1934, %v2052
    %v2085 = vadd.f32 %v1935, %v2040
    %v2086 = vadd.f32 %v1936, %v2044
    %v2087 = vadd.f32 %v1937, %v2048
    %v2088 = vadd.f32 %v1938, %v2052
    %v2089 = vadd.f32 %v1939, %v2040
    %v2090 = vadd.f32 %v1940, %v2044
    %v2091 = vadd.f32 %v1941, %v2048
    %v2092 = vadd.f32 %v1942, %v2052
    %v2093 = vadd.f32 %v1943, %v2040
    %v2094 = vadd.f32 %v1944, %v2044
    %v2095 = vadd.f32 %v1945, %v2048
    %v2096 = vadd.f32 %v1946, %v2052
    %v2097 = vadd.f32 %v1947, %v2040
    %v2098 = vadd.f32 %v1948, %v2044
    %v2099 = vadd.f32 %v1949, %v2048
    %v2100 = vadd.f32 %v1950, %v2052
    %v2101 = vadd.f32 %v1951, %v2040
    %v2102 = vadd.f32 %v1952, %v2044
    %v2103 = vadd.f32 %v1953, %v2048
    %v2104 = vadd.f32 %v1954, %v2052
    %v2105 = vadd.f32 %v1955, %v2040
    %v2106 = vadd.f32 %v1956, %v2044
    %v2107 = vadd.f32 %v1957, %v2048
    %v2108 = vadd.f32 %v1958, %v2052
    %v2109 = vadd.f32 %v1959, %v2040
    %v2110 = vadd.f32 %v1960, %v2044
    %v2111 = vadd.f32 %v1961, %v2048
    %v2112 = vadd.f32 %v1962, %v2052
    %v2113 = vadd.f32 %v1963, %v2040
    %v2114 = vadd.f32 %v1964, %v2044
    %v2115 = vadd.f32 %v1965, %v2048
    %v2116 = vadd.f32 %v1966, %v2052
    %v2117 = vadd.f32 %v1967, %v2040
    %v2118 = vadd.f32 %v1968, %v2044
    %v2119 = vadd.f32 %v1969, %v2048
    %v2120 = vadd.f32 %v1970, %v2052
    %v2121 = vadd.f32 %v1971, %v2040
    %v2122 = vadd.f32 %v1972, %v2044
    %v2123 = vadd.f32 %v1973, %v2048
    %v2124 = vadd.f32 %v1974, %v2052
    %v2125 = vadd.f32 %v1975, %v2040
    %v2126 = vadd.f32 %v1976, %v2044
    %v2127 = vadd.f32 %v1977, %v2048
    %v2128 = vadd.f32 %v1978, %v2052
    %v2129 = vadd.f32 %v1979, %v2040
    %v2130 = vadd.f32 %v1980, %v2044
    %v2131 = vadd.f32 %v1981, %v2048
    %v2132 = vadd.f32 %v1982, %v2052
    %v2133 = vadd.f32 %v1983, %v2040
    %v2134 = vadd.f32 %v1984, %v2044
    %v2135 = vadd.f32 %v1985, %v2048
    %v2136 = vadd.f32 %v1986, %v2052
    %v2137 = vadd.f32 %v1987, %v2040
    %v2138 = vadd.f32 %v1988, %v2044
    %v2139 = vadd.f32 %v1989, %v2048
    %v2140 = vadd.f32 %v1990, %v2052
    %v2141 = vadd.f32 %v1991, %v2040
    %v2142 = vadd.f32 %v1992, %v2044
    %v2143 = vadd.f32 %v1993, %v2048
    %v2144 = vadd.f32 %v1994, %v2052
    %v2145 = vadd.f32 %v1995, %v2040
    %v2146 = vadd.f32 %v1996, %v2044
    %v2147 = vadd.f32 %v1997, %v2048
    %v2148 = vadd.f32 %v1998, %v2052
    %v2149 = vadd.f32 %v1999, %v2040
    %v2150 = vadd.f32 %v2000, %v2044
    %v2151 = vadd.f32 %v2001, %v2048
    %v2152 = vadd.f32 %v2002, %v2052
    %v2153 = vadd.f32 %v2003, %v2040
    %v2154 = vadd.f32 %v2004, %v2044
    %v2155 = vadd.f32 %v2005, %v2048
    %v2156 = vadd.f32 %v2006, %v2052
    %v2157 = vadd.f32 %v2007, %v2040
    %v2158 = vadd.f32 %v2008, %v2044
    %v2159 = vadd.f32 %v2009, %v2048
    %v2160 = vadd.f32 %v2010, %v2052
    %v2161 = vadd.f32 %v2011, %v2040
    %v2162 = vadd.f32 %v2012, %v2044
    %v2163 = vadd.f32 %v2013, %v2048
    %v2164 = vadd.f32 %v2014, %v2052
    %v2165 = vadd.f32 %v2015, %v2040
    %v2166 = vadd.f32 %v2016, %v2044
    %v2167 = vadd.f32 %v2017, %v2048
    %v2168 = vadd.f32 %v2018, %v2052
    %v2169 = vadd.f32 %v2019, %v2040
    %v2170 = vadd.f32 %v2020, %v2044
    %v2171 = vadd.f32 %v2021, %v2048
    %v2172 = vadd.f32 %v2022, %v2052
    %v2173 = vadd.f32 %v2023, %v2040
    %v2174 = vadd.f32 %v2024, %v2044
    %v2175 = vadd.f32 %v2025, %v2048
    %v2176 = vadd.f32 %v2026, %v2052
    %v2177 = vadd.f32 %v2027, %v2040
    %v2178 = vadd.f32 %v2028, %v2044
    %v2179 = vadd.f32 %v2029, %v2048
    %v2180 = vadd.f32 %v2030, %v2052
    %v2181 = vadd.f32 %v2031, %v2040
    %v2182 = vadd.f32 %v2032, %v2044
    %v2183 = vadd.f32 %v2033, %v2048
    %v2184 = vadd.f32 %v2034, %v2052
    %v2185 = vmax.f32 %v2057, 0.0
    %v2186 = vmax.f32 %v2058, 0.0
    %v2187 = vmax.f32 %v2059, 0.0
    %v2188 = vmax.f32 %v2060, 0.0
    %v2189 = vmax.f32 %v2061, 0.0
    %v2190 = vmax.f32 %v2062, 0.0
    %v2191 = vmax.f32 %v2063, 0.0
    %v2192 = vmax.f32 %v2064, 0.0
    %v2193 = vmax.f32 %v2065, 0.0
    %v2194 = vmax.f32 %v2066, 0.0
    %v2195 = vmax.f32 %v2067, 0.0
    %v2196 = vmax.f32 %v2068, 0.0
    %v2197 = vmax.f32 %v2069, 0.0
    %v2198 = vmax.f32 %v2070, 0.0
    %v2199 = vmax.f32 %v2071, 0.0
    %v2200 = vmax.f32 %v2072, 0.0
    %v2201 = vmax.f32 %v2073, 0.0
    %v2202 = vmax.f32 %v2074, 0.0
    %v2203 = vmax.f32 %v2075, 0.0
    %v2204 = vmax.f32 %v2076, 0.0
    %v2205 = vmax.f32 %v2077, 0.0
    %v2206 = vmax.f32 %v2078, 0.0
    %v2207 = vmax.f32 %v2079, 0.0
    %v2208 = vmax.f32 %v2080, 0.0
    %v2209 = vmax.f32 %v2081, 0.0
    %v2210 = vmax.f32 %v2082, 0.0
    %v2211 = vmax.f32 %v2083, 0.0
    %v2212 = vmax.f32 %v2084, 0.0
    %v2213 = vmax.f32 %v2085, 0.0
    %v2214 = vmax.f32 %v2086, 0.0
    %v2215 = vmax.f32 %v2087, 0.0
    %v2216 = vmax.f32 %v2088, 0.0
    %v2217 = vmax.f32 %v2089, 0.0
    %v2218 = vmax.f32 %v2090, 0.0
    %v2219 = vmax.f32 %v2091, 0.0
    %v2220 = vmax.f32 %v2092, 0.0
    %v2221 = vmax.f32 %v2093, 0.0
    %v2222 = vmax.f32 %v2094, 0.0
    %v2223 = vmax.f32 %v2095, 0.0
    %v2224 = vmax.f32 %v2096, 0.0
    %v2225 = vmax.f32 %v2097, 0.0
    %v2226 = vmax.f32 %v2098, 0.0
    %v2227 = vmax.f32 %v2099, 0.0
    %v2228 = vmax.f32 %v2100, 0.0
    %v2229 = vmax.f32 %v2101, 0.0
    %v2230 = vmax.f32 %v2102, 0.0
    %v2231 = vmax.f32 %v2103, 0.0
    %v2232 = vmax.f32 %v2104, 0.0
    %v2233 = vmax.f32 %v2105, 0.0
    %v2234 = vmax.f32 %v2106, 0.0
    %v2235 = vmax.f32 %v2107, 0.0
    %v2236 = vmax.f32 %v2108, 0.0
    %v2237 = vmax.f32 %v2109, 0.0
    %v2238 = vmax.f32 %v2110, 0.0
    %v2239 = vmax.f32 %v2111, 0.0
    %v2240 = vmax.f32 %v2112, 0.0
    %v2241 = vmax.f32 %v2113, 0.0
    %v2242 = vmax.f32 %v2114, 0.0
    %v2243 = vmax.f32 %v2115, 0.0
    %v2244 = vmax.f32 %v2116, 0.0
    %v2245 = vmax.f32 %v2117, 0.0
    %v2246 = vmax.f32 %v2118, 0.0
    %v2247 = vmax.f32 %v2119, 0.0
    %v2248 = vmax.f32 %v2120, 0.0
    %v2249 = vmax.f32 %v2121, 0.0
    %v2250 = vmax.f32 %v2122, 0.0
    %v2251 = vmax.f32 %v2123, 0.0
    %v2252 = vmax.f32 %v2124, 0.0
    %v2253 = vmax.f32 %v2125, 0.0
    %v2254 = vmax.f32 %v2126, 0.0
    %v2255 = vmax.f32 %v2127, 0.0
    %v2256 = vmax.f32 %v2128, 0.0
    %v2257 = vmax.f32 %v2129, 0.0
    %v2258 = vmax.f32 %v2130, 0.0
    %v2259 = vmax.f32 %v2131, 0.0
    %v2260 = vmax.f32 %v2132, 0.0
    %v2261 = vmax.f32 %v2133, 0.0
    %v2262 = vmax.f32 %v2134, 0.0
    %v2263 = vmax.f32 %v2135, 0.0
    %v2264 = vmax.f32 %v2136, 0.0
    %v2265 = vmax.f32 %v2137, 0.0
    %v2266 = vmax.f32 %v2138, 0.0
    %v2267 = vmax.f32 %v2139, 0.0
    %v2268 = vmax.f32 %v2140, 0.0
    %v2269 = vmax.f32 %v2141, 0.0
    %v2270 = vmax.f32 %v2142, 0.0
    %v2271 = vmax.f32 %v2143, 0.0
    %v2272 = vmax.f32 %v2144, 0.0
    %v2273 = vmax.f32 %v2145, 0.0
    %v2274 = vmax.f32 %v2146, 0.0
    %v2275 = vmax.f32 %v2147, 0.0
    %v2276 = vmax.f32 %v2148, 0.0
    %v2277 = vmax.f32 %v2149, 0.0
    %v2278 = vmax.f32 %v2150, 0.0
    %v2279 = vmax.f32 %v2151, 0.0
    %v2280 = vmax.f32 %v2152, 0.0
    %v2281 = vmax.f32 %v2153, 0.0
    %v2282 = vmax.f32 %v2154, 0.0
    %v2283 = vmax.f32 %v2155, 0.0
    %v2284 = vmax.f32 %v2156, 0.0
    %v2285 = vmax.f32 %v2157, 0.0
    %v2286 = vmax.f32 %v2158, 0.0
    %v2287 = vmax.f32 %v2159, 0.0
    %v2288 = vmax.f32 %v2160, 0.0
    %v2289 = vmax.f32 %v2161, 0.0
    %v2290 = vmax.f32 %v2162, 0.0
    %v2291 = vmax.f32 %v2163, 0.0
    %v2292 = vmax.f32 %v2164, 0.0
    %v2293 = vmax.f32 %v2165, 0.0
    %v2294 = vmax.f32 %v2166, 0.0
    %v2295 = vmax.f32 %v2167, 0.0
    %v2296 = vmax.f32 %v2168, 0.0
    %v2297 = vmax.f32 %v2169, 0.0
    %v2298 = vmax.f32 %v2170, 0.0
    %v2299 = vmax.f32 %v2171, 0.0
    %v2300 = vmax.f32 %v2172, 0.0
    %v2301 = vmax.f32 %v2173, 0.0
    %v2302 = vmax.f32 %v2174, 0.0
    %v2303 = vmax.f32 %v2175, 0.0
    %v2304 = vmax.f32 %v2176, 0.0
    %v2305 = vmax.f32 %v2177, 0.0
    %v2306 = vmax.f32 %v2178, 0.0
    %v2307 = vmax.f32 %v2179, 0.0
    %v2308 = vmax.f32 %v2180, 0.0
    %v2309 = vmax.f32 %v2181, 0.0
    %v2310 = vmax.f32 %v2182, 0.0
    %v2311 = vmax.f32 %v2183, 0.0
    %v2312 = vmax.f32 %v2184, 0.0
    %v2313 = vpack.c.bf16 %v2189, %v2185
    %v2314 = vpack.c.bf16 %v2190, %v2186
    %v2315 = vpack.c.bf16 %v2191, %v2187
    %v2316 = vpack.c.bf16 %v2192, %v2188
    %v2317 = vpack.c.bf16 %v2197, %v2193
    %v2318 = vpack.c.bf16 %v2198, %v2194
    %v2319 = vpack.c.bf16 %v2199, %v2195
    %v2320 = vpack.c.bf16 %v2200, %v2196
    %v2321 = vpack.c.bf16 %v2205, %v2201
    %v2322 = vpack.c.bf16 %v2206, %v2202
    %v2323 = vpack.c.bf16 %v2207, %v2203
    %v2324 = vpack.c.bf16 %v2208, %v2204
    %v2325 = vpack.c.bf16 %v2213, %v2209
    %v2326 = vpack.c.bf16 %v2214, %v2210
    %v2327 = vpack.c.bf16 %v2215, %v2211
    %v2328 = vpack.c.bf16 %v2216, %v2212
    %v2329 = vpack.c.bf16 %v2221, %v2217
    %v2330 = vpack.c.bf16 %v2222, %v2218
    %v2331 = vpack.c.bf16 %v2223, %v2219
    %v2332 = vpack.c.bf16 %v2224, %v2220
    %v2333 = vpack.c.bf16 %v2229, %v2225
    %v2334 = vpack.c.bf16 %v2230, %v2226
    %v2335 = vpack.c.bf16 %v2231, %v2227
    %v2336 = vpack.c.bf16 %v2232, %v2228
    %v2337 = vpack.c.bf16 %v2237, %v2233
    %v2338 = vpack.c.bf16 %v2238, %v2234
    %v2339 = vpack.c.bf16 %v2239, %v2235
    %v2340 = vpack.c.bf16 %v2240, %v2236
    %v2341 = vpack.c.bf16 %v2245, %v2241
    %v2342 = vpack.c.bf16 %v2246, %v2242
    %v2343 = vpack.c.bf16 %v2247, %v2243
    %v2344 = vpack.c.bf16 %v2248, %v2244
    %v2345 = vpack.c.bf16 %v2253, %v2249
    %v2346 = vpack.c.bf16 %v2254, %v2250
    %v2347 = vpack.c.bf16 %v2255, %v2251
    %v2348 = vpack.c.bf16 %v2256, %v2252
    %v2349 = vpack.c.bf16 %v2261, %v2257
    %v2350 = vpack.c.bf16 %v2262, %v2258
    %v2351 = vpack.c.bf16 %v2263, %v2259
    %v2352 = vpack.c.bf16 %v2264, %v2260
    %v2353 = vpack.c.bf16 %v2269, %v2265
    %v2354 = vpack.c.bf16 %v2270, %v2266
    %v2355 = vpack.c.bf16 %v2271, %v2267
    %v2356 = vpack.c.bf16 %v2272, %v2268
    %v2357 = vpack.c.bf16 %v2277, %v2273
    %v2358 = vpack.c.bf16 %v2278, %v2274
    %v2359 = vpack.c.bf16 %v2279, %v2275
    %v2360 = vpack.c.bf16 %v2280, %v2276
    %v2361 = vpack.c.bf16 %v2285, %v2281
    %v2362 = vpack.c.bf16 %v2286, %v2282
    %v2363 = vpack.c.bf16 %v2287, %v2283
    %v2364 = vpack.c.bf16 %v2288, %v2284
    %v2365 = vpack.c.bf16 %v2293, %v2289
    %v2366 = vpack.c.bf16 %v2294, %v2290
    %v2367 = vpack.c.bf16 %v2295, %v2291
    %v2368 = vpack.c.bf16 %v2296, %v2292
    %v2369 = vpack.c.bf16 %v2301, %v2297
    %v2370 = vpack.c.bf16 %v2302, %v2298
    %v2371 = vpack.c.bf16 %v2303, %v2299
    %v2372 = vpack.c.bf16 %v2304, %v2300
    %v2373 = vpack.c.bf16 %v2309, %v2305
    %v2374 = vpack.c.bf16 %v2310, %v2306
    %v2375 = vpack.c.bf16 %v2311, %v2307
    %v2376 = vpack.c.bf16 %v2312, %v2308
    %v2377 = vld [vmem:[#allocation7] sm:$0xff]
    %v2378 = vld [vmem:[#allocation7 + $0x8] sm:$0xff]
    %v2379 = vld [vmem:[#allocation7 + $0x10] sm:$0xff]
    %v2380 = vld [vmem:[#allocation7 + $0x18] sm:$0xff]
    %v2381 = vld [vmem:[#allocation7 + $0x20] sm:$0xff]
    %v2382 = vld [vmem:[#allocation7 + $0x28] sm:$0xff]
    %v2383 = vld [vmem:[#allocation7 + $0x30] sm:$0xff]
    %v2384 = vld [vmem:[#allocation7 + $0x38] sm:$0xff]
    %v2385 = vld [vmem:[#allocation7 + $0x40] sm:$0xff]
    %v2386 = vld [vmem:[#allocation7 + $0x48] sm:$0xff]
    %v2387 = vld [vmem:[#allocation7 + $0x50] sm:$0xff]
    %v2388 = vld [vmem:[#allocation7 + $0x58] sm:$0xff]
    %v2389 = vld [vmem:[#allocation7 + $0x60] sm:$0xff]
    %v2390 = vld [vmem:[#allocation7 + $0x68] sm:$0xff]
    %v2391 = vld [vmem:[#allocation7 + $0x70] sm:$0xff]
    %v2392 = vld [vmem:[#allocation7 + $0x78] sm:$0xff]
    %v2393 = vld [vmem:[#allocation7 + $0x80] sm:$0xff]
    %v2394 = vld [vmem:[#allocation7 + $0x88] sm:$0xff]
    %v2395 = vld [vmem:[#allocation7 + $0x90] sm:$0xff]
    %v2396 = vld [vmem:[#allocation7 + $0x98] sm:$0xff]
    %v2397 = vld [vmem:[#allocation7 + $0xa0] sm:$0xff]
    %v2398 = vld [vmem:[#allocation7 + $0xa8] sm:$0xff]
    %v2399 = vld [vmem:[#allocation7 + $0xb0] sm:$0xff]
    %v2400 = vld [vmem:[#allocation7 + $0xb8] sm:$0xff]
    %v2401 = vld [vmem:[#allocation7 + $0xc0] sm:$0xff]
    %v2402 = vld [vmem:[#allocation7 + $0xc8] sm:$0xff]
    %v2403 = vld [vmem:[#allocation7 + $0xd0] sm:$0xff]
    %v2404 = vld [vmem:[#allocation7 + $0xd8] sm:$0xff]
    %v2405 = vld [vmem:[#allocation7 + $0xe0] sm:$0xff]
    %v2406 = vld [vmem:[#allocation7 + $0xe8] sm:$0xff]
    %v2407 = vld [vmem:[#allocation7 + $0xf0] sm:$0xff]
    %v2408 = vld [vmem:[#allocation7 + $0xf8] sm:$0xff]
    %v2409 = vld [vmem:[#allocation7 + $0x100] sm:$0xff]
    %v2410 = vld [vmem:[#allocation7 + $0x108] sm:$0xff]
    %v2411 = vld [vmem:[#allocation7 + $0x110] sm:$0xff]
    %v2412 = vld [vmem:[#allocation7 + $0x118] sm:$0xff]
    %v2413 = vld [vmem:[#allocation7 + $0x120] sm:$0xff]
    %v2414 = vld [vmem:[#allocation7 + $0x128] sm:$0xff]
    %v2415 = vld [vmem:[#allocation7 + $0x130] sm:$0xff]
    %v2416 = vld [vmem:[#allocation7 + $0x138] sm:$0xff]
    %v2417 = vld [vmem:[#allocation7 + $0x140] sm:$0xff]
    %v2418 = vld [vmem:[#allocation7 + $0x148] sm:$0xff]
    %v2419 = vld [vmem:[#allocation7 + $0x150] sm:$0xff]
    %v2420 = vld [vmem:[#allocation7 + $0x158] sm:$0xff]
    %v2421 = vld [vmem:[#allocation7 + $0x160] sm:$0xff]
    %v2422 = vld [vmem:[#allocation7 + $0x168] sm:$0xff]
    %v2423 = vld [vmem:[#allocation7 + $0x170] sm:$0xff]
    %v2424 = vld [vmem:[#allocation7 + $0x178] sm:$0xff]
    %v2425 = vld [vmem:[#allocation7 + $0x180] sm:$0xff]
    %v2426 = vld [vmem:[#allocation7 + $0x188] sm:$0xff]
    %v2427 = vld [vmem:[#allocation7 + $0x190] sm:$0xff]
    %v2428 = vld [vmem:[#allocation7 + $0x198] sm:$0xff]
    %v2429 = vld [vmem:[#allocation7 + $0x1a0] sm:$0xff]
    %v2430 = vld [vmem:[#allocation7 + $0x1a8] sm:$0xff]
    %v2431 = vld [vmem:[#allocation7 + $0x1b0] sm:$0xff]
    %v2432 = vld [vmem:[#allocation7 + $0x1b8] sm:$0xff]
    %v2433 = vld [vmem:[#allocation7 + $0x1c0] sm:$0xff]
    %v2434 = vld [vmem:[#allocation7 + $0x1c8] sm:$0xff]
    %v2435 = vld [vmem:[#allocation7 + $0x1d0] sm:$0xff]
    %v2436 = vld [vmem:[#allocation7 + $0x1d8] sm:$0xff]
    %v2437 = vld [vmem:[#allocation7 + $0x1e0] sm:$0xff]
    %v2438 = vld [vmem:[#allocation7 + $0x1e8] sm:$0xff]
    %v2439 = vld [vmem:[#allocation7 + $0x1f0] sm:$0xff]
    %v2440 = vld [vmem:[#allocation7 + $0x1f8] sm:$0xff]
    %v2441 = vld [vmem:[%s6] sm:$0x3]
    %v2443 = vlaneseq
    %v2444 = vshrl.u32 %v2443, 7
    %v2445 = vsub.s32 0, %v2444
    %v2446 = vrot.slane %v2441, %v2445
    %v2447 = vlaneseq
    %v2448 = vshrl.u32 %v2447, 7
    %v2449 = vsub.s32 1, %v2448
    %v2450 = vrot.slane %v2441, %v2449
    %v2517 = vunpack.c.l.b16 %v2377
    %v2518 = vunpack.c.h.b16 %v2377
    %v2519 = vunpack.c.l.b16 %v2378
    %v2520 = vunpack.c.h.b16 %v2378
    %v2521 = vunpack.c.l.b16 %v2379
    %v2522 = vunpack.c.h.b16 %v2379
    %v2523 = vunpack.c.l.b16 %v2380
    %v2524 = vunpack.c.h.b16 %v2380
    %v2525 = vunpack.c.l.b16 %v2381
    %v2526 = vunpack.c.h.b16 %v2381
    %v2527 = vunpack.c.l.b16 %v2382
    %v2528 = vunpack.c.h.b16 %v2382
    %v2529 = vunpack.c.l.b16 %v2383
    %v2530 = vunpack.c.h.b16 %v2383
    %v2531 = vunpack.c.l.b16 %v2384
    %v2532 = vunpack.c.h.b16 %v2384
    %v2533 = vunpack.c.l.b16 %v2385
    %v2534 = vunpack.c.h.b16 %v2385
    %v2535 = vunpack.c.l.b16 %v2386
    %v2536 = vunpack.c.h.b16 %v2386
    %v2537 = vunpack.c.l.b16 %v2387
    %v2538 = vunpack.c.h.b16 %v2387
    %v2539 = vunpack.c.l.b16 %v2388
    %v2540 = vunpack.c.h.b16 %v2388
    %v2541 = vunpack.c.l.b16 %v2389
    %v2542 = vunpack.c.h.b16 %v2389
    %v2543 = vunpack.c.l.b16 %v2390
    %v2544 = vunpack.c.h.b16 %v2390
    %v2545 = vunpack.c.l.b16 %v2391
    %v2546 = vunpack.c.h.b16 %v2391
    %v2547 = vunpack.c.l.b16 %v2392
    %v2548 = vunpack.c.h.b16 %v2392
    %v2549 = vunpack.c.l.b16 %v2393
    %v2550 = vunpack.c.h.b16 %v2393
    %v2551 = vunpack.c.l.b16 %v2394
    %v2552 = vunpack.c.h.b16 %v2394
    %v2553 = vunpack.c.l.b16 %v2395
    %v2554 = vunpack.c.h.b16 %v2395
    %v2555 = vunpack.c.l.b16 %v2396
    %v2556 = vunpack.c.h.b16 %v2396
    %v2557 = vunpack.c.l.b16 %v2397
    %v2558 = vunpack.c.h.b16 %v2397
    %v2559 = vunpack.c.l.b16 %v2398
    %v2560 = vunpack.c.h.b16 %v2398
    %v2561 = vunpack.c.l.b16 %v2399
    %v2562 = vunpack.c.h.b16 %v2399
    %v2563 = vunpack.c.l.b16 %v2400
    %v2564 = vunpack.c.h.b16 %v2400
    %v2565 = vunpack.c.l.b16 %v2401
    %v2566 = vunpack.c.h.b16 %v2401
    %v2567 = vunpack.c.l.b16 %v2402
    %v2568 = vunpack.c.h.b16 %v2402
    %v2569 = vunpack.c.l.b16 %v2403
    %v2570 = vunpack.c.h.b16 %v2403
    %v2571 = vunpack.c.l.b16 %v2404
    %v2572 = vunpack.c.h.b16 %v2404
    %v2573 = vunpack.c.l.b16 %v2405
    %v2574 = vunpack.c.h.b16 %v2405
    %v2575 = vunpack.c.l.b16 %v2406
    %v2576 = vunpack.c.h.b16 %v2406
    %v2577 = vunpack.c.l.b16 %v2407
    %v2578 = vunpack.c.h.b16 %v2407
    %v2579 = vunpack.c.l.b16 %v2408
    %v2580 = vunpack.c.h.b16 %v2408
    %v2581 = vunpack.c.l.b16 %v2409
    %v2582 = vunpack.c.h.b16 %v2409
    %v2583 = vunpack.c.l.b16 %v2410
    %v2584 = vunpack.c.h.b16 %v2410
    %v2585 = vunpack.c.l.b16 %v2411
    %v2586 = vunpack.c.h.b16 %v2411
    %v2587 = vunpack.c.l.b16 %v2412
    %v2588 = vunpack.c.h.b16 %v2412
    %v2589 = vunpack.c.l.b16 %v2413
    %v2590 = vunpack.c.h.b16 %v2413
    %v2591 = vunpack.c.l.b16 %v2414
    %v2592 = vunpack.c.h.b16 %v2414
    %v2593 = vunpack.c.l.b16 %v2415
    %v2594 = vunpack.c.h.b16 %v2415
    %v2595 = vunpack.c.l.b16 %v2416
    %v2596 = vunpack.c.h.b16 %v2416
    %v2597 = vunpack.c.l.b16 %v2417
    %v2598 = vunpack.c.h.b16 %v2417
    %v2599 = vunpack.c.l.b16 %v2418
    %v2600 = vunpack.c.h.b16 %v2418
    %v2601 = vunpack.c.l.b16 %v2419
    %v2602 = vunpack.c.h.b16 %v2419
    %v2603 = vunpack.c.l.b16 %v2420
    %v2604 = vunpack.c.h.b16 %v2420
    %v2605 = vunpack.c.l.b16 %v2421
    %v2606 = vunpack.c.h.b16 %v2421
    %v2607 = vunpack.c.l.b16 %v2422
    %v2608 = vunpack.c.h.b16 %v2422
    %v2609 = vunpack.c.l.b16 %v2423
    %v2610 = vunpack.c.h.b16 %v2423
    %v2611 = vunpack.c.l.b16 %v2424
    %v2612 = vunpack.c.h.b16 %v2424
    %v2613 = vunpack.c.l.b16 %v2425
    %v2614 = vunpack.c.h.b16 %v2425
    %v2615 = vunpack.c.l.b16 %v2426
    %v2616 = vunpack.c.h.b16 %v2426
    %v2617 = vunpack.c.l.b16 %v2427
    %v2618 = vunpack.c.h.b16 %v2427
    %v2619 = vunpack.c.l.b16 %v2428
    %v2620 = vunpack.c.h.b16 %v2428
    %v2621 = vunpack.c.l.b16 %v2429
    %v2622 = vunpack.c.h.b16 %v2429
    %v2623 = vunpack.c.l.b16 %v2430
    %v2624 = vunpack.c.h.b16 %v2430
    %v2625 = vunpack.c.l.b16 %v2431
    %v2626 = vunpack.c.h.b16 %v2431
    %v2627 = vunpack.c.l.b16 %v2432
    %v2628 = vunpack.c.h.b16 %v2432
    %v2629 = vunpack.c.l.b16 %v2433
    %v2630 = vunpack.c.h.b16 %v2433
    %v2631 = vunpack.c.l.b16 %v2434
    %v2632 = vunpack.c.h.b16 %v2434
    %v2633 = vunpack.c.l.b16 %v2435
    %v2634 = vunpack.c.h.b16 %v2435
    %v2635 = vunpack.c.l.b16 %v2436
    %v2636 = vunpack.c.h.b16 %v2436
    %v2637 = vunpack.c.l.b16 %v2437
    %v2638 = vunpack.c.h.b16 %v2437
    %v2639 = vunpack.c.l.b16 %v2438
    %v2640 = vunpack.c.h.b16 %v2438
    %v2641 = vunpack.c.l.b16 %v2439
    %v2642 = vunpack.c.h.b16 %v2439
    %v2643 = vunpack.c.l.b16 %v2440
    %v2644 = vunpack.c.h.b16 %v2440
    %v2645 = vpack.c.b16 %v2519, %v2517
    %v2646 = vpack.c.b16 %v2520, %v2518
    %v2647 = vpack.c.b16 %v2523, %v2521
    %v2648 = vpack.c.b16 %v2524, %v2522
    %v2649 = vpack.c.b16 %v2527, %v2525
    %v2650 = vpack.c.b16 %v2528, %v2526
    %v2651 = vpack.c.b16 %v2531, %v2529
    %v2652 = vpack.c.b16 %v2532, %v2530
    %v2653 = vpack.c.b16 %v2535, %v2533
    %v2654 = vpack.c.b16 %v2536, %v2534
    %v2655 = vpack.c.b16 %v2539, %v2537
    %v2656 = vpack.c.b16 %v2540, %v2538
    %v2657 = vpack.c.b16 %v2543, %v2541
    %v2658 = vpack.c.b16 %v2544, %v2542
    %v2659 = vpack.c.b16 %v2547, %v2545
    %v2660 = vpack.c.b16 %v2548, %v2546
    %v2661 = vpack.c.b16 %v2551, %v2549
    %v2662 = vpack.c.b16 %v2552, %v2550
    %v2663 = vpack.c.b16 %v2555, %v2553
    %v2664 = vpack.c.b16 %v2556, %v2554
    %v2665 = vpack.c.b16 %v2559, %v2557
    %v2666 = vpack.c.b16 %v2560, %v2558
    %v2667 = vpack.c.b16 %v2563, %v2561
    %v2668 = vpack.c.b16 %v2564, %v2562
    %v2669 = vpack.c.b16 %v2567, %v2565
    %v2670 = vpack.c.b16 %v2568, %v2566
    %v2671 = vpack.c.b16 %v2571, %v2569
    %v2672 = vpack.c.b16 %v2572, %v2570
    %v2673 = vpack.c.b16 %v2575, %v2573
    %v2674 = vpack.c.b16 %v2576, %v2574
    %v2675 = vpack.c.b16 %v2579, %v2577
    %v2676 = vpack.c.b16 %v2580, %v2578
    %v2677 = vpack.c.b16 %v2583, %v2581
    %v2678 = vpack.c.b16 %v2584, %v2582
    %v2679 = vpack.c.b16 %v2587, %v2585
    %v2680 = vpack.c.b16 %v2588, %v2586
    %v2681 = vpack.c.b16 %v2591, %v2589
    %v2682 = vpack.c.b16 %v2592, %v2590
    %v2683 = vpack.c.b16 %v2595, %v2593
    %v2684 = vpack.c.b16 %v2596, %v2594
    %v2685 = vpack.c.b16 %v2599, %v2597
    %v2686 = vpack.c.b16 %v2600, %v2598
    %v2687 = vpack.c.b16 %v2603, %v2601
    %v2688 = vpack.c.b16 %v2604, %v2602
    %v2689 = vpack.c.b16 %v2607, %v2605
    %v2690 = vpack.c.b16 %v2608, %v2606
    %v2691 = vpack.c.b16 %v2611, %v2609
    %v2692 = vpack.c.b16 %v2612, %v2610
    %v2693 = vpack.c.b16 %v2615, %v2613
    %v2694 = vpack.c.b16 %v2616, %v2614
    %v2695 = vpack.c.b16 %v2619, %v2617
    %v2696 = vpack.c.b16 %v2620, %v2618
    %v2697 = vpack.c.b16 %v2623, %v2621
    %v2698 = vpack.c.b16 %v2624, %v2622
    %v2699 = vpack.c.b16 %v2627, %v2625
    %v2700 = vpack.c.b16 %v2628, %v2626
    %v2701 = vpack.c.b16 %v2631, %v2629
    %v2702 = vpack.c.b16 %v2632, %v2630
    %v2703 = vpack.c.b16 %v2635, %v2633
    %v2704 = vpack.c.b16 %v2636, %v2634
    %v2705 = vpack.c.b16 %v2639, %v2637
    %v2706 = vpack.c.b16 %v2640, %v2638
    %v2707 = vpack.c.b16 %v2643, %v2641
    %v2708 = vpack.c.b16 %v2644, %v2642
    %2773 = vmatprep.subr.bf16.mxu0 %v2646
    %2774 = vmatpush1.bf16.msra.mxu0 %v2645
    %2775 = vmatprep.subr.bf16.mxu0 %v2648
    %2776 = vmatpush1.bf16.msra.mxu0 %v2647
    %2777 = vmatprep.subr.bf16.mxu0 %v2650
    %2778 = vmatpush1.bf16.msra.mxu0 %v2649
    %2779 = vmatprep.subr.bf16.mxu0 %v2652
    %2780 = vmatpush1.bf16.msra.mxu0 %v2651
    %2781 = vmatprep.subr.bf16.mxu0 %v2654
    %2782 = vmatpush1.bf16.msra.mxu0 %v2653
    %2783 = vmatprep.subr.bf16.mxu0 %v2656
    %2784 = vmatpush1.bf16.msra.mxu0 %v2655
    %2785 = vmatprep.subr.bf16.mxu0 %v2658
    %2786 = vmatpush1.bf16.msra.mxu0 %v2657
    %2787 = vmatprep.subr.bf16.mxu0 %v2660
    %2788 = vmatpush1.bf16.msra.mxu0 %v2659
    %2789 = vmatprep.subr.bf16.mxu0 %v2662
    %2790 = vmatpush1.bf16.msra.mxu0 %v2661
    %2791 = vmatprep.subr.bf16.mxu0 %v2664
    %2792 = vmatpush1.bf16.msra.mxu0 %v2663
    %2793 = vmatprep.subr.bf16.mxu0 %v2666
    %2794 = vmatpush1.bf16.msra.mxu0 %v2665
    %2795 = vmatprep.subr.bf16.mxu0 %v2668
    %2796 = vmatpush1.bf16.msra.mxu0 %v2667
    %2797 = vmatprep.subr.bf16.mxu0 %v2670
    %2798 = vmatpush1.bf16.msra.mxu0 %v2669
    %2799 = vmatprep.subr.bf16.mxu0 %v2672
    %2800 = vmatpush1.bf16.msra.mxu0 %v2671
    %2801 = vmatprep.subr.bf16.mxu0 %v2674
    %2802 = vmatpush1.bf16.msra.mxu0 %v2673
    %2803 = vmatprep.subr.bf16.mxu0 %v2676
    %2804 = vmatpush1.bf16.msra.mxu0 %v2675
    %2805 = vmatprep.mubr.bf16.mxu0 %v2314
    %2806 = vmatmul.mubr.bf16.gmra.mrb[0].mxu0 %v2313
    %v2807 = vpop.f32.mrb[0].mxu0
    %v2808 = vadd.f32 %v2446, %v2807
    %v2809 = vpop.f32.mrb[0].mxu0
    %v2810 = vadd.f32 %v2450, %v2809
    %v2811 = vpop.f32.mrb[0].mxu0
    %v2812 = vadd.f32 %v2446, %v2811
    %v2813 = vpop.f32.mrb[0].mxu0
    %v2814 = vadd.f32 %v2450, %v2813
    %2815 = vmatprep.mubr.bf16.mxu0 %v2318
    %2816 = vmatmul.mubr.bf16.gmra.mrb[0].mxu0 %v2317
    %v2817 = vpop.f32.mrb[0].mxu0
    %v2818 = vadd.f32 %v2446, %v2817
    %v2819 = vpop.f32.mrb[0].mxu0
    %v2820 = vadd.f32 %v2450, %v2819
    %v2821 = vpop.f32.mrb[0].mxu0
    %v2822 = vadd.f32 %v2446, %v2821
    %v2823 = vpop.f32.mrb[0].mxu0
    %v2824 = vadd.f32 %v2450, %v2823
    %2825 = vmatprep.mubr.bf16.mxu0 %v2322
    %2826 = vmatmul.mubr.bf16.gmra.mrb[0].mxu0 %v2321
    %v2827 = vpop.f32.mrb[0].mxu0
    %v2828 = vadd.f32 %v2446, %v2827
    %v2829 = vpop.f32.mrb[0].mxu0
    %v2830 = vadd.f32 %v2450, %v2829
    %v2831 = vpop.f32.mrb[0].mxu0
    %v2832 = vadd.f32 %v2446, %v2831
    %v2833 = vpop.f32.mrb[0].mxu0
    %v2834 = vadd.f32 %v2450, %v2833
    %2835 = vmatprep.mubr.bf16.mxu0 %v2326
    %2836 = vmatmul.mubr.bf16.gmra.mrb[0].mxu0 %v2325
    %v2837 = vpop.f32.mrb[0].mxu0
    %v2838 = vadd.f32 %v2446, %v2837
    %v2839 = vpop.f32.mrb[0].mxu0
    %v2840 = vadd.f32 %v2450, %v2839
    %v2841 = vpop.f32.mrb[0].mxu0
    %v2842 = vadd.f32 %v2446, %v2841
    %v2843 = vpop.f32.mrb[0].mxu0
    %v2844 = vadd.f32 %v2450, %v2843
    %2845 = vmatprep.mubr.bf16.mxu0 %v2330
    %2846 = vmatmul.mubr.bf16.gmra.mrb[0].mxu0 %v2329
    %v2847 = vpop.f32.mrb[0].mxu0
    %v2848 = vadd.f32 %v2446, %v2847
    %v2849 = vpop.f32.mrb[0].mxu0
    %v2850 = vadd.f32 %v2450, %v2849
    %v2851 = vpop.f32.mrb[0].mxu0
    %v2852 = vadd.f32 %v2446, %v2851
    %v2853 = vpop.f32.mrb[0].mxu0
    %v2854 = vadd.f32 %v2450, %v2853
    %2855 = vmatprep.mubr.bf16.mxu0 %v2334
    %2856 = vmatmul.mubr.bf16.gmra.mrb[0].mxu0 %v2333
    %v2857 = vpop.f32.mrb[0].mxu0
    %v2858 = vadd.f32 %v2446, %v2857
    %v2859 = vpop.f32.mrb[0].mxu0
    %v2860 = vadd.f32 %v2450, %v2859
    %v2861 = vpop.f32.mrb[0].mxu0
    %v2862 = vadd.f32 %v2446, %v2861
    %v2863 = vpop.f32.mrb[0].mxu0
    %v2864 = vadd.f32 %v2450, %v2863
    %2865 = vmatprep.mubr.bf16.mxu0 %v2338
    %2866 = vmatmul.mubr.bf16.gmra.mrb[0].mxu0 %v2337
    %v2867 = vpop.f32.mrb[0].mxu0
    %v2868 = vadd.f32 %v2446, %v2867
    %v2869 = vpop.f32.mrb[0].mxu0
    %v2870 = vadd.f32 %v2450, %v2869
    %v2871 = vpop.f32.mrb[0].mxu0
    %v2872 = vadd.f32 %v2446, %v2871
    %v2873 = vpop.f32.mrb[0].mxu0
    %v2874 = vadd.f32 %v2450, %v2873
    %2875 = vmatprep.mubr.bf16.mxu0 %v2342
    %2876 = vmatmul.mubr.bf16.gmra.mrb[0].mxu0 %v2341
    %v2877 = vpop.f32.mrb[0].mxu0
    %v2878 = vadd.f32 %v2446, %v2877
    %v2879 = vpop.f32.mrb[0].mxu0
    %v2880 = vadd.f32 %v2450, %v2879
    %v2881 = vpop.f32.mrb[0].mxu0
    %v2882 = vadd.f32 %v2446, %v2881
    %v2883 = vpop.f32.mrb[0].mxu0
    %v2884 = vadd.f32 %v2450, %v2883
    %2885 = vmatprep.mubr.bf16.mxu0 %v2346
    %2886 = vmatmul.mubr.bf16.gmra.mrb[0].mxu0 %v2345
    %v2887 = vpop.f32.mrb[0].mxu0
    %v2888 = vadd.f32 %v2446, %v2887
    %v2889 = vpop.f32.mrb[0].mxu0
    %v2890 = vadd.f32 %v2450, %v2889
    %v2891 = vpop.f32.mrb[0].mxu0
    %v2892 = vadd.f32 %v2446, %v2891
    %v2893 = vpop.f32.mrb[0].mxu0
    %v2894 = vadd.f32 %v2450, %v2893
    %2895 = vmatprep.mubr.bf16.mxu0 %v2350
    %2896 = vmatmul.mubr.bf16.gmra.mrb[0].mxu0 %v2349
    %v2897 = vpop.f32.mrb[0].mxu0
    %v2898 = vadd.f32 %v2446, %v2897
    %v2899 = vpop.f32.mrb[0].mxu0
    %v2900 = vadd.f32 %v2450, %v2899
    %v2901 = vpop.f32.mrb[0].mxu0
    %v2902 = vadd.f32 %v2446, %v2901
    %v2903 = vpop.f32.mrb[0].mxu0
    %v2904 = vadd.f32 %v2450, %v2903
    %2905 = vmatprep.mubr.bf16.mxu0 %v2354
    %2906 = vmatmul.mubr.bf16.gmra.mrb[0].mxu0 %v2353
    %v2907 = vpop.f32.mrb[0].mxu0
    %v2908 = vadd.f32 %v2446, %v2907
    %v2909 = vpop.f32.mrb[0].mxu0
    %v2910 = vadd.f32 %v2450, %v2909
    %v2911 = vpop.f32.mrb[0].mxu0
    %v2912 = vadd.f32 %v2446, %v2911
    %v2913 = vpop.f32.mrb[0].mxu0
    %v2914 = vadd.f32 %v2450, %v2913
    %2915 = vmatprep.mubr.bf16.mxu0 %v2358
    %2916 = vmatmul.mubr.bf16.gmra.mrb[0].mxu0 %v2357
    %v2917 = vpop.f32.mrb[0].mxu0
    %v2918 = vadd.f32 %v2446, %v2917
    %v2919 = vpop.f32.mrb[0].mxu0
    %v2920 = vadd.f32 %v2450, %v2919
    %v2921 = vpop.f32.mrb[0].mxu0
    %v2922 = vadd.f32 %v2446, %v2921
    %v2923 = vpop.f32.mrb[0].mxu0
    %v2924 = vadd.f32 %v2450, %v2923
    %2925 = vmatprep.mubr.bf16.mxu0 %v2362
    %2926 = vmatmul.mubr.bf16.gmra.mrb[0].mxu0 %v2361
    %v2927 = vpop.f32.mrb[0].mxu0
    %v2928 = vadd.f32 %v2446, %v2927
    %v2929 = vpop.f32.mrb[0].mxu0
    %v2930 = vadd.f32 %v2450, %v2929
    %v2931 = vpop.f32.mrb[0].mxu0
    %v2932 = vadd.f32 %v2446, %v2931
    %v2933 = vpop.f32.mrb[0].mxu0
    %v2934 = vadd.f32 %v2450, %v2933
    %2935 = vmatprep.mubr.bf16.mxu0 %v2366
    %2936 = vmatmul.mubr.bf16.gmra.mrb[0].mxu0 %v2365
    %v2937 = vpop.f32.mrb[0].mxu0
    %v2938 = vadd.f32 %v2446, %v2937
    %v2939 = vpop.f32.mrb[0].mxu0
    %v2940 = vadd.f32 %v2450, %v2939
    %v2941 = vpop.f32.mrb[0].mxu0
    %v2942 = vadd.f32 %v2446, %v2941
    %v2943 = vpop.f32.mrb[0].mxu0
    %v2944 = vadd.f32 %v2450, %v2943
    %2945 = vmatprep.mubr.bf16.mxu0 %v2370
    %2946 = vmatmul.mubr.bf16.gmra.mrb[0].mxu0 %v2369
    %v2947 = vpop.f32.mrb[0].mxu0
    %v2948 = vadd.f32 %v2446, %v2947
    %v2949 = vpop.f32.mrb[0].mxu0
    %v2950 = vadd.f32 %v2450, %v2949
    %v2951 = vpop.f32.mrb[0].mxu0
    %v2952 = vadd.f32 %v2446, %v2951
    %v2953 = vpop.f32.mrb[0].mxu0
    %v2954 = vadd.f32 %v2450, %v2953
    %2955 = vmatprep.mubr.bf16.mxu0 %v2374
    %2956 = vmatmul.mubr.bf16.gmra.mrb[0].mxu0 %v2373
    %v2957 = vpop.f32.mrb[0].mxu0
    %v2958 = vadd.f32 %v2446, %v2957
    %v2959 = vpop.f32.mrb[0].mxu0
    %v2960 = vadd.f32 %v2450, %v2959
    %v2961 = vpop.f32.mrb[0].mxu0
    %v2962 = vadd.f32 %v2446, %v2961
    %v2963 = vpop.f32.mrb[0].mxu0
    %v2964 = vadd.f32 %v2450, %v2963
    %2965 = vdwg.mxu0
    %2966 = vmatprep.subr.bf16.mxu0 %v2678
    %2967 = vmatpush1.bf16.msra.mxu0 %v2677
    %2968 = vmatprep.subr.bf16.mxu0 %v2680
    %2969 = vmatpush1.bf16.msra.mxu0 %v2679
    %2970 = vmatprep.subr.bf16.mxu0 %v2682
    %2971 = vmatpush1.bf16.msra.mxu0 %v2681
    %2972 = vmatprep.subr.bf16.mxu0 %v2684
    %2973 = vmatpush1.bf16.msra.mxu0 %v2683
    %2974 = vmatprep.subr.bf16.mxu0 %v2686
    %2975 = vmatpush1.bf16.msra.mxu0 %v2685
    %2976 = vmatprep.subr.bf16.mxu0 %v2688
    %2977 = vmatpush1.bf16.msra.mxu0 %v2687
    %2978 = vmatprep.subr.bf16.mxu0 %v2690
    %2979 = vmatpush1.bf16.msra.mxu0 %v2689
    %2980 = vmatprep.subr.bf16.mxu0 %v2692
    %2981 = vmatpush1.bf16.msra.mxu0 %v2691
    %2982 = vmatprep.subr.bf16.mxu0 %v2694
    %2983 = vmatpush1.bf16.msra.mxu0 %v2693
    %2984 = vmatprep.subr.bf16.mxu0 %v2696
    %2985 = vmatpush1.bf16.msra.mxu0 %v2695
    %2986 = vmatprep.subr.bf16.mxu0 %v2698
    %2987 = vmatpush1.bf16.msra.mxu0 %v2697
    %2988 = vmatprep.subr.bf16.mxu0 %v2700
    %2989 = vmatpush1.bf16.msra.mxu0 %v2699
    %2990 = vmatprep.subr.bf16.mxu0 %v2702
    %2991 = vmatpush1.bf16.msra.mxu0 %v2701
    %2992 = vmatprep.subr.bf16.mxu0 %v2704
    %2993 = vmatpush1.bf16.msra.mxu0 %v2703
    %2994 = vmatprep.subr.bf16.mxu0 %v2706
    %2995 = vmatpush1.bf16.msra.mxu0 %v2705
    %2996 = vmatprep.subr.bf16.mxu0 %v2708
    %2997 = vmatpush1.bf16.msra.mxu0 %v2707
    %2998 = vmatprep.mubr.bf16.mxu0 %v2316
    %2999 = vmatmul.mubr.bf16.gmra.mrb[0].mxu0 %v2315
    %v3000 = vpop.f32.mrb[0].mxu0
    %v3001 = vadd.f32 %v2808, %v3000
    %v3002 = vpop.f32.mrb[0].mxu0
    %v3003 = vadd.f32 %v2810, %v3002
    %v3004 = vpop.f32.mrb[0].mxu0
    %v3005 = vadd.f32 %v2812, %v3004
    %v3006 = vpop.f32.mrb[0].mxu0
    %v3007 = vadd.f32 %v2814, %v3006
    %3008 = vmatprep.mubr.bf16.mxu0 %v2320
    %3009 = vmatmul.mubr.bf16.gmra.mrb[0].mxu0 %v2319
    %v3010 = vpop.f32.mrb[0].mxu0
    %v3011 = vadd.f32 %v2818, %v3010
    %v3012 = vpop.f32.mrb[0].mxu0
    %v3013 = vadd.f32 %v2820, %v3012
    %v3014 = vpop.f32.mrb[0].mxu0
    %v3015 = vadd.f32 %v2822, %v3014
    %v3016 = vpop.f32.mrb[0].mxu0
    %v3017 = vadd.f32 %v2824, %v3016
    %3018 = vmatprep.mubr.bf16.mxu0 %v2324
    %3019 = vmatmul.mubr.bf16.gmra.mrb[0].mxu0 %v2323
    %v3020 = vpop.f32.mrb[0].mxu0
    %v3021 = vadd.f32 %v2828, %v3020
    %v3022 = vpop.f32.mrb[0].mxu0
    %v3023 = vadd.f32 %v2830, %v3022
    %v3024 = vpop.f32.mrb[0].mxu0
    %v3025 = vadd.f32 %v2832, %v3024
    %v3026 = vpop.f32.mrb[0].mxu0
    %v3027 = vadd.f32 %v2834, %v3026
    %3028 = vmatprep.mubr.bf16.mxu0 %v2328
    %3029 = vmatmul.mubr.bf16.gmra.mrb[0].mxu0 %v2327
    %v3030 = vpop.f32.mrb[0].mxu0
    %v3031 = vadd.f32 %v2838, %v3030
    %v3032 = vpop.f32.mrb[0].mxu0
    %v3033 = vadd.f32 %v2840, %v3032
    %v3034 = vpop.f32.mrb[0].mxu0
    %v3035 = vadd.f32 %v2842, %v3034
    %v3036 = vpop.f32.mrb[0].mxu0
    %v3037 = vadd.f32 %v2844, %v3036
    %3038 = vmatprep.mubr.bf16.mxu0 %v2332
    %3039 = vmatmul.mubr.bf16.gmra.mrb[0].mxu0 %v2331
    %v3040 = vpop.f32.mrb[0].mxu0
    %v3041 = vadd.f32 %v2848, %v3040
    %v3042 = vpop.f32.mrb[0].mxu0
    %v3043 = vadd.f32 %v2850, %v3042
    %v3044 = vpop.f32.mrb[0].mxu0
    %v3045 = vadd.f32 %v2852, %v3044
    %v3046 = vpop.f32.mrb[0].mxu0
    %v3047 = vadd.f32 %v2854, %v3046
    %3048 = vmatprep.mubr.bf16.mxu0 %v2336
    %3049 = vmatmul.mubr.bf16.gmra.mrb[0].mxu0 %v2335
    %v3050 = vpop.f32.mrb[0].mxu0
    %v3051 = vadd.f32 %v2858, %v3050
    %v3052 = vpop.f32.mrb[0].mxu0
    %v3053 = vadd.f32 %v2860, %v3052
    %v3054 = vpop.f32.mrb[0].mxu0
    %v3055 = vadd.f32 %v2862, %v3054
    %v3056 = vpop.f32.mrb[0].mxu0
    %v3057 = vadd.f32 %v2864, %v3056
    %3058 = vmatprep.mubr.bf16.mxu0 %v2340
    %3059 = vmatmul.mubr.bf16.gmra.mrb[0].mxu0 %v2339
    %v3060 = vpop.f32.mrb[0].mxu0
    %v3061 = vadd.f32 %v2868, %v3060
    %v3062 = vpop.f32.mrb[0].mxu0
    %v3063 = vadd.f32 %v2870, %v3062
    %v3064 = vpop.f32.mrb[0].mxu0
    %v3065 = vadd.f32 %v2872, %v3064
    %v3066 = vpop.f32.mrb[0].mxu0
    %v3067 = vadd.f32 %v2874, %v3066
    %3068 = vmatprep.mubr.bf16.mxu0 %v2344
    %3069 = vmatmul.mubr.bf16.gmra.mrb[0].mxu0 %v2343
    %v3070 = vpop.f32.mrb[0].mxu0
    %v3071 = vadd.f32 %v2878, %v3070
    %v3072 = vpop.f32.mrb[0].mxu0
    %v3073 = vadd.f32 %v2880, %v3072
    %v3074 = vpop.f32.mrb[0].mxu0
    %v3075 = vadd.f32 %v2882, %v3074
    %v3076 = vpop.f32.mrb[0].mxu0
    %v3077 = vadd.f32 %v2884, %v3076
    %3078 = vmatprep.mubr.bf16.mxu0 %v2348
    %3079 = vmatmul.mubr.bf16.gmra.mrb[0].mxu0 %v2347
    %v3080 = vpop.f32.mrb[0].mxu0
    %v3081 = vadd.f32 %v2888, %v3080
    %v3082 = vpop.f32.mrb[0].mxu0
    %v3083 = vadd.f32 %v2890, %v3082
    %v3084 = vpop.f32.mrb[0].mxu0
    %v3085 = vadd.f32 %v2892, %v3084
    %v3086 = vpop.f32.mrb[0].mxu0
    %v3087 = vadd.f32 %v2894, %v3086
    %3088 = vmatprep.mubr.bf16.mxu0 %v2352
    %3089 = vmatmul.mubr.bf16.gmra.mrb[0].mxu0 %v2351
    %v3090 = vpop.f32.mrb[0].mxu0
    %v3091 = vadd.f32 %v2898, %v3090
    %v3092 = vpop.f32.mrb[0].mxu0
    %v3093 = vadd.f32 %v2900, %v3092
    %v3094 = vpop.f32.mrb[0].mxu0
    %v3095 = vadd.f32 %v2902, %v3094
    %v3096 = vpop.f32.mrb[0].mxu0
    %v3097 = vadd.f32 %v2904, %v3096
    %3098 = vmatprep.mubr.bf16.mxu0 %v2356
    %3099 = vmatmul.mubr.bf16.gmra.mrb[0].mxu0 %v2355
    %v3100 = vpop.f32.mrb[0].mxu0
    %v3101 = vadd.f32 %v2908, %v3100
    %v3102 = vpop.f32.mrb[0].mxu0
    %v3103 = vadd.f32 %v2910, %v3102
    %v3104 = vpop.f32.mrb[0].mxu0
    %v3105 = vadd.f32 %v2912, %v3104
    %v3106 = vpop.f32.mrb[0].mxu0
    %v3107 = vadd.f32 %v2914, %v3106
    %3108 = vmatprep.mubr.bf16.mxu0 %v2360
    %3109 = vmatmul.mubr.bf16.gmra.mrb[0].mxu0 %v2359
    %v3110 = vpop.f32.mrb[0].mxu0
    %v3111 = vadd.f32 %v2918, %v3110
    %v3112 = vpop.f32.mrb[0].mxu0
    %v3113 = vadd.f32 %v2920, %v3112
    %v3114 = vpop.f32.mrb[0].mxu0
    %v3115 = vadd.f32 %v2922, %v3114
    %v3116 = vpop.f32.mrb[0].mxu0
    %v3117 = vadd.f32 %v2924, %v3116
    %3118 = vmatprep.mubr.bf16.mxu0 %v2364
    %3119 = vmatmul.mubr.bf16.gmra.mrb[0].mxu0 %v2363
    %v3120 = vpop.f32.mrb[0].mxu0
    %v3121 = vadd.f32 %v2928, %v3120
    %v3122 = vpop.f32.mrb[0].mxu0
    %v3123 = vadd.f32 %v2930, %v3122
    %v3124 = vpop.f32.mrb[0].mxu0
    %v3125 = vadd.f32 %v2932, %v3124
    %v3126 = vpop.f32.mrb[0].mxu0
    %v3127 = vadd.f32 %v2934, %v3126
    %3128 = vmatprep.mubr.bf16.mxu0 %v2368
    %3129 = vmatmul.mubr.bf16.gmra.mrb[0].mxu0 %v2367
    %v3130 = vpop.f32.mrb[0].mxu0
    %v3131 = vadd.f32 %v2938, %v3130
    %v3132 = vpop.f32.mrb[0].mxu0
    %v3133 = vadd.f32 %v2940, %v3132
    %v3134 = vpop.f32.mrb[0].mxu0
    %v3135 = vadd.f32 %v2942, %v3134
    %v3136 = vpop.f32.mrb[0].mxu0
    %v3137 = vadd.f32 %v2944, %v3136
    %3138 = vmatprep.mubr.bf16.mxu0 %v2372
    %3139 = vmatmul.mubr.bf16.gmra.mrb[0].mxu0 %v2371
    %v3140 = vpop.f32.mrb[0].mxu0
    %v3141 = vadd.f32 %v2948, %v3140
    %v3142 = vpop.f32.mrb[0].mxu0
    %v3143 = vadd.f32 %v2950, %v3142
    %v3144 = vpop.f32.mrb[0].mxu0
    %v3145 = vadd.f32 %v2952, %v3144
    %v3146 = vpop.f32.mrb[0].mxu0
    %v3147 = vadd.f32 %v2954, %v3146
    %3148 = vmatprep.mubr.bf16.mxu0 %v2376
    %3149 = vmatmul.mubr.bf16.gmra.mrb[0].mxu0 %v2375
    %v3150 = vpop.f32.mrb[0].mxu0
    %v3151 = vadd.f32 %v2958, %v3150
    %v3152 = vpop.f32.mrb[0].mxu0
    %v3153 = vadd.f32 %v2960, %v3152
    %v3154 = vpop.f32.mrb[0].mxu0
    %v3155 = vadd.f32 %v2962, %v3154
    %v3156 = vpop.f32.mrb[0].mxu0
    %v3157 = vadd.f32 %v2964, %v3156
    %3158 = vdwg.mxu0
    %3159 = vst [vmem:[#allocation8] sm:$0xff] %v3001
    %3160 = vst [vmem:[#allocation8 + $0x8] sm:$0xff] %v3003
    %3161 = vst [vmem:[#allocation8 + $0x10] sm:$0xff] %v3005
    %3162 = vst [vmem:[#allocation8 + $0x18] sm:$0xff] %v3007
    %3163 = vst [vmem:[#allocation8 + $0x20] sm:$0xff] %v3011
    %3164 = vst [vmem:[#allocation8 + $0x28] sm:$0xff] %v3013
    %3165 = vst [vmem:[#allocation8 + $0x30] sm:$0xff] %v3015
    %3166 = vst [vmem:[#allocation8 + $0x38] sm:$0xff] %v3017
    %3167 = vst [vmem:[#allocation8 + $0x40] sm:$0xff] %v3021
    %3168 = vst [vmem:[#allocation8 + $0x48] sm:$0xff] %v3023
    %3169 = vst [vmem:[#allocation8 + $0x50] sm:$0xff] %v3025
    %3170 = vst [vmem:[#allocation8 + $0x58] sm:$0xff] %v3027
    %3171 = vst [vmem:[#allocation8 + $0x60] sm:$0xff] %v3031
    %3172 = vst [vmem:[#allocation8 + $0x68] sm:$0xff] %v3033
    %3173 = vst [vmem:[#allocation8 + $0x70] sm:$0xff] %v3035
    %3174 = vst [vmem:[#allocation8 + $0x78] sm:$0xff] %v3037
    %3175 = vst [vmem:[#allocation8 + $0x80] sm:$0xff] %v3041
    %3176 = vst [vmem:[#allocation8 + $0x88] sm:$0xff] %v3043
    %3177 = vst [vmem:[#allocation8 + $0x90] sm:$0xff] %v3045
    %3178 = vst [vmem:[#allocation8 + $0x98] sm:$0xff] %v3047
    %3179 = vst [vmem:[#allocation8 + $0xa0] sm:$0xff] %v3051
    %3180 = vst [vmem:[#allocation8 + $0xa8] sm:$0xff] %v3053
    %3181 = vst [vmem:[#allocation8 + $0xb0] sm:$0xff] %v3055
    %3182 = vst [vmem:[#allocation8 + $0xb8] sm:$0xff] %v3057
    %3183 = vst [vmem:[#allocation8 + $0xc0] sm:$0xff] %v3061
    %3184 = vst [vmem:[#allocation8 + $0xc8] sm:$0xff] %v3063
    %3185 = vst [vmem:[#allocation8 + $0xd0] sm:$0xff] %v3065
    %3186 = vst [vmem:[#allocation8 + $0xd8] sm:$0xff] %v3067
    %3187 = vst [vmem:[#allocation8 + $0xe0] sm:$0xff] %v3071
    %3188 = vst [vmem:[#allocation8 + $0xe8] sm:$0xff] %v3073
    %3189 = vst [vmem:[#allocation8 + $0xf0] sm:$0xff] %v3075
    %3190 = vst [vmem:[#allocation8 + $0xf8] sm:$0xff] %v3077
    %3191 = vst [vmem:[#allocation8 + $0x100] sm:$0xff] %v3081
    %3192 = vst [vmem:[#allocation8 + $0x108] sm:$0xff] %v3083
    %3193 = vst [vmem:[#allocation8 + $0x110] sm:$0xff] %v3085
    %3194 = vst [vmem:[#allocation8 + $0x118] sm:$0xff] %v3087
    %3195 = vst [vmem:[#allocation8 + $0x120] sm:$0xff] %v3091
    %3196 = vst [vmem:[#allocation8 + $0x128] sm:$0xff] %v3093
    %3197 = vst [vmem:[#allocation8 + $0x130] sm:$0xff] %v3095
    %3198 = vst [vmem:[#allocation8 + $0x138] sm:$0xff] %v3097
    %3199 = vst [vmem:[#allocation8 + $0x140] sm:$0xff] %v3101
    %3200 = vst [vmem:[#allocation8 + $0x148] sm:$0xff] %v3103
    %3201 = vst [vmem:[#allocation8 + $0x150] sm:$0xff] %v3105
    %3202 = vst [vmem:[#allocation8 + $0x158] sm:$0xff] %v3107
    %3203 = vst [vmem:[#allocation8 + $0x160] sm:$0xff] %v3111
    %3204 = vst [vmem:[#allocation8 + $0x168] sm:$0xff] %v3113
    %3205 = vst [vmem:[#allocation8 + $0x170] sm:$0xff] %v3115
    %3206 = vst [vmem:[#allocation8 + $0x178] sm:$0xff] %v3117
    %3207 = vst [vmem:[#allocation8 + $0x180] sm:$0xff] %v3121
    %3208 = vst [vmem:[#allocation8 + $0x188] sm:$0xff] %v3123
    %3209 = vst [vmem:[#allocation8 + $0x190] sm:$0xff] %v3125
    %3210 = vst [vmem:[#allocation8 + $0x198] sm:$0xff] %v3127
    %3211 = vst [vmem:[#allocation8 + $0x1a0] sm:$0xff] %v3131
    %3212 = vst [vmem:[#allocation8 + $0x1a8] sm:$0xff] %v3133
    %3213 = vst [vmem:[#allocation8 + $0x1b0] sm:$0xff] %v3135
    %3214 = vst [vmem:[#allocation8 + $0x1b8] sm:$0xff] %v3137
    %3215 = vst [vmem:[#allocation8 + $0x1c0] sm:$0xff] %v3141
    %3216 = vst [vmem:[#allocation8 + $0x1c8] sm:$0xff] %v3143
    %3217 = vst [vmem:[#allocation8 + $0x1d0] sm:$0xff] %v3145
    %3218 = vst [vmem:[#allocation8 + $0x1d8] sm:$0xff] %v3147
    %3219 = vst [vmem:[#allocation8 + $0x1e0] sm:$0xff] %v3151
    %3220 = vst [vmem:[#allocation8 + $0x1e8] sm:$0xff] %v3153
    %3221 = vst [vmem:[#allocation8 + $0x1f0] sm:$0xff] %v3155
    %3222 = vst [vmem:[#allocation8 + $0x1f8] sm:$0xff] %v3157
    // Predicated region
    $region42: #{tpu_custom_call.1} parent=1 // pred_check
      _
    $region43: #{tpu_custom_call.1} parent=1 // pred_check_branch
      %3224 = sbr.rel (0) target = $region45
    $region44: #{tpu_custom_call.1} parent=1 // pred_region
      %s3226 = ssub.s32 8192, 8192
      %3227 = vsyncadd [#allocation4], %s3226
      %s3228 = sshll.u32 [#allocation8], 4
      %s3229 = int_to_ptr.vmem [resolvable:$true] %s3228
      %3234 = dma.vmem_to_hbm [thread:$0]  %s3229, 8192, %s7, [#allocation4], 256, 256, 16
    $region45: #{tpu_custom_call.1} parent=1 // pred_fallthru
      _
    // Predicated region
    $region46: #{tpu_custom_call.1} parent=1 // pred_check
      _
    $region47: #{tpu_custom_call.1} parent=1 // pred_check_branch
      %3236 = sbr.rel (0) target = $region49
    $region48: #{tpu_custom_call.1} parent=1 // pred_region
      %3237 = dma.done [#allocation4], 8192
    $region49: #{tpu_custom_call.1} parent=1 // pred_fallthru
      _
    %3238 = vsyncpa [#allocation3], 1
    %3239 = vsyncpa [#allocation6], 1
    %3240 = vsyncpa [#allocation4], 1

</llo_original>
